<compile_context>
chip_gen: v5e
topology: v5e:2x2
jax: 0.10.0
libtpu: 0.0.40
codegen_flags: <defaults>
</compile_context>

<pallas_src>
import functools

import jax
import jax.numpy as jnp
from jax import lax
from jax.experimental import pallas as pl
from jax.experimental.pallas import tpu as pltpu


# ----------------------------- helpers (in-kernel safe) ----------------------
def _sigmoid(v):
    return 1.0 / (1.0 + jnp.exp(-v))


def _fat_sigmoid(v, eps=1e-3):
    return _sigmoid(v) * (1.0 + 2.0 * eps) - eps


def _softplus(x):
    # numerically stable softplus with only basic elementwise ops
    return jnp.maximum(x, 0.0) + jnp.log(1.0 + jnp.exp(-jnp.abs(x)))


# ------------------------------ NeRF hot-path kernel --------------------------
def _nerf_kernel(xc_ref, rdn_ref, wf_ref, b1_ref, w2_ref, b2_ref, w3_ref,
                 b3_ref, o_ref, *, steps, t_near, t_far):
    """xc_ref:  (tile_p, din+3) f32 = [r_o, per-pixel latent, r_d]
       rdn_ref: (1, tile_p)     f32 = |r_d|, pixels on the lane axis
       wf_ref:  (din+3, 2*hid)  f32 block-diagonal [[w1, 0], [0, w1[:3]]]
       w2/w3:   bf16 (pre-cast in the wrapper); biases f32
       o_ref:   (3, tile_p) lane-dense rgb output."""
    tile_p = xc_ref.shape[0]
    hid = w2_ref.shape[0]
    dt = float(t_far - t_near) / max(steps - 1, 1)

    xc = xc_ref[...]                       # (tile_p, din+3) f32
    wf = wf_ref[...]                       # (din+3, 2*hid)  f32
    b1 = b1_ref[...]                       # (1, hid)
    w2 = w2_ref[...]                       # (hid, hid) bf16
    b2 = b2_ref[...]                       # (1, hid)
    w3 = w3_ref[...]                       # (hid, 4) bf16
    b3 = b3_ref[...]                       # (1, 4)
    rdn = rdn_ref[...]                     # (1, tile_p)

    # ---- fused layer 1: [base | dirc] in a single (f32) MXU call -------------
    bd = jnp.dot(xc, wf, preferred_element_type=jnp.float32)   # (tile_p, 2*hid)
    base = bd[:, :hid] + b1                                     # x0 @ w1 + b1
    dirc = bd[:, hid:]                                          # r_d @ w1[:3]

    # ---- per-step layer-1 activations (step-major rows), relu+bf16 folded ----
    # h1(t_s) = relu(base + t_s * dirc); no pts / T-replicated latent in HBM.
    h1 = jnp.concatenate(
        [jnp.maximum(base + (t_near + s * dt) * dirc, 0.0).astype(jnp.bfloat16)
         for s in range(steps)], axis=0)                        # (steps*tile_p, hid)

    # ---- layers 2/3 on the whole slab (bf16 MXU operands, f32 accumulate) ----
    h2 = jnp.maximum(
        jnp.dot(h1, w2, preferred_element_type=jnp.float32) + b2,
        0.0).astype(jnp.bfloat16)                               # (steps*tile_p, hid)
    o = jnp.dot(h2, w3, preferred_element_type=jnp.float32) + b3  # (steps*tile_p, 4)

    # ---- one bulk transpose: pixels onto the lane axis ----------------------
    ot = o.T                                                    # (4, steps*tile_p)
    # repack per-step lane blocks (128-aligned static slices) into packed slabs
    sig_pre = jnp.concatenate(
        [ot[0:1, s * tile_p:(s + 1) * tile_p] for s in range(steps)],
        axis=0)                                                 # (steps, tile_p)
    rgb_pre = jnp.stack(
        [ot[1:4, s * tile_p:(s + 1) * tile_p] for s in range(steps)],
        axis=0)                                                 # (steps, 3, tile_p)

    # ---- step-vectorized compositing, all f32 --------------------------------
    # TODO(synk): training-time density noise (noise_std=0.2) omitted -> eval
    # mode semantics.
    sigma = _softplus(sig_pre - 1.0)                            # (steps, tile_p)
    rgb = _fat_sigmoid(rgb_pre)                                 # (steps, 3, tile_p)

    # segment lengths: dt for all steps except 1e10 for the last one
    step_id = lax.broadcasted_iota(jnp.int32, (steps, tile_p), 0)
    dmat = jnp.where(step_id == steps - 1, 1e10, dt).astype(jnp.float32)

    tau = sigma * dmat * rdn                                    # (steps, tile_p)
    alpha = 1.0 - jnp.exp(-tau)
    # trans_s = prod_{j<s} (1-alpha_j) = exp(-sum_{j<s} tau_j): exclusive cumsum
    # over the step axis via a strictly-lower-triangular matmul (exact, no
    # cancellation against the huge last-segment tau).
    row = lax.broadcasted_iota(jnp.int32, (steps, steps), 0)
    col = lax.broadcasted_iota(jnp.int32, (steps, steps), 1)
    tri = (col < row).astype(jnp.float32)
    trans = jnp.exp(-jnp.dot(tri, tau, preferred_element_type=jnp.float32))
    w = alpha * trans                                           # (steps, tile_p)

    # volumetric_integrate; sky_color == black contributes 0
    acc = jnp.sum(w[:, None, :] * rgb, axis=0)                  # (3, tile_p)
    o_ref[...] = acc.astype(o_ref.dtype)                        # lane-dense store


# --------------------------------- wrapper ------------------------------------
def single_pixel_nerf_forward(rays, uvs, img, params, *, steps=8,
                              t_near=0.0, t_far=1.0, tile_p=1024):
    """rays: (B,H,W,2,3) stacked (r_o, r_d); uvs: (B,H,W,2) in [-1,1];
    img: (B,C,Hi,Wi) NCHW. Returns rgb (B,H,W,3).

    tile_p default 1024 (sweep 1024-2048 for large renders; keep <= 4096 on
    v7x so the per-tile working set stays well under its 64 MiB VMEM)."""
    B, C, Hi, Wi = img.shape
    enc_w, enc_b = params["enc_w"], params["enc_b"]
    L = enc_w.shape[1]

    # Encoder 1x1 conv kept in plain XLA (too small for a Pallas launch).
    feat = jnp.einsum("bchw,cl->bhwl", img, enc_w) + enc_b            # (B,Hi,Wi,L)

    # TODO(synk): bilinear grid_sample of encoder features is approximated by a
    # nearest-neighbor gather (plain-JAX glue; data-dependent gather).
    ix = jnp.clip(jnp.round((uvs[..., 0] + 1.0) * 0.5 * (Wi - 1)), 0, Wi - 1).astype(jnp.int32)
    iy = jnp.clip(jnp.round((uvs[..., 1] + 1.0) * 0.5 * (Hi - 1)), 0, Hi - 1).astype(jnp.int32)
    bidx = jnp.arange(B)[:, None, None]
    latent = feat[bidx, iy, ix]                                       # (B,H,W,L)

    r_o = rays[..., 0, :]                                             # (B,H,W,3)
    r_d = rays[..., 1, :]                                             # (B,H,W,3)
    Bn, H, W = r_o.shape[:3]
    npix = Bn * H * W

    din = 3 + L
    rdf = r_d.reshape(npix, 3)
    # Single per-pixel input [r_o, latent, r_d] (no T-replicated HBM buffers).
    x_cat = jnp.concatenate(
        [r_o.reshape(npix, 3), latent.reshape(npix, L), rdf], axis=-1)  # (npix, din+3)
    rdn = jnp.linalg.norm(rdf, axis=-1).reshape(1, npix)              # pixels on lanes

    w1 = params["w1"]                                                 # (din, hid)
    hid = w1.shape[1]
    # Fused block-diagonal layer-1 weight: [x0 | r_d] @ [[w1, 0], [0, w1[:3]]].
    w_fused = jnp.zeros((din + 3, 2 * hid), jnp.float32)
    w_fused = w_fused.at[:din, :hid].set(w1)
    w_fused = w_fused.at[din:, hid:].set(w1[:3, :])

    # Pre-cast the big-matmul weights to bf16 once (no per-tile casts in-kernel).
    w2 = params["w2"].astype(jnp.bfloat16)
    w3 = params["w3"].astype(jnp.bfloat16)
    b1 = params["b1"].reshape(1, -1).astype(jnp.float32)
    b2 = params["b2"].reshape(1, -1).astype(jnp.float32)
    b3 = params["b3"].reshape(1, -1).astype(jnp.float32)

    assert tile_p % 128 == 0, "tile_p must be a multiple of 128 (lane width)"
    npix_pad = pl.cdiv(npix, tile_p) * tile_p
    pad = npix_pad - npix
    if pad:
        x_cat = jnp.pad(x_cat, ((0, pad), (0, 0)))
        rdn = jnp.pad(rdn, ((0, 0), (0, pad)))

    kernel = functools.partial(_nerf_kernel, steps=steps,
                               t_near=float(t_near), t_far=float(t_far))

    rgb_t = pl.pallas_call(
        kernel,
        out_shape=jax.ShapeDtypeStruct((3, npix_pad), jnp.float32),   # lane-dense
        grid=(npix_pad // tile_p,),
        in_specs=[
            pl.BlockSpec((tile_p, din + 3), lambda i: (i, 0)),  # [r_o, latent, r_d]
            pl.BlockSpec((1, tile_p), lambda i: (0, i)),        # |r_d|
            pl.BlockSpec((din + 3, 2 * hid), lambda i: (0, 0)),  # fused w1
            pl.BlockSpec((1, hid), lambda i: (0, 0)),            # b1
            pl.BlockSpec((hid, hid), lambda i: (0, 0)),          # w2 (bf16)
            pl.BlockSpec((1, hid), lambda i: (0, 0)),            # b2
            pl.BlockSpec((hid, 4), lambda i: (0, 0)),            # w3 (bf16)
            pl.BlockSpec((1, 4), lambda i: (0, 0)),              # b3
        ],
        out_specs=pl.BlockSpec((3, tile_p), lambda i: (0, i)),
        compiler_params=pltpu.CompilerParams(dimension_semantics=("parallel",)),
    )(x_cat, rdn, w_fused, b1, w2, b2, w3, b3)

    return rgb_t.T[:npix].reshape(Bn, H, W, 3)


# ------------------------- pure-JAX reference (f32) ---------------------------
def _reference_forward(rays, uvs, img, params, *, steps, t_near, t_far):
    feat = jnp.einsum("bchw,cl->bhwl", img, params["enc_w"]) + params["enc_b"]
    B, Hi, Wi, L = feat.shape
    ix = jnp.clip(jnp.round((uvs[..., 0] + 1.0) * 0.5 * (Wi - 1)), 0, Wi - 1).astype(jnp.int32)
    iy = jnp.clip(jnp.round((uvs[..., 1] + 1.0) * 0.5 * (Hi - 1)), 0, Hi - 1).astype(jnp.int32)
    bidx = jnp.arange(B)[:, None, None]
    latent = feat[bidx, iy, ix]
    r_o, r_d = rays[..., 0, :], rays[..., 1, :]
    dt = (t_far - t_near) / max(steps - 1, 1)
    ts = jnp.asarray([t_near + i * dt for i in range(steps)], jnp.float32)
    pts = r_o[None] + ts[:, None, None, None, None] * r_d[None]
    lat = jnp.broadcast_to(latent[None], (steps,) + latent.shape)
    x = jnp.concatenate([pts, lat], axis=-1)
    h = jax.nn.relu(x @ params["w1"] + params["b1"])
    h = jax.nn.relu(h @ params["w2"] + params["b2"])
    o = h @ params["w3"] + params["b3"]
    sigma = jax.nn.softplus(o[..., 0:1] - 1.0)
    rgb = jax.nn.sigmoid(o[..., 1:4]) * (1.0 + 2e-3) - 1e-3
    dists = [dt] * (steps - 1) + [1e10]
    rdn = jnp.linalg.norm(r_d, axis=-1, keepdims=True)
    acc = jnp.zeros(r_o.shape[:3] + (3,), jnp.float32)
    trans = jnp.ones(r_o.shape[:3] + (1,), jnp.float32)
    for s in range(steps):
        alpha = 1.0 - jnp.exp(-sigma[s] * (dists[s] * rdn))
        w = alpha * trans
        acc = acc + w * rgb[s]
        trans = trans * (1.0 - alpha)
    return acc


# ----------------------------------- main --------------------------------------
if __name__ == "__main__":
    key = jax.random.PRNGKey(0)
    B, C, Hi, Wi = 2, 4, 16, 16          # encoder image (NCHW)
    H, W = 16, 16                        # ray grid
    L, hid, steps = 16, 32, 8            # latent size, MLP hidden, ray steps
    din = 3 + L

    ks = jax.random.split(key, 10)
    img = jax.random.normal(ks[0], (B, C, Hi, Wi), jnp.float32)
    r_o = jax.random.normal(ks[1], (B, H, W, 3), jnp.float32) * 0.1
    r_d = jax.random.normal(ks[2], (B, H, W, 3), jnp.float32)
    r_d = r_d / (jnp.linalg.norm(r_d, axis=-1, keepdims=True) + 1e-6)
    rays = jnp.stack([r_o, r_d], axis=-2)                       # (B,H,W,2,3)
    uvs = jax.random.uniform(ks[3], (B, H, W, 2), jnp.float32, -1.0, 1.0)

    params = {
        "enc_w": jax.random.normal(ks[4], (C, L), jnp.float32) * 0.3,
        "enc_b": jax.random.normal(ks[5], (L,), jnp.float32) * 0.05,
        "w1": jax.random.normal(ks[6], (din, hid), jnp.float32) / jnp.sqrt(din),
        "b1": jnp.zeros((hid,), jnp.float32),
        "w2": jax.random.normal(ks[7], (hid, hid), jnp.float32) / jnp.sqrt(hid),
        "b2": jnp.zeros((hid,), jnp.float32),
        "w3": jax.random.normal(ks[8], (hid, 4), jnp.float32) / jnp.sqrt(hid),
        "b3": jnp.zeros((4,), jnp.float32),
    }

    # tile_p=256 here only because the demo render is tiny (npix=512): it keeps
    # the pixel grid at 2 iterations (both v7x TensorCores get work).  For real
    # renders use the default tile_p=1024 (sweep up to 2048; <=4096 on v7x).
    out = single_pixel_nerf_forward(rays, uvs, img, params,
                                    steps=steps, t_near=0.0, t_far=1.0,
                                    tile_p=256)
    out = jax.block_until_ready(out)
    assert out.shape == (B, H, W, 3)
    assert bool(jnp.all(jnp.isfinite(out)))

    ref = _reference_forward(rays, uvs, img, params,
                             steps=steps, t_near=0.0, t_far=1.0)
    max_err = float(jnp.max(jnp.abs(out - ref)))
    assert max_err < 0.1, f"kernel/reference mismatch: max abs err {max_err}"

    print("KERNEL_OK")
</pallas_src>

<mosaic_0001>
module attributes {stable_mosaic.version = 11 : i64} {
  func.func @_nerf_kernel(%arg0: i32, %arg1: memref<256x22xf32, #tpu.memory_space<vmem>>, %arg2: memref<1x256xf32, #tpu.memory_space<vmem>>, %arg3: memref<22x64xf32, #tpu.memory_space<vmem>>, %arg4: memref<1x32xf32, #tpu.memory_space<vmem>>, %arg5: memref<32x32xbf16, #tpu.memory_space<vmem>>, %arg6: memref<1x32xf32, #tpu.memory_space<vmem>>, %arg7: memref<32x4xbf16, #tpu.memory_space<vmem>>, %arg8: memref<1x4xf32, #tpu.memory_space<vmem>>, %arg9: memref<3x256xf32, #tpu.memory_space<vmem>>) attributes {dimension_semantics = [#tpu.dimension_semantics<parallel>], iteration_bounds = array<i64: 2>, scalar_prefetch = 0 : i64, scratch_operands = 0 : i64, tpu.core_type = #tpu.core_type<tc>, window_params = [{transform_indices = @transform_0, window_bounds = array<i64: 256, 22>}, {transform_indices = @transform_1, window_bounds = array<i64: 1, 256>}, {pipeline_mode = #tpu.pipeline_mode<synchronous>, transform_indices = @transform_2, window_bounds = array<i64: 22, 64>}, {pipeline_mode = #tpu.pipeline_mode<synchronous>, transform_indices = @transform_3, window_bounds = array<i64: 1, 32>}, {pipeline_mode = #tpu.pipeline_mode<synchronous>, transform_indices = @transform_4, window_bounds = array<i64: 32, 32>}, {pipeline_mode = #tpu.pipeline_mode<synchronous>, transform_indices = @transform_5, window_bounds = array<i64: 1, 32>}, {pipeline_mode = #tpu.pipeline_mode<synchronous>, transform_indices = @transform_6, window_bounds = array<i64: 32, 4>}, {pipeline_mode = #tpu.pipeline_mode<synchronous>, transform_indices = @transform_7, window_bounds = array<i64: 1, 4>}, {transform_indices = @transform_8, window_bounds = array<i64: 3, 256>}]} {
    %c0 = arith.constant 0 : index
    %c0_0 = arith.constant 0 : index
    %0 = vector.load %arg1[%c0, %c0_0] : memref<256x22xf32, #tpu.memory_space<vmem>>, vector<256x22xf32>
    %c0_1 = arith.constant 0 : index
    %c0_2 = arith.constant 0 : index
    %1 = vector.load %arg3[%c0_1, %c0_2] : memref<22x64xf32, #tpu.memory_space<vmem>>, vector<22x64xf32>
    %c0_3 = arith.constant 0 : index
    %c0_4 = arith.constant 0 : index
    %2 = vector.load %arg4[%c0_3, %c0_4] : memref<1x32xf32, #tpu.memory_space<vmem>>, vector<1x32xf32>
    %c0_5 = arith.constant 0 : index
    %c0_6 = arith.constant 0 : index
    %3 = vector.load %arg5[%c0_5, %c0_6] : memref<32x32xbf16, #tpu.memory_space<vmem>>, vector<32x32xbf16>
    %c0_7 = arith.constant 0 : index
    %c0_8 = arith.constant 0 : index
    %4 = vector.load %arg6[%c0_7, %c0_8] : memref<1x32xf32, #tpu.memory_space<vmem>>, vector<1x32xf32>
    %c0_9 = arith.constant 0 : index
    %c0_10 = arith.constant 0 : index
    %5 = vector.load %arg7[%c0_9, %c0_10] : memref<32x4xbf16, #tpu.memory_space<vmem>>, vector<32x4xbf16>
    %c0_11 = arith.constant 0 : index
    %c0_12 = arith.constant 0 : index
    %6 = vector.load %arg8[%c0_11, %c0_12] : memref<1x4xf32, #tpu.memory_space<vmem>>, vector<1x4xf32>
    %c0_13 = arith.constant 0 : index
    %c0_14 = arith.constant 0 : index
    %7 = vector.load %arg2[%c0_13, %c0_14] : memref<1x256xf32, #tpu.memory_space<vmem>>, vector<1x256xf32>
    %cst = arith.constant dense<0.000000e+00> : vector<256x64xf32>
    %8 = tpu.matmul %0, %1, %cst {dimension_numbers = #tpu.dot_dimension_numbers<[1], [0], [0], [1], [0, 0, 1, 1], [], []>} : vector<256x22xf32>, vector<22x64xf32>, vector<256x64xf32> -> vector<256x64xf32>
    %9 = vector.extract_strided_slice %8 {offsets = [0, 0], sizes = [256, 32], strides = [1, 1]} : vector<256x64xf32> to vector<256x32xf32>
    %10 = vector.broadcast %2 : vector<1x32xf32> to vector<256x32xf32>
    %11 = arith.addf %9, %10 : vector<256x32xf32>
    %12 = vector.extract_strided_slice %8 {offsets = [0, 32], sizes = [256, 32], strides = [1, 1]} : vector<256x64xf32> to vector<256x32xf32>
    %cst_15 = arith.constant 0.000000e+00 : f32
    %13 = vector.broadcast %cst_15 : f32 to vector<256x32xf32>
    %14 = arith.mulf %13, %12 : vector<256x32xf32>
    %15 = arith.addf %11, %14 : vector<256x32xf32>
    %cst_16 = arith.constant 0.000000e+00 : f32
    %16 = vector.broadcast %cst_16 : f32 to vector<256x32xf32>
    %17 = arith.maximumf %15, %16 : vector<256x32xf32>
    %18 = arith.truncf %17 : vector<256x32xf32> to vector<256x32xbf16>
    %cst_17 = arith.constant 0.142857149 : f32
    %19 = vector.broadcast %cst_17 : f32 to vector<256x32xf32>
    %20 = arith.mulf %19, %12 : vector<256x32xf32>
    %21 = arith.addf %11, %20 : vector<256x32xf32>
    %cst_18 = arith.constant 0.000000e+00 : f32
    %22 = vector.broadcast %cst_18 : f32 to vector<256x32xf32>
    %23 = arith.maximumf %21, %22 : vector<256x32xf32>
    %24 = arith.truncf %23 : vector<256x32xf32> to vector<256x32xbf16>
    %cst_19 = arith.constant 0.285714298 : f32
    %25 = vector.broadcast %cst_19 : f32 to vector<256x32xf32>
    %26 = arith.mulf %25, %12 : vector<256x32xf32>
    %27 = arith.addf %11, %26 : vector<256x32xf32>
    %cst_20 = arith.constant 0.000000e+00 : f32
    %28 = vector.broadcast %cst_20 : f32 to vector<256x32xf32>
    %29 = arith.maximumf %27, %28 : vector<256x32xf32>
    %30 = arith.truncf %29 : vector<256x32xf32> to vector<256x32xbf16>
    %cst_21 = arith.constant 0.428571433 : f32
    %31 = vector.broadcast %cst_21 : f32 to vector<256x32xf32>
    %32 = arith.mulf %31, %12 : vector<256x32xf32>
    %33 = arith.addf %11, %32 : vector<256x32xf32>
    %cst_22 = arith.constant 0.000000e+00 : f32
    %34 = vector.broadcast %cst_22 : f32 to vector<256x32xf32>
    %35 = arith.maximumf %33, %34 : vector<256x32xf32>
    %36 = arith.truncf %35 : vector<256x32xf32> to vector<256x32xbf16>
    %cst_23 = arith.constant 0.571428597 : f32
    %37 = vector.broadcast %cst_23 : f32 to vector<256x32xf32>
    %38 = arith.mulf %37, %12 : vector<256x32xf32>
    %39 = arith.addf %11, %38 : vector<256x32xf32>
    %cst_24 = arith.constant 0.000000e+00 : f32
    %40 = vector.broadcast %cst_24 : f32 to vector<256x32xf32>
    %41 = arith.maximumf %39, %40 : vector<256x32xf32>
    %42 = arith.truncf %41 : vector<256x32xf32> to vector<256x32xbf16>
    %cst_25 = arith.constant 0.714285731 : f32
    %43 = vector.broadcast %cst_25 : f32 to vector<256x32xf32>
    %44 = arith.mulf %43, %12 : vector<256x32xf32>
    %45 = arith.addf %11, %44 : vector<256x32xf32>
    %cst_26 = arith.constant 0.000000e+00 : f32
    %46 = vector.broadcast %cst_26 : f32 to vector<256x32xf32>
    %47 = arith.maximumf %45, %46 : vector<256x32xf32>
    %48 = arith.truncf %47 : vector<256x32xf32> to vector<256x32xbf16>
    %cst_27 = arith.constant 0.857142865 : f32
    %49 = vector.broadcast %cst_27 : f32 to vector<256x32xf32>
    %50 = arith.mulf %49, %12 : vector<256x32xf32>
    %51 = arith.addf %11, %50 : vector<256x32xf32>
    %cst_28 = arith.constant 0.000000e+00 : f32
    %52 = vector.broadcast %cst_28 : f32 to vector<256x32xf32>
    %53 = arith.maximumf %51, %52 : vector<256x32xf32>
    %54 = arith.truncf %53 : vector<256x32xf32> to vector<256x32xbf16>
    %cst_29 = arith.constant 1.000000e+00 : f32
    %55 = vector.broadcast %cst_29 : f32 to vector<256x32xf32>
    %56 = arith.mulf %55, %12 : vector<256x32xf32>
    %57 = arith.addf %11, %56 : vector<256x32xf32>
    %cst_30 = arith.constant 0.000000e+00 : f32
    %58 = vector.broadcast %cst_30 : f32 to vector<256x32xf32>
    %59 = arith.maximumf %57, %58 : vector<256x32xf32>
    %60 = arith.truncf %59 : vector<256x32xf32> to vector<256x32xbf16>
    %61 = tpu.concatenate %18, %24, %30, %36, %42, %48, %54, %60 in 0 : vector<256x32xbf16>, vector<256x32xbf16>, vector<256x32xbf16>, vector<256x32xbf16>, vector<256x32xbf16>, vector<256x32xbf16>, vector<256x32xbf16>, vector<256x32xbf16> -> vector<2048x32xbf16>
    %cst_31 = arith.constant dense<0.000000e+00> : vector<2048x32xf32>
    %62 = tpu.matmul %61, %3, %cst_31 {dimension_numbers = #tpu.dot_dimension_numbers<[1], [0], [0], [1], [0, 0, 1, 1], [], []>} : vector<2048x32xbf16>, vector<32x32xbf16>, vector<2048x32xf32> -> vector<2048x32xf32>
    %63 = vector.broadcast %4 : vector<1x32xf32> to vector<2048x32xf32>
    %64 = arith.addf %62, %63 : vector<2048x32xf32>
    %cst_32 = arith.constant 0.000000e+00 : f32
    %65 = vector.broadcast %cst_32 : f32 to vector<2048x32xf32>
    %66 = arith.maximumf %64, %65 : vector<2048x32xf32>
    %67 = arith.truncf %66 : vector<2048x32xf32> to vector<2048x32xbf16>
    %cst_33 = arith.constant dense<0.000000e+00> : vector<2048x4xf32>
    %68 = tpu.matmul %67, %5, %cst_33 {dimension_numbers = #tpu.dot_dimension_numbers<[1], [0], [0], [1], [0, 0, 1, 1], [], []>} : vector<2048x32xbf16>, vector<32x4xbf16>, vector<2048x4xf32> -> vector<2048x4xf32>
    %69 = vector.broadcast %6 : vector<1x4xf32> to vector<2048x4xf32>
    %70 = arith.addf %68, %69 : vector<2048x4xf32>
    %71 = tpu.transpose %70, [1, 0] : vector<2048x4xf32> -> vector<4x2048xf32>
    %72 = vector.extract_strided_slice %71 {offsets = [0, 0], sizes = [1, 256], strides = [1, 1]} : vector<4x2048xf32> to vector<1x256xf32>
    %73 = vector.extract_strided_slice %71 {offsets = [0, 256], sizes = [1, 256], strides = [1, 1]} : vector<4x2048xf32> to vector<1x256xf32>
    %74 = vector.extract_strided_slice %71 {offsets = [0, 512], sizes = [1, 256], strides = [1, 1]} : vector<4x2048xf32> to vector<1x256xf32>
    %75 = vector.extract_strided_slice %71 {offsets = [0, 768], sizes = [1, 256], strides = [1, 1]} : vector<4x2048xf32> to vector<1x256xf32>
    %76 = vector.extract_strided_slice %71 {offsets = [0, 1024], sizes = [1, 256], strides = [1, 1]} : vector<4x2048xf32> to vector<1x256xf32>
    %77 = vector.extract_strided_slice %71 {offsets = [0, 1280], sizes = [1, 256], strides = [1, 1]} : vector<4x2048xf32> to vector<1x256xf32>
    %78 = vector.extract_strided_slice %71 {offsets = [0, 1536], sizes = [1, 256], strides = [1, 1]} : vector<4x2048xf32> to vector<1x256xf32>
    %79 = vector.extract_strided_slice %71 {offsets = [0, 1792], sizes = [1, 256], strides = [1, 1]} : vector<4x2048xf32> to vector<1x256xf32>
    %80 = tpu.concatenate %72, %73, %74, %75, %76, %77, %78, %79 in 0 : vector<1x256xf32>, vector<1x256xf32>, vector<1x256xf32>, vector<1x256xf32>, vector<1x256xf32>, vector<1x256xf32>, vector<1x256xf32>, vector<1x256xf32> -> vector<8x256xf32>
    %81 = vector.extract_strided_slice %71 {offsets = [1, 0], sizes = [3, 256], strides = [1, 1]} : vector<4x2048xf32> to vector<3x256xf32>
    %82 = vector.extract_strided_slice %71 {offsets = [1, 256], sizes = [3, 256], strides = [1, 1]} : vector<4x2048xf32> to vector<3x256xf32>
    %83 = vector.extract_strided_slice %71 {offsets = [1, 512], sizes = [3, 256], strides = [1, 1]} : vector<4x2048xf32> to vector<3x256xf32>
    %84 = vector.extract_strided_slice %71 {offsets = [1, 768], sizes = [3, 256], strides = [1, 1]} : vector<4x2048xf32> to vector<3x256xf32>
    %85 = vector.extract_strided_slice %71 {offsets = [1, 1024], sizes = [3, 256], strides = [1, 1]} : vector<4x2048xf32> to vector<3x256xf32>
    %86 = vector.extract_strided_slice %71 {offsets = [1, 1280], sizes = [3, 256], strides = [1, 1]} : vector<4x2048xf32> to vector<3x256xf32>
    %87 = vector.extract_strided_slice %71 {offsets = [1, 1536], sizes = [3, 256], strides = [1, 1]} : vector<4x2048xf32> to vector<3x256xf32>
    %88 = vector.extract_strided_slice %71 {offsets = [1, 1792], sizes = [3, 256], strides = [1, 1]} : vector<4x2048xf32> to vector<3x256xf32>
    %89 = vector.shape_cast %81 : vector<3x256xf32> to vector<1x3x256xf32>
    %90 = vector.shape_cast %82 : vector<3x256xf32> to vector<1x3x256xf32>
    %91 = vector.shape_cast %83 : vector<3x256xf32> to vector<1x3x256xf32>
    %92 = vector.shape_cast %84 : vector<3x256xf32> to vector<1x3x256xf32>
    %93 = vector.shape_cast %85 : vector<3x256xf32> to vector<1x3x256xf32>
    %94 = vector.shape_cast %86 : vector<3x256xf32> to vector<1x3x256xf32>
    %95 = vector.shape_cast %87 : vector<3x256xf32> to vector<1x3x256xf32>
    %96 = vector.shape_cast %88 : vector<3x256xf32> to vector<1x3x256xf32>
    %97 = tpu.concatenate %89, %90, %91, %92, %93, %94, %95, %96 in 0 : vector<1x3x256xf32>, vector<1x3x256xf32>, vector<1x3x256xf32>, vector<1x3x256xf32>, vector<1x3x256xf32>, vector<1x3x256xf32>, vector<1x3x256xf32>, vector<1x3x256xf32> -> vector<8x3x256xf32>
    %cst_34 = arith.constant 1.000000e+00 : f32
    %98 = vector.broadcast %cst_34 : f32 to vector<8x256xf32>
    %99 = arith.subf %80, %98 : vector<8x256xf32>
    %cst_35 = arith.constant 0.000000e+00 : f32
    %100 = vector.broadcast %cst_35 : f32 to vector<8x256xf32>
    %101 = arith.maximumf %99, %100 : vector<8x256xf32>
    %102 = math.absf %99 : vector<8x256xf32>
    %cst_36 = arith.constant 0.000000e+00 : f32
    %103 = vector.broadcast %cst_36 : f32 to vector<8x256xf32>
    %104 = arith.subf %103, %102 : vector<8x256xf32>
    %105 = math.exp %104 : vector<8x256xf32>
    %cst_37 = arith.constant 1.000000e+00 : f32
    %106 = vector.broadcast %cst_37 : f32 to vector<8x256xf32>
    %107 = arith.addf %106, %105 : vector<8x256xf32>
    %108 = math.log %107 : vector<8x256xf32>
    %109 = arith.addf %101, %108 : vector<8x256xf32>
    %cst_38 = arith.constant 0.000000e+00 : f32
    %110 = vector.broadcast %cst_38 : f32 to vector<8x3x256xf32>
    %111 = arith.subf %110, %97 : vector<8x3x256xf32>
    %112 = math.exp %111 : vector<8x3x256xf32>
    %cst_39 = arith.constant 1.000000e+00 : f32
    %113 = vector.broadcast %cst_39 : f32 to vector<8x3x256xf32>
    %114 = arith.addf %113, %112 : vector<8x3x256xf32>
    %cst_40 = arith.constant 1.000000e+00 : f32
    %115 = vector.broadcast %cst_40 : f32 to vector<8x3x256xf32>
    %116 = arith.divf %115, %114 : vector<8x3x256xf32>
    %cst_41 = arith.constant 1.002000e+00 : f32
    %117 = vector.broadcast %cst_41 : f32 to vector<8x3x256xf32>
    %118 = arith.mulf %116, %117 : vector<8x3x256xf32>
    %cst_42 = arith.constant 1.000000e-03 : f32
    %119 = vector.broadcast %cst_42 : f32 to vector<8x3x256xf32>
    %120 = arith.subf %118, %119 : vector<8x3x256xf32>
    %121 = tpu.iota {dimensions = array<i32: 0>} : vector<8x256xi32>
    %c7_i32 = arith.constant 7 : i32
    %122 = vector.broadcast %c7_i32 : i32 to vector<8x256xi32>
    %123 = arith.cmpi eq, %121, %122 : vector<8x256xi32>
    %cst_43 = arith.constant 1.000000e+10 : f32
    %cst_44 = arith.constant 0.142857149 : f32
    %124 = vector.broadcast %cst_43 : f32 to vector<8x256xf32>
    %125 = vector.broadcast %cst_44 : f32 to vector<8x256xf32>
    %126 = arith.select %123, %124, %125 : vector<8x256xi1>, vector<8x256xf32>
    %127 = arith.mulf %109, %126 : vector<8x256xf32>
    %128 = vector.broadcast %7 : vector<1x256xf32> to vector<8x256xf32>
    %129 = arith.mulf %127, %128 : vector<8x256xf32>
    %cst_45 = arith.constant 0.000000e+00 : f32
    %130 = vector.broadcast %cst_45 : f32 to vector<8x256xf32>
    %131 = arith.subf %130, %129 : vector<8x256xf32>
    %132 = math.exp %131 : vector<8x256xf32>
    %cst_46 = arith.constant 1.000000e+00 : f32
    %133 = vector.broadcast %cst_46 : f32 to vector<8x256xf32>
    %134 = arith.subf %133, %132 : vector<8x256xf32>
    %135 = tpu.iota {dimensions = array<i32: 0>} : vector<8x8xi32>
    %136 = tpu.iota {dimensions = array<i32: 1>} : vector<8x8xi32>
    %137 = arith.cmpi slt, %136, %135 : vector<8x8xi32>
    %138 = arith.extui %137 : vector<8x8xi1> to vector<8x8xi32>
    %139 = arith.sitofp %138 : vector<8x8xi32> to vector<8x8xf32>
    %cst_47 = arith.constant dense<0.000000e+00> : vector<8x256xf32>
    %140 = tpu.matmul %139, %129, %cst_47 {dimension_numbers = #tpu.dot_dimension_numbers<[1], [0], [0], [1], [0, 0, 1, 1], [], []>} : vector<8x8xf32>, vector<8x256xf32>, vector<8x256xf32> -> vector<8x256xf32>
    %cst_48 = arith.constant 0.000000e+00 : f32
    %141 = vector.broadcast %cst_48 : f32 to vector<8x256xf32>
    %142 = arith.subf %141, %140 : vector<8x256xf32>
    %143 = math.exp %142 : vector<8x256xf32>
    %144 = arith.mulf %134, %143 : vector<8x256xf32>
    %145 = vector.shape_cast %144 : vector<8x256xf32> to vector<8x1x256xf32>
    %146 = vector.broadcast %145 : vector<8x1x256xf32> to vector<8x3x256xf32>
    %147 = arith.mulf %146, %120 : vector<8x3x256xf32>
    %cst_49 = arith.constant dense<0.000000e+00> : vector<3x256xf32>
    %148 = vector.multi_reduction <add>, %147, %cst_49 [0] : vector<8x3x256xf32> to vector<3x256xf32>
    %c0_50 = arith.constant 0 : index
    %c0_51 = arith.constant 0 : index
    %149 = vector.load %arg9[%c0_50, %c0_51] : memref<3x256xf32, #tpu.memory_space<vmem>>, vector<3x256xf32>
    tpu.vector_store %arg9[%c0_50, %c0_51], %148 {strides = array<i32>} : memref<3x256xf32, #tpu.memory_space<vmem>>, vector<3x256xf32>,
    return
  }
  func.func @transform_0(%arg0: i32) -> (i32, i32) {
    %c0_i32 = arith.constant 0 : i32
    %c0_i32_0 = arith.constant 0 : i32
    return %arg0, %c0_i32 : i32, i32
  }
  func.func @transform_1(%arg0: i32) -> (i32, i32) {
    %c0_i32 = arith.constant 0 : i32
    %c0_i32_0 = arith.constant 0 : i32
    return %c0_i32, %arg0 : i32, i32
  }
  func.func @transform_2(%arg0: i32) -> (i32, i32) {
    %c0_i32 = arith.constant 0 : i32
    %c0_i32_0 = arith.constant 0 : i32
    %c0_i32_1 = arith.constant 0 : i32
    return %c0_i32, %c0_i32_0 : i32, i32
  }
  func.func @transform_3(%arg0: i32) -> (i32, i32) {
    %c0_i32 = arith.constant 0 : i32
    %c0_i32_0 = arith.constant 0 : i32
    %c0_i32_1 = arith.constant 0 : i32
    return %c0_i32, %c0_i32_0 : i32, i32
  }
  func.func @transform_4(%arg0: i32) -> (i32, i32) {
    %c0_i32 = arith.constant 0 : i32
    %c0_i32_0 = arith.constant 0 : i32
    %c0_i32_1 = arith.constant 0 : i32
    return %c0_i32, %c0_i32_0 : i32, i32
  }
  func.func @transform_5(%arg0: i32) -> (i32, i32) {
    %c0_i32 = arith.constant 0 : i32
    %c0_i32_0 = arith.constant 0 : i32
    %c0_i32_1 = arith.constant 0 : i32
    return %c0_i32, %c0_i32_0 : i32, i32
  }
  func.func @transform_6(%arg0: i32) -> (i32, i32) {
    %c0_i32 = arith.constant 0 : i32
    %c0_i32_0 = arith.constant 0 : i32
    %c0_i32_1 = arith.constant 0 : i32
    return %c0_i32, %c0_i32_0 : i32, i32
  }
  func.func @transform_7(%arg0: i32) -> (i32, i32) {
    %c0_i32 = arith.constant 0 : i32
    %c0_i32_0 = arith.constant 0 : i32
    %c0_i32_1 = arith.constant 0 : i32
    return %c0_i32, %c0_i32_0 : i32, i32
  }
  func.func @transform_8(%arg0: i32) -> (i32, i32) {
    %c0_i32 = arith.constant 0 : i32
    %c0_i32_0 = arith.constant 0 : i32
    return %c0_i32, %arg0 : i32, i32
  }
}

</mosaic_0001>

<llo_original>
// kernel: tpu_custom_call.1
$region0: #{tpu_custom_call.1}
  #allocation0 [shape = 'u32[]', space=smem, size = 0x4, offset = 0x4, fixed_abs, tag = 'smem constant byte address 0x4 - core index']
  #allocation1 [shape = 'u32[72,128]{1,0:T(1,128)}', space=vmem, size = 0x9000, scoped, tag = 'internal scratch']
  %s0 = inlined_call_operand.vmem [shape: f32[512,22], index: 0, kind: input, shape index: {}]
  %s1 = inlined_call_operand.vmem [shape: f32[1,512], index: 1, kind: input, shape index: {}]
  %s2 = inlined_call_operand.vmem [shape: f32[22,64], index: 2, kind: input, shape index: {}]
  %s3 = inlined_call_operand.vmem [shape: f32[1,32], index: 3, kind: input, shape index: {}]
  %s4 = inlined_call_operand.vmem [shape: bf16[32,32], index: 4, kind: input, shape index: {}]
  %s5 = inlined_call_operand.vmem [shape: f32[1,32], index: 5, kind: input, shape index: {}]
  %s6 = inlined_call_operand.vmem [shape: bf16[32,4], index: 6, kind: input, shape index: {}]
  %s7 = inlined_call_operand.vmem [shape: f32[1,4], index: 7, kind: input, shape index: {}]
  %s8 = inlined_call_operand.hbm [shape: f32[3,512], index: 8, kind: output, shape index: {}]
  %s9 = sld [smem:[#allocation0]]
  $region65: #{tpu_custom_call.1} parent=0
    _
  %s11 = ssub.s32 1, %s9
  %s12 = scalar_select 0, %s11, %s9
  $region1: #{tpu_custom_call.1} parent=0
    #allocation2 [shape = 'u8[8192]{0}', space=vmem, size = 0x2000, scoped, tag = 'output window, operand 0']
    #allocation3 [shape = 's32[2]{0}', space=sflag, size = 0x8, scoped, tag = 'scoped memory for tpu_custom_call.1']
    %13 = vsyncpa [#allocation3], 0
    %s14 = scalar_lea.sflag [#allocation3], 1
    %15 = vsyncpa %s14, 0
    loop: start=0, step=1, limit=4
    $region2: #{tpu_custom_call.1} parent=1 // loop_pre_header
      _
    $region3: #{tpu_custom_call.1} parent=1 // loop_header
      %s17 = sphi 0, %s21
      %p18 = scmp.ge.s32.totalorder %s17, 4
      %s27 = sphi 0, %s29
      %s30 = sphi 0, %s27
      %s31 = sphi 0, %s30
      %s47 = sphi 0, %s31
      %s53 = sphi 0, %s55
      %s56 = sphi 0, %s53
      %s57 = sphi 0, %s56
      %s73 = sphi 0, %s57
      %s77 = sphi 0, %s77
      %s79 = sphi 0, %s77
      %s80 = sphi 0, %s79
      %s94 = sphi 0, %s80
      %s98 = sphi 0, %s98
      %s100 = sphi 0, %s98
      %s101 = sphi 0, %s100
      %s115 = sphi 0, %s101
      %s119 = sphi 0, %s119
      %s121 = sphi 0, %s119
      %s122 = sphi 0, %s121
      %s136 = sphi 0, %s122
      %s140 = sphi 0, %s140
      %s142 = sphi 0, %s140
      %s143 = sphi 0, %s142
      %s157 = sphi 0, %s143
      %s161 = sphi 0, %s161
      %s163 = sphi 0, %s161
      %s164 = sphi 0, %s163
      %s178 = sphi 0, %s164
      %s182 = sphi 0, %s182
      %s184 = sphi 0, %s182
      %s185 = sphi 0, %s184
      %s199 = sphi 0, %s185
      %s205 = sphi 0, %s207
      %s208 = sphi 0, %s205
      %s209 = sphi 0, %s208
      %s225 = sphi 0, %s209
    $region4: #{tpu_custom_call.1} parent=1 // loop_header_branch
      %20 = sbr.rel (%p18) target = $region8
    $region5: #{tpu_custom_call.1} parent=1 // loop_body
      %s22 = ssub.s32 %s17, 1
      %s23 = ssub.s32 %s17, 2
      %s24 = sadd.s32 %s17, 1
      %s25 = ssub.s32 %s17, %s24
      %p26 = scmp.eq.s32.totalorder %s25, 0
      %s28 = sadd.s32 %s27, 1
      %s29 = scalar_select %p26, %s27, %s28
      %p32 = pneg %p26
      %p33 = scmp.eq.s32.totalorder %s17, 1
      %p34 = por %p32, %p33
      %p35 = scmp.ne.s32.totalorder %s27, %s30
      %p36 = scmp.eq.s32.totalorder %s17, 0
      %p37 = por %p35, %p36
      %p38 = scmp.ne.s32.totalorder %s27, %s30
      %p39 = scmp.eq.s32.totalorder %s22, 1
      %p40 = por %p38, %p39
      %p41 = scmp.ne.s32.totalorder %s30, %s31
      %p42 = scmp.eq.s32.totalorder %s22, 0
      %p43 = por %p41, %p42
      %p44 = scmp.ne.s32.totalorder %s30, %s31
      %p45 = scmp.eq.s32.totalorder %s23, 1
      %p46 = por %p44, %p45
      %p48 = scmp.ne.s32.totalorder %s31, %s47
      %p49 = scmp.eq.s32.totalorder %s23, 0
      %p50 = por %p48, %p49
      %s51 = ssub.s32 %s17, %s24
      %p52 = scmp.eq.s32.totalorder %s51, 0
      %s54 = sadd.s32 %s53, 1
      %s55 = scalar_select %p52, %s53, %s54
      %p58 = pneg %p52
      %p59 = scmp.eq.s32.totalorder %s17, 1
      %p60 = por %p58, %p59
      %p61 = scmp.ne.s32.totalorder %s53, %s56
      %p62 = scmp.eq.s32.totalorder %s17, 0
      %p63 = por %p61, %p62
      %p64 = scmp.ne.s32.totalorder %s53, %s56
      %p65 = scmp.eq.s32.totalorder %s22, 1
      %p66 = por %p64, %p65
      %p67 = scmp.ne.s32.totalorder %s56, %s57
      %p68 = scmp.eq.s32.totalorder %s22, 0
      %p69 = por %p67, %p68
      %p70 = scmp.ne.s32.totalorder %s56, %s57
      %p71 = scmp.eq.s32.totalorder %s23, 1
      %p72 = por %p70, %p71
      %p74 = scmp.ne.s32.totalorder %s57, %s73
      %p75 = scmp.eq.s32.totalorder %s23, 0
      %p76 = por %p74, %p75
      %s78 = sadd.s32 %s77, 1
      %p81 = scmp.eq.s32.totalorder %s17, 1
      %p82 = scmp.ne.s32.totalorder %s77, %s79
      %p83 = scmp.eq.s32.totalorder %s17, 0
      %p84 = por %p82, %p83
      %p85 = scmp.ne.s32.totalorder %s77, %s79
      %p86 = scmp.eq.s32.totalorder %s22, 1
      %p87 = por %p85, %p86
      %p88 = scmp.ne.s32.totalorder %s79, %s80
      %p89 = scmp.eq.s32.totalorder %s22, 0
      %p90 = por %p88, %p89
      %p91 = scmp.ne.s32.totalorder %s79, %s80
      %p92 = scmp.eq.s32.totalorder %s23, 1
      %p93 = por %p91, %p92
      %p95 = scmp.ne.s32.totalorder %s80, %s94
      %p96 = scmp.eq.s32.totalorder %s23, 0
      %p97 = por %p95, %p96
      %s99 = sadd.s32 %s98, 1
      %p102 = scmp.eq.s32.totalorder %s17, 1
      %p103 = scmp.ne.s32.totalorder %s98, %s100
      %p104 = scmp.eq.s32.totalorder %s17, 0
      %p105 = por %p103, %p104
      %p106 = scmp.ne.s32.totalorder %s98, %s100
      %p107 = scmp.eq.s32.totalorder %s22, 1
      %p108 = por %p106, %p107
      %p109 = scmp.ne.s32.totalorder %s100, %s101
      %p110 = scmp.eq.s32.totalorder %s22, 0
      %p111 = por %p109, %p110
      %p112 = scmp.ne.s32.totalorder %s100, %s101
      %p113 = scmp.eq.s32.totalorder %s23, 1
      %p114 = por %p112, %p113
      %p116 = scmp.ne.s32.totalorder %s101, %s115
      %p117 = scmp.eq.s32.totalorder %s23, 0
      %p118 = por %p116, %p117
      %s120 = sadd.s32 %s119, 1
      %p123 = scmp.eq.s32.totalorder %s17, 1
      %p124 = scmp.ne.s32.totalorder %s119, %s121
      %p125 = scmp.eq.s32.totalorder %s17, 0
      %p126 = por %p124, %p125
      %p127 = scmp.ne.s32.totalorder %s119, %s121
      %p128 = scmp.eq.s32.totalorder %s22, 1
      %p129 = por %p127, %p128
      %p130 = scmp.ne.s32.totalorder %s121, %s122
      %p131 = scmp.eq.s32.totalorder %s22, 0
      %p132 = por %p130, %p131
      %p133 = scmp.ne.s32.totalorder %s121, %s122
      %p134 = scmp.eq.s32.totalorder %s23, 1
      %p135 = por %p133, %p134
      %p137 = scmp.ne.s32.totalorder %s122, %s136
      %p138 = scmp.eq.s32.totalorder %s23, 0
      %p139 = por %p137, %p138
      %s141 = sadd.s32 %s140, 1
      %p144 = scmp.eq.s32.totalorder %s17, 1
      %p145 = scmp.ne.s32.totalorder %s140, %s142
      %p146 = scmp.eq.s32.totalorder %s17, 0
      %p147 = por %p145, %p146
      %p148 = scmp.ne.s32.totalorder %s140, %s142
      %p149 = scmp.eq.s32.totalorder %s22, 1
      %p150 = por %p148, %p149
      %p151 = scmp.ne.s32.totalorder %s142, %s143
      %p152 = scmp.eq.s32.totalorder %s22, 0
      %p153 = por %p151, %p152
      %p154 = scmp.ne.s32.totalorder %s142, %s143
      %p155 = scmp.eq.s32.totalorder %s23, 1
      %p156 = por %p154, %p155
      %p158 = scmp.ne.s32.totalorder %s143, %s157
      %p159 = scmp.eq.s32.totalorder %s23, 0
      %p160 = por %p158, %p159
      %s162 = sadd.s32 %s161, 1
      %p165 = scmp.eq.s32.totalorder %s17, 1
      %p166 = scmp.ne.s32.totalorder %s161, %s163
      %p167 = scmp.eq.s32.totalorder %s17, 0
      %p168 = por %p166, %p167
      %p169 = scmp.ne.s32.totalorder %s161, %s163
      %p170 = scmp.eq.s32.totalorder %s22, 1
      %p171 = por %p169, %p170
      %p172 = scmp.ne.s32.totalorder %s163, %s164
      %p173 = scmp.eq.s32.totalorder %s22, 0
      %p174 = por %p172, %p173
      %p175 = scmp.ne.s32.totalorder %s163, %s164
      %p176 = scmp.eq.s32.totalorder %s23, 1
      %p177 = por %p175, %p176
      %p179 = scmp.ne.s32.totalorder %s164, %s178
      %p180 = scmp.eq.s32.totalorder %s23, 0
      %p181 = por %p179, %p180
      %s183 = sadd.s32 %s182, 1
      %p186 = scmp.eq.s32.totalorder %s17, 1
      %p187 = scmp.ne.s32.totalorder %s182, %s184
      %p188 = scmp.eq.s32.totalorder %s17, 0
      %p189 = por %p187, %p188
      %p190 = scmp.ne.s32.totalorder %s182, %s184
      %p191 = scmp.eq.s32.totalorder %s22, 1
      %p192 = por %p190, %p191
      %p193 = scmp.ne.s32.totalorder %s184, %s185
      %p194 = scmp.eq.s32.totalorder %s22, 0
      %p195 = por %p193, %p194
      %p196 = scmp.ne.s32.totalorder %s184, %s185
      %p197 = scmp.eq.s32.totalorder %s23, 1
      %p198 = por %p196, %p197
      %p200 = scmp.ne.s32.totalorder %s185, %s199
      %p201 = scmp.eq.s32.totalorder %s23, 0
      %p202 = por %p200, %p201
      %s203 = ssub.s32 %s17, %s24
      %p204 = scmp.eq.s32.totalorder %s203, 0
      %s206 = sadd.s32 %s205, 1
      %s207 = scalar_select %p204, %s205, %s206
      %p210 = pneg %p204
      %p211 = scmp.eq.s32.totalorder %s17, 1
      %p212 = por %p210, %p211
      %p213 = scmp.ne.s32.totalorder %s205, %s208
      %p214 = scmp.eq.s32.totalorder %s17, 0
      %p215 = por %p213, %p214
      %p216 = scmp.ne.s32.totalorder %s205, %s208
      %p217 = scmp.eq.s32.totalorder %s22, 1
      %p218 = por %p216, %p217
      %p219 = scmp.ne.s32.totalorder %s208, %s209
      %p220 = scmp.eq.s32.totalorder %s22, 0
      %p221 = por %p219, %p220
      %p222 = scmp.ne.s32.totalorder %s208, %s209
      %p223 = scmp.eq.s32.totalorder %s23, 1
      %p224 = por %p222, %p223
      %p226 = scmp.ne.s32.totalorder %s209, %s225
      %p227 = scmp.eq.s32.totalorder %s23, 0
      %p228 = por %p226, %p227
      %p229 = scmp.le.s32.totalorder 1, %s17
      %p230 = scmp.lt.s32.totalorder %s17, 3
      %p231 = pnand %p229, %p230
      %p232 = pneg %p231
      // Predicated region
      $region9: #{tpu_custom_call.1} parent=5 // pred_check
        _
      $region10: #{tpu_custom_call.1} parent=5 // pred_check_branch
        %234 = sbr.rel (%p231) target = $region12
      $region11: #{tpu_custom_call.1} parent=5 // pred_region
        %s235 = ssub.s32 %s17, 1
        // Predicated region
        $region13: #{tpu_custom_call.1} parent=11 // pred_check
          %p236 = pneg %p90
        $region14: #{tpu_custom_call.1} parent=11 // pred_check_branch
          %238 = sbr.rel (%p236) target = $region16
        $region15: #{tpu_custom_call.1} parent=11 // pred_region
          _
        $region16: #{tpu_custom_call.1} parent=11 // pred_fallthru
          _
        // Predicated region
        $region17: #{tpu_custom_call.1} parent=11 // pred_check
          %p239 = pneg %p111
        $region18: #{tpu_custom_call.1} parent=11 // pred_check_branch
          %241 = sbr.rel (%p239) target = $region20
        $region19: #{tpu_custom_call.1} parent=11 // pred_region
          _
        $region20: #{tpu_custom_call.1} parent=11 // pred_fallthru
          _
        // Predicated region
        $region21: #{tpu_custom_call.1} parent=11 // pred_check
          %p242 = pneg %p132
        $region22: #{tpu_custom_call.1} parent=11 // pred_check_branch
          %244 = sbr.rel (%p242) target = $region24
        $region23: #{tpu_custom_call.1} parent=11 // pred_region
          _
        $region24: #{tpu_custom_call.1} parent=11 // pred_fallthru
          _
        // Predicated region
        $region25: #{tpu_custom_call.1} parent=11 // pred_check
          %p245 = pneg %p153
        $region26: #{tpu_custom_call.1} parent=11 // pred_check_branch
          %247 = sbr.rel (%p245) target = $region28
        $region27: #{tpu_custom_call.1} parent=11 // pred_region
          _
        $region28: #{tpu_custom_call.1} parent=11 // pred_fallthru
          _
        // Predicated region
        $region29: #{tpu_custom_call.1} parent=11 // pred_check
          %p248 = pneg %p174
        $region30: #{tpu_custom_call.1} parent=11 // pred_check_branch
          %250 = sbr.rel (%p248) target = $region32
        $region31: #{tpu_custom_call.1} parent=11 // pred_region
          _
        $region32: #{tpu_custom_call.1} parent=11 // pred_fallthru
          _
        // Predicated region
        $region33: #{tpu_custom_call.1} parent=11 // pred_check
          %p251 = pneg %p195
        $region34: #{tpu_custom_call.1} parent=11 // pred_check_branch
          %253 = sbr.rel (%p251) target = $region36
        $region35: #{tpu_custom_call.1} parent=11 // pred_region
          _
        $region36: #{tpu_custom_call.1} parent=11 // pred_fallthru
          _
      $region12: #{tpu_custom_call.1} parent=5 // pred_fallthru
        _
      %p254 = scmp.lt.s32.totalorder %s17, 2
      // Predicated region
      $region37: #{tpu_custom_call.1} parent=5 // pred_check
        %p255 = pneg %p254
      $region38: #{tpu_custom_call.1} parent=5 // pred_check_branch
        %257 = sbr.rel (%p255) target = $region40
      $region39: #{tpu_custom_call.1} parent=5 // pred_region
        // Predicated region
        $region41: #{tpu_custom_call.1} parent=39 // pred_check
          %p258 = pneg %p37
        $region42: #{tpu_custom_call.1} parent=39 // pred_check_branch
          %260 = sbr.rel (%p258) target = $region44
        $region43: #{tpu_custom_call.1} parent=39 // pred_region
          %s261 = smul.u32 32, %s17
          %p262 = scmp.lt.s32.totalorder %s261, 63
          %s263 = scalar_select %p262, %s261, 63
          %s264 = smul.addr %s263, 8
          %s265 = scalar_lea.vmem %s0, %s264
          %s266 = smul.u32 32, %s17
        $region44: #{tpu_custom_call.1} parent=39 // pred_fallthru
          _
        // Predicated region
        $region45: #{tpu_custom_call.1} parent=39 // pred_check
          %p267 = pneg %p63
        $region46: #{tpu_custom_call.1} parent=39 // pred_check_branch
          %269 = sbr.rel (%p267) target = $region48
        $region47: #{tpu_custom_call.1} parent=39 // pred_region
          %s270 = smul.u32 2, %s17
          %p271 = scmp.lt.s32.totalorder %s270, 3
          %s272 = scalar_select %p271, %s270, 3
          %s273 = scalar_lea.vmem %s1, %s272
          %s274 = smul.u32 2, %s17
        $region48: #{tpu_custom_call.1} parent=39 // pred_fallthru
          _
      $region40: #{tpu_custom_call.1} parent=5 // pred_fallthru
        _
      %p275 = scmp.le.s32.totalorder 1, %s17
      %p276 = scmp.lt.s32.totalorder %s17, 3
      %p277 = pnand %p275, %p276
      %p278 = pneg %p277
      // Predicated region
      $region49: #{tpu_custom_call.1} parent=5 // pred_check
        _
      $region50: #{tpu_custom_call.1} parent=5 // pred_check_branch
        %280 = sbr.rel (%p277) target = $region52
      $region51: #{tpu_custom_call.1} parent=5 // pred_region
        %s281 = ssub.s32 %s17, 1
        %s282 = smul.u32 32, %s22
        %p283 = scmp.lt.s32.totalorder %s282, 63
        %s284 = scalar_select %p283, %s282, 63
        %s285 = smul.addr %s284, 8
        %s286 = scalar_lea.vmem %s0, %s285
        %p287 = pneg %p43
        %p288 = pneg %p40
        %s289 = smul.u32 2, %s22
        %p290 = scmp.lt.s32.totalorder %s289, 3
        %s291 = scalar_select %p290, %s289, 3
        %s292 = scalar_lea.vmem %s1, %s291
        %p293 = pneg %p69
        %p294 = pneg %p66
        %p295 = pneg %p90
        %p296 = pneg %p87
        %p297 = pneg %p111
        %p298 = pneg %p108
        %p299 = pneg %p132
        %p300 = pneg %p129
        %p301 = pneg %p153
        %p302 = pneg %p150
        %p303 = pneg %p174
        %p304 = pneg %p171
        %p305 = pneg %p195
        %p306 = pneg %p192
        %p307 = pneg %p221
        %p308 = pneg %p218
        %s309 = sand.u32 %s208, 1
        %s310 = scalar_lea.sflag [#allocation3], %s309
        %s311 = sand.u32 %s208, 1
        %s312 = smul.addr %s311, 8
        %s313 = scalar_lea.vmem [#allocation2], %s312
        %s314 = smul.u32 32, %s22
        %p315 = scmp.lt.s32.totalorder %s314, 63
        %s316 = scalar_select %p315, %s314, 63
        %s317 = smul.addr %s316, 8
        %s318 = scalar_lea.vmem %s0, %s317
        %s319 = smul.u32 32, %s22
        %s320 = smul.u32 2, %s22
        %p321 = scmp.lt.s32.totalorder %s320, 3
        %s322 = scalar_select %p321, %s320, 3
        %s323 = scalar_lea.vmem %s1, %s322
        %s324 = smul.u32 2, %s22
        %s325 = smul.u32 2, %s22
        %v327 = vld [vmem:[%s318] sm:$0xff]
        %v328 = vld [vmem:[%s318 + $0x8] sm:$0xff]
        %v329 = vld [vmem:[%s318 + $0x10] sm:$0xff]
        %v330 = vld [vmem:[%s318 + $0x18] sm:$0xff]
        %v331 = vld [vmem:[%s318 + $0x20] sm:$0xff]
        %v332 = vld [vmem:[%s318 + $0x28] sm:$0xff]
        %v333 = vld [vmem:[%s318 + $0x30] sm:$0xff]
        %v334 = vld [vmem:[%s318 + $0x38] sm:$0xff]
        %v335 = vld [vmem:[%s318 + $0x40] sm:$0xff]
        %v336 = vld [vmem:[%s318 + $0x48] sm:$0xff]
        %v337 = vld [vmem:[%s318 + $0x50] sm:$0xff]
        %v338 = vld [vmem:[%s318 + $0x58] sm:$0xff]
        %v339 = vld [vmem:[%s318 + $0x60] sm:$0xff]
        %v340 = vld [vmem:[%s318 + $0x68] sm:$0xff]
        %v341 = vld [vmem:[%s318 + $0x70] sm:$0xff]
        %v342 = vld [vmem:[%s318 + $0x78] sm:$0xff]
        %v343 = vld [vmem:[%s318 + $0x80] sm:$0xff]
        %v344 = vld [vmem:[%s318 + $0x88] sm:$0xff]
        %v345 = vld [vmem:[%s318 + $0x90] sm:$0xff]
        %v346 = vld [vmem:[%s318 + $0x98] sm:$0xff]
        %v347 = vld [vmem:[%s318 + $0xa0] sm:$0xff]
        %v348 = vld [vmem:[%s318 + $0xa8] sm:$0xff]
        %v349 = vld [vmem:[%s318 + $0xb0] sm:$0xff]
        %v350 = vld [vmem:[%s318 + $0xb8] sm:$0xff]
        %v351 = vld [vmem:[%s318 + $0xc0] sm:$0xff]
        %v352 = vld [vmem:[%s318 + $0xc8] sm:$0xff]
        %v353 = vld [vmem:[%s318 + $0xd0] sm:$0xff]
        %v354 = vld [vmem:[%s318 + $0xd8] sm:$0xff]
        %v355 = vld [vmem:[%s318 + $0xe0] sm:$0xff]
        %v356 = vld [vmem:[%s318 + $0xe8] sm:$0xff]
        %v357 = vld [vmem:[%s318 + $0xf0] sm:$0xff]
        %v358 = vld [vmem:[%s318 + $0xf8] sm:$0xff]
        %v359 = vld [vmem:[%s2] sm:$0xff]
        %v360 = vld [vmem:[%s2 + $0x8] sm:$0xff]
        %v361 = vld [vmem:[%s2 + $0x10] sm:$0x3f]
        %v362 = vld [vmem:[%s3] sm:$0x1]
        %v363 = vld [vmem:[%s4] sm:$0xf]
        %v364 = vld [vmem:[%s4 + $0x4] sm:$0xf]
        %v365 = vld [vmem:[%s4 + $0x8] sm:$0xf]
        %v366 = vld [vmem:[%s4 + $0xc] sm:$0xf]
        %v367 = vld [vmem:[%s5] sm:$0x1]
        %v368 = vld [vmem:[%s6] sm:$0xf]
        %v369 = vld [vmem:[%s6 + $0x4] sm:$0xf]
        %v370 = vld [vmem:[%s6 + $0x8] sm:$0xf]
        %v371 = vld [vmem:[%s6 + $0xc] sm:$0xf]
        %v372 = vld [vmem:[%s7] sm:$0x1]
        %v373 = vld [vmem:[%s323] sm:$0x3]
        %vm374 = vcmask 179200
        %v376 = vsel %vm374, %v327, 0
        %v379 = vsel %vm374, %v328, 0
        %v382 = vsel %vm374, %v329, 0
        %v385 = vsel %vm374, %v330, 0
        %v388 = vsel %vm374, %v331, 0
        %v391 = vsel %vm374, %v332, 0
        %v394 = vsel %vm374, %v333, 0
        %v397 = vsel %vm374, %v334, 0
        %v400 = vsel %vm374, %v335, 0
        %v403 = vsel %vm374, %v336, 0
        %v406 = vsel %vm374, %v337, 0
        %v409 = vsel %vm374, %v338, 0
        %v412 = vsel %vm374, %v339, 0
        %v415 = vsel %vm374, %v340, 0
        %v418 = vsel %vm374, %v341, 0
        %v421 = vsel %vm374, %v342, 0
        %v424 = vsel %vm374, %v343, 0
        %v427 = vsel %vm374, %v344, 0
        %v430 = vsel %vm374, %v345, 0
        %v433 = vsel %vm374, %v346, 0
        %v436 = vsel %vm374, %v347, 0
        %v439 = vsel %vm374, %v348, 0
        %v442 = vsel %vm374, %v349, 0
        %v445 = vsel %vm374, %v350, 0
        %v448 = vsel %vm374, %v351, 0
        %v451 = vsel %vm374, %v352, 0
        %v454 = vsel %vm374, %v353, 0
        %v457 = vsel %vm374, %v354, 0
        %v460 = vsel %vm374, %v355, 0
        %v463 = vsel %vm374, %v356, 0
        %v466 = vsel %vm374, %v357, 0
        %v469 = vsel %vm374, %v358, 0
        %vm471 = vcmask 1045504
        %v473 = vsel %vm471, %v361, 0
        %475 = vmatpush.msra.mxu0 0.0
        %476 = vmatpush.msra.mxu0 0.0
        %477 = vmatpush.msra.mxu0 0.0
        %478 = vmatpush.msra.mxu0 0.0
        %479 = vmatpush.msra.mxu0 0.0
        %480 = vmatpush.msra.mxu0 0.0
        %481 = vmatpush.msra.mxu0 0.0
        %482 = vmatpush.msra.mxu0 0.0
        %483 = vmatpush.msra.mxu0 0.0
        %484 = vmatpush.msra.mxu0 0.0
        %485 = vmatpush.msra.mxu0 0.0
        %486 = vmatpush.msra.mxu0 0.0
        %487 = vmatpush.msra.mxu0 0.0
        %488 = vmatpush.msra.mxu0 %v473
        %489 = vmatpush.msra.mxu0 %v360
        %490 = vmatpush.msra.mxu0 %v359
        %491 = vmatmul.f32.gmra.mxu0 %v376
        %v492 = vpop.f32.mrf.mxu0
        %v493 = vadd.f32 0.0, %v492
        %494 = vmatmul.f32.gmra.mxu0 %v379
        %v495 = vpop.f32.mrf.mxu0
        %v496 = vadd.f32 0.0, %v495
        %497 = vmatmul.f32.gmra.mxu0 %v382
        %v498 = vpop.f32.mrf.mxu0
        %v499 = vadd.f32 0.0, %v498
        %500 = vmatmul.f32.gmra.mxu0 %v385
        %v501 = vpop.f32.mrf.mxu0
        %v502 = vadd.f32 0.0, %v501
        %503 = vmatmul.f32.gmra.mxu0 %v388
        %v504 = vpop.f32.mrf.mxu0
        %v505 = vadd.f32 0.0, %v504
        %506 = vmatmul.f32.gmra.mxu0 %v391
        %v507 = vpop.f32.mrf.mxu0
        %v508 = vadd.f32 0.0, %v507
        %509 = vmatmul.f32.gmra.mxu0 %v394
        %v510 = vpop.f32.mrf.mxu0
        %v511 = vadd.f32 0.0, %v510
        %512 = vmatmul.f32.gmra.mxu0 %v397
        %v513 = vpop.f32.mrf.mxu0
        %v514 = vadd.f32 0.0, %v513
        %515 = vmatmul.f32.gmra.mxu0 %v400
        %v516 = vpop.f32.mrf.mxu0
        %v517 = vadd.f32 0.0, %v516
        %518 = vmatmul.f32.gmra.mxu0 %v403
        %v519 = vpop.f32.mrf.mxu0
        %v520 = vadd.f32 0.0, %v519
        %521 = vmatmul.f32.gmra.mxu0 %v406
        %v522 = vpop.f32.mrf.mxu0
        %v523 = vadd.f32 0.0, %v522
        %524 = vmatmul.f32.gmra.mxu0 %v409
        %v525 = vpop.f32.mrf.mxu0
        %v526 = vadd.f32 0.0, %v525
        %527 = vmatmul.f32.gmra.mxu0 %v412
        %v528 = vpop.f32.mrf.mxu0
        %v529 = vadd.f32 0.0, %v528
        %530 = vmatmul.f32.gmra.mxu0 %v415
        %v531 = vpop.f32.mrf.mxu0
        %v532 = vadd.f32 0.0, %v531
        %533 = vmatmul.f32.gmra.mxu0 %v418
        %v534 = vpop.f32.mrf.mxu0
        %v535 = vadd.f32 0.0, %v534
        %536 = vmatmul.f32.gmra.mxu0 %v421
        %v537 = vpop.f32.mrf.mxu0
        %v538 = vadd.f32 0.0, %v537
        %539 = vmatmul.f32.gmra.mxu0 %v424
        %v540 = vpop.f32.mrf.mxu0
        %v541 = vadd.f32 0.0, %v540
        %542 = vmatmul.f32.gmra.mxu0 %v427
        %v543 = vpop.f32.mrf.mxu0
        %v544 = vadd.f32 0.0, %v543
        %545 = vmatmul.f32.gmra.mxu0 %v430
        %v546 = vpop.f32.mrf.mxu0
        %v547 = vadd.f32 0.0, %v546
        %548 = vmatmul.f32.gmra.mxu0 %v433
        %v549 = vpop.f32.mrf.mxu0
        %v550 = vadd.f32 0.0, %v549
        %551 = vmatmul.f32.gmra.mxu0 %v436
        %v552 = vpop.f32.mrf.mxu0
        %v553 = vadd.f32 0.0, %v552
        %554 = vmatmul.f32.gmra.mxu0 %v439
        %v555 = vpop.f32.mrf.mxu0
        %v556 = vadd.f32 0.0, %v555
        %557 = vmatmul.f32.gmra.mxu0 %v442
        %v558 = vpop.f32.mrf.mxu0
        %v559 = vadd.f32 0.0, %v558
        %560 = vmatmul.f32.gmra.mxu0 %v445
        %v561 = vpop.f32.mrf.mxu0
        %v562 = vadd.f32 0.0, %v561
        %563 = vmatmul.f32.gmra.mxu0 %v448
        %v564 = vpop.f32.mrf.mxu0
        %v565 = vadd.f32 0.0, %v564
        %566 = vmatmul.f32.gmra.mxu0 %v451
        %v567 = vpop.f32.mrf.mxu0
        %v568 = vadd.f32 0.0, %v567
        %569 = vmatmul.f32.gmra.mxu0 %v454
        %v570 = vpop.f32.mrf.mxu0
        %v571 = vadd.f32 0.0, %v570
        %572 = vmatmul.f32.gmra.mxu0 %v457
        %v573 = vpop.f32.mrf.mxu0
        %v574 = vadd.f32 0.0, %v573
        %575 = vmatmul.f32.gmra.mxu0 %v460
        %v576 = vpop.f32.mrf.mxu0
        %v577 = vadd.f32 0.0, %v576
        %578 = vmatmul.f32.gmra.mxu0 %v463
        %v579 = vpop.f32.mrf.mxu0
        %v580 = vadd.f32 0.0, %v579
        %581 = vmatmul.f32.gmra.mxu0 %v466
        %v582 = vpop.f32.mrf.mxu0
        %v583 = vadd.f32 0.0, %v582
        %584 = vmatmul.f32.gmra.mxu0 %v469
        %v585 = vpop.f32.mrf.mxu0
        %v586 = vadd.f32 0.0, %v585
        %587 = vdwg.mxu0
        %v589 = vperm.slane %v362, 0
        %v591 = vadd.f32 %v493, %v589
        %v592 = vadd.f32 %v496, %v589
        %v593 = vadd.f32 %v499, %v589
        %v594 = vadd.f32 %v502, %v589
        %v595 = vadd.f32 %v505, %v589
        %v596 = vadd.f32 %v508, %v589
        %v597 = vadd.f32 %v511, %v589
        %v598 = vadd.f32 %v514, %v589
        %v599 = vadd.f32 %v517, %v589
        %v600 = vadd.f32 %v520, %v589
        %v601 = vadd.f32 %v523, %v589
        %v602 = vadd.f32 %v526, %v589
        %v603 = vadd.f32 %v529, %v589
        %v604 = vadd.f32 %v532, %v589
        %v605 = vadd.f32 %v535, %v589
        %v606 = vadd.f32 %v538, %v589
        %v607 = vadd.f32 %v541, %v589
        %v608 = vadd.f32 %v544, %v589
        %v609 = vadd.f32 %v547, %v589
        %v610 = vadd.f32 %v550, %v589
        %v611 = vadd.f32 %v553, %v589
        %v612 = vadd.f32 %v556, %v589
        %v613 = vadd.f32 %v559, %v589
        %v614 = vadd.f32 %v562, %v589
        %v615 = vadd.f32 %v565, %v589
        %v616 = vadd.f32 %v568, %v589
        %v617 = vadd.f32 %v571, %v589
        %v618 = vadd.f32 %v574, %v589
        %v619 = vadd.f32 %v577, %v589
        %v620 = vadd.f32 %v580, %v589
        %v621 = vadd.f32 %v583, %v589
        %v622 = vadd.f32 %v586, %v589
        %v623 = vmul.f32 %v493, 0.0
        %v624 = vmul.f32 %v496, 0.0
        %v625 = vmul.f32 %v499, 0.0
        %v626 = vmul.f32 %v502, 0.0
        %v627 = vmul.f32 %v505, 0.0
        %v628 = vmul.f32 %v508, 0.0
        %v629 = vmul.f32 %v511, 0.0
        %v630 = vmul.f32 %v514, 0.0
        %v631 = vmul.f32 %v517, 0.0
        %v632 = vmul.f32 %v520, 0.0
        %v633 = vmul.f32 %v523, 0.0
        %v634 = vmul.f32 %v526, 0.0
        %v635 = vmul.f32 %v529, 0.0
        %v636 = vmul.f32 %v532, 0.0
        %v637 = vmul.f32 %v535, 0.0
        %v638 = vmul.f32 %v538, 0.0
        %v639 = vmul.f32 %v541, 0.0
        %v640 = vmul.f32 %v544, 0.0
        %v641 = vmul.f32 %v547, 0.0
        %v642 = vmul.f32 %v550, 0.0
        %v643 = vmul.f32 %v553, 0.0
        %v644 = vmul.f32 %v556, 0.0
        %v645 = vmul.f32 %v559, 0.0
        %v646 = vmul.f32 %v562, 0.0
        %v647 = vmul.f32 %v565, 0.0
        %v648 = vmul.f32 %v568, 0.0
        %v649 = vmul.f32 %v571, 0.0
        %v650 = vmul.f32 %v574, 0.0
        %v651 = vmul.f32 %v577, 0.0
        %v652 = vmul.f32 %v580, 0.0
        %v653 = vmul.f32 %v583, 0.0
        %v654 = vmul.f32 %v586, 0.0
        %687 = vrot.lane.b32.xlu0 %v623, 96
        %v688 = vpop.permute.xlu0 %687
        %689 = vrot.lane.b32.xlu0 %v624, 96
        %v690 = vpop.permute.xlu0 %689
        %691 = vrot.lane.b32.xlu0 %v625, 96
        %v692 = vpop.permute.xlu0 %691
        %693 = vrot.lane.b32.xlu0 %v626, 96
        %v694 = vpop.permute.xlu0 %693
        %695 = vrot.lane.b32.xlu0 %v627, 96
        %v696 = vpop.permute.xlu0 %695
        %697 = vrot.lane.b32.xlu0 %v628, 96
        %v698 = vpop.permute.xlu0 %697
        %699 = vrot.lane.b32.xlu0 %v629, 96
        %v700 = vpop.permute.xlu0 %699
        %701 = vrot.lane.b32.xlu0 %v630, 96
        %v702 = vpop.permute.xlu0 %701
        %703 = vrot.lane.b32.xlu0 %v631, 96
        %v704 = vpop.permute.xlu0 %703
        %705 = vrot.lane.b32.xlu0 %v632, 96
        %v706 = vpop.permute.xlu0 %705
        %707 = vrot.lane.b32.xlu0 %v633, 96
        %v708 = vpop.permute.xlu0 %707
        %709 = vrot.lane.b32.xlu0 %v634, 96
        %v710 = vpop.permute.xlu0 %709
        %711 = vrot.lane.b32.xlu0 %v635, 96
        %v712 = vpop.permute.xlu0 %711
        %713 = vrot.lane.b32.xlu0 %v636, 96
        %v714 = vpop.permute.xlu0 %713
        %715 = vrot.lane.b32.xlu0 %v637, 96
        %v716 = vpop.permute.xlu0 %715
        %717 = vrot.lane.b32.xlu0 %v638, 96
        %v718 = vpop.permute.xlu0 %717
        %719 = vrot.lane.b32.xlu0 %v639, 96
        %v720 = vpop.permute.xlu0 %719
        %721 = vrot.lane.b32.xlu0 %v640, 96
        %v722 = vpop.permute.xlu0 %721
        %723 = vrot.lane.b32.xlu0 %v641, 96
        %v724 = vpop.permute.xlu0 %723
        %725 = vrot.lane.b32.xlu0 %v642, 96
        %v726 = vpop.permute.xlu0 %725
        %727 = vrot.lane.b32.xlu0 %v643, 96
        %v728 = vpop.permute.xlu0 %727
        %729 = vrot.lane.b32.xlu0 %v644, 96
        %v730 = vpop.permute.xlu0 %729
        %731 = vrot.lane.b32.xlu0 %v645, 96
        %v732 = vpop.permute.xlu0 %731
        %733 = vrot.lane.b32.xlu0 %v646, 96
        %v734 = vpop.permute.xlu0 %733
        %735 = vrot.lane.b32.xlu0 %v647, 96
        %v736 = vpop.permute.xlu0 %735
        %737 = vrot.lane.b32.xlu0 %v648, 96
        %v738 = vpop.permute.xlu0 %737
        %739 = vrot.lane.b32.xlu0 %v649, 96
        %v740 = vpop.permute.xlu0 %739
        %741 = vrot.lane.b32.xlu0 %v650, 96
        %v742 = vpop.permute.xlu0 %741
        %743 = vrot.lane.b32.xlu0 %v651, 96
        %v744 = vpop.permute.xlu0 %743
        %745 = vrot.lane.b32.xlu0 %v652, 96
        %v746 = vpop.permute.xlu0 %745
        %747 = vrot.lane.b32.xlu0 %v653, 96
        %v748 = vpop.permute.xlu0 %747
        %749 = vrot.lane.b32.xlu0 %v654, 96
        %v750 = vpop.permute.xlu0 %749
        %v783 = vadd.f32 %v591, %v688
        %v784 = vadd.f32 %v592, %v690
        %v785 = vadd.f32 %v593, %v692
        %v786 = vadd.f32 %v594, %v694
        %v787 = vadd.f32 %v595, %v696
        %v788 = vadd.f32 %v596, %v698
        %v789 = vadd.f32 %v597, %v700
        %v790 = vadd.f32 %v598, %v702
        %v791 = vadd.f32 %v599, %v704
        %v792 = vadd.f32 %v600, %v706
        %v793 = vadd.f32 %v601, %v708
        %v794 = vadd.f32 %v602, %v710
        %v795 = vadd.f32 %v603, %v712
        %v796 = vadd.f32 %v604, %v714
        %v797 = vadd.f32 %v605, %v716
        %v798 = vadd.f32 %v606, %v718
        %v799 = vadd.f32 %v607, %v720
        %v800 = vadd.f32 %v608, %v722
        %v801 = vadd.f32 %v609, %v724
        %v802 = vadd.f32 %v610, %v726
        %v803 = vadd.f32 %v611, %v728
        %v804 = vadd.f32 %v612, %v730
        %v805 = vadd.f32 %v613, %v732
        %v806 = vadd.f32 %v614, %v734
        %v807 = vadd.f32 %v615, %v736
        %v808 = vadd.f32 %v616, %v738
        %v809 = vadd.f32 %v617, %v740
        %v810 = vadd.f32 %v618, %v742
        %v811 = vadd.f32 %v619, %v744
        %v812 = vadd.f32 %v620, %v746
        %v813 = vadd.f32 %v621, %v748
        %v814 = vadd.f32 %v622, %v750
        %v815 = vmax.f32 %v783, 0.0
        %v816 = vmax.f32 %v784, 0.0
        %v817 = vmax.f32 %v785, 0.0
        %v818 = vmax.f32 %v786, 0.0
        %v819 = vmax.f32 %v787, 0.0
        %v820 = vmax.f32 %v788, 0.0
        %v821 = vmax.f32 %v789, 0.0
        %v822 = vmax.f32 %v790, 0.0
        %v823 = vmax.f32 %v791, 0.0
        %v824 = vmax.f32 %v792, 0.0
        %v825 = vmax.f32 %v793, 0.0
        %v826 = vmax.f32 %v794, 0.0
        %v827 = vmax.f32 %v795, 0.0
        %v828 = vmax.f32 %v796, 0.0
        %v829 = vmax.f32 %v797, 0.0
        %v830 = vmax.f32 %v798, 0.0
        %v831 = vmax.f32 %v799, 0.0
        %v832 = vmax.f32 %v800, 0.0
        %v833 = vmax.f32 %v801, 0.0
        %v834 = vmax.f32 %v802, 0.0
        %v835 = vmax.f32 %v803, 0.0
        %v836 = vmax.f32 %v804, 0.0
        %v837 = vmax.f32 %v805, 0.0
        %v838 = vmax.f32 %v806, 0.0
        %v839 = vmax.f32 %v807, 0.0
        %v840 = vmax.f32 %v808, 0.0
        %v841 = vmax.f32 %v809, 0.0
        %v842 = vmax.f32 %v810, 0.0
        %v843 = vmax.f32 %v811, 0.0
        %v844 = vmax.f32 %v812, 0.0
        %v845 = vmax.f32 %v813, 0.0
        %v846 = vmax.f32 %v814, 0.0
        %v847 = vpack.c.bf16 %v815, %v815
        %v848 = vpack.c.bf16 %v816, %v816
        %v849 = vpack.c.bf16 %v817, %v817
        %v850 = vpack.c.bf16 %v818, %v818
        %v851 = vpack.c.bf16 %v819, %v819
        %v852 = vpack.c.bf16 %v820, %v820
        %v853 = vpack.c.bf16 %v821, %v821
        %v854 = vpack.c.bf16 %v822, %v822
        %v855 = vpack.c.bf16 %v823, %v823
        %v856 = vpack.c.bf16 %v824, %v824
        %v857 = vpack.c.bf16 %v825, %v825
        %v858 = vpack.c.bf16 %v826, %v826
        %v859 = vpack.c.bf16 %v827, %v827
        %v860 = vpack.c.bf16 %v828, %v828
        %v861 = vpack.c.bf16 %v829, %v829
        %v862 = vpack.c.bf16 %v830, %v830
        %v863 = vpack.c.bf16 %v831, %v831
        %v864 = vpack.c.bf16 %v832, %v832
        %v865 = vpack.c.bf16 %v833, %v833
        %v866 = vpack.c.bf16 %v834, %v834
        %v867 = vpack.c.bf16 %v835, %v835
        %v868 = vpack.c.bf16 %v836, %v836
        %v869 = vpack.c.bf16 %v837, %v837
        %v870 = vpack.c.bf16 %v838, %v838
        %v871 = vpack.c.bf16 %v839, %v839
        %v872 = vpack.c.bf16 %v840, %v840
        %v873 = vpack.c.bf16 %v841, %v841
        %v874 = vpack.c.bf16 %v842, %v842
        %v875 = vpack.c.bf16 %v843, %v843
        %v876 = vpack.c.bf16 %v844, %v844
        %v877 = vpack.c.bf16 %v845, %v845
        %v878 = vpack.c.bf16 %v846, %v846
        %v879 = vmul.f32 %v493, 0.14285715
        %v880 = vmul.f32 %v496, 0.14285715
        %v881 = vmul.f32 %v499, 0.14285715
        %v882 = vmul.f32 %v502, 0.14285715
        %v883 = vmul.f32 %v505, 0.14285715
        %v884 = vmul.f32 %v508, 0.14285715
        %v885 = vmul.f32 %v511, 0.14285715
        %v886 = vmul.f32 %v514, 0.14285715
        %v887 = vmul.f32 %v517, 0.14285715
        %v888 = vmul.f32 %v520, 0.14285715
        %v889 = vmul.f32 %v523, 0.14285715
        %v890 = vmul.f32 %v526, 0.14285715
        %v891 = vmul.f32 %v529, 0.14285715
        %v892 = vmul.f32 %v532, 0.14285715
        %v893 = vmul.f32 %v535, 0.14285715
        %v894 = vmul.f32 %v538, 0.14285715
        %v895 = vmul.f32 %v541, 0.14285715
        %v896 = vmul.f32 %v544, 0.14285715
        %v897 = vmul.f32 %v547, 0.14285715
        %v898 = vmul.f32 %v550, 0.14285715
        %v899 = vmul.f32 %v553, 0.14285715
        %v900 = vmul.f32 %v556, 0.14285715
        %v901 = vmul.f32 %v559, 0.14285715
        %v902 = vmul.f32 %v562, 0.14285715
        %v903 = vmul.f32 %v565, 0.14285715
        %v904 = vmul.f32 %v568, 0.14285715
        %v905 = vmul.f32 %v571, 0.14285715
        %v906 = vmul.f32 %v574, 0.14285715
        %v907 = vmul.f32 %v577, 0.14285715
        %v908 = vmul.f32 %v580, 0.14285715
        %v909 = vmul.f32 %v583, 0.14285715
        %v910 = vmul.f32 %v586, 0.14285715
        %943 = vrot.lane.b32.xlu0 %v879, 96
        %v944 = vpop.permute.xlu0 %943
        %945 = vrot.lane.b32.xlu0 %v880, 96
        %v946 = vpop.permute.xlu0 %945
        %947 = vrot.lane.b32.xlu0 %v881, 96
        %v948 = vpop.permute.xlu0 %947
        %949 = vrot.lane.b32.xlu0 %v882, 96
        %v950 = vpop.permute.xlu0 %949
        %951 = vrot.lane.b32.xlu0 %v883, 96
        %v952 = vpop.permute.xlu0 %951
        %953 = vrot.lane.b32.xlu0 %v884, 96
        %v954 = vpop.permute.xlu0 %953
        %955 = vrot.lane.b32.xlu0 %v885, 96
        %v956 = vpop.permute.xlu0 %955
        %957 = vrot.lane.b32.xlu0 %v886, 96
        %v958 = vpop.permute.xlu0 %957
        %959 = vrot.lane.b32.xlu0 %v887, 96
        %v960 = vpop.permute.xlu0 %959
        %961 = vrot.lane.b32.xlu0 %v888, 96
        %v962 = vpop.permute.xlu0 %961
        %963 = vrot.lane.b32.xlu0 %v889, 96
        %v964 = vpop.permute.xlu0 %963
        %965 = vrot.lane.b32.xlu0 %v890, 96
        %v966 = vpop.permute.xlu0 %965
        %967 = vrot.lane.b32.xlu0 %v891, 96
        %v968 = vpop.permute.xlu0 %967
        %969 = vrot.lane.b32.xlu0 %v892, 96
        %v970 = vpop.permute.xlu0 %969
        %971 = vrot.lane.b32.xlu0 %v893, 96
        %v972 = vpop.permute.xlu0 %971
        %973 = vrot.lane.b32.xlu0 %v894, 96
        %v974 = vpop.permute.xlu0 %973
        %975 = vrot.lane.b32.xlu0 %v895, 96
        %v976 = vpop.permute.xlu0 %975
        %977 = vrot.lane.b32.xlu0 %v896, 96
        %v978 = vpop.permute.xlu0 %977
        %979 = vrot.lane.b32.xlu0 %v897, 96
        %v980 = vpop.permute.xlu0 %979
        %981 = vrot.lane.b32.xlu0 %v898, 96
        %v982 = vpop.permute.xlu0 %981
        %983 = vrot.lane.b32.xlu0 %v899, 96
        %v984 = vpop.permute.xlu0 %983
        %985 = vrot.lane.b32.xlu0 %v900, 96
        %v986 = vpop.permute.xlu0 %985
        %987 = vrot.lane.b32.xlu0 %v901, 96
        %v988 = vpop.permute.xlu0 %987
        %989 = vrot.lane.b32.xlu0 %v902, 96
        %v990 = vpop.permute.xlu0 %989
        %991 = vrot.lane.b32.xlu0 %v903, 96
        %v992 = vpop.permute.xlu0 %991
        %993 = vrot.lane.b32.xlu0 %v904, 96
        %v994 = vpop.permute.xlu0 %993
        %995 = vrot.lane.b32.xlu0 %v905, 96
        %v996 = vpop.permute.xlu0 %995
        %997 = vrot.lane.b32.xlu0 %v906, 96
        %v998 = vpop.permute.xlu0 %997
        %999 = vrot.lane.b32.xlu0 %v907, 96
        %v1000 = vpop.permute.xlu0 %999
        %1001 = vrot.lane.b32.xlu0 %v908, 96
        %v1002 = vpop.permute.xlu0 %1001
        %1003 = vrot.lane.b32.xlu0 %v909, 96
        %v1004 = vpop.permute.xlu0 %1003
        %1005 = vrot.lane.b32.xlu0 %v910, 96
        %v1006 = vpop.permute.xlu0 %1005
        %v1039 = vadd.f32 %v591, %v944
        %v1040 = vadd.f32 %v592, %v946
        %v1041 = vadd.f32 %v593, %v948
        %v1042 = vadd.f32 %v594, %v950
        %v1043 = vadd.f32 %v595, %v952
        %v1044 = vadd.f32 %v596, %v954
        %v1045 = vadd.f32 %v597, %v956
        %v1046 = vadd.f32 %v598, %v958
        %v1047 = vadd.f32 %v599, %v960
        %v1048 = vadd.f32 %v600, %v962
        %v1049 = vadd.f32 %v601, %v964
        %v1050 = vadd.f32 %v602, %v966
        %v1051 = vadd.f32 %v603, %v968
        %v1052 = vadd.f32 %v604, %v970
        %v1053 = vadd.f32 %v605, %v972
        %v1054 = vadd.f32 %v606, %v974
        %v1055 = vadd.f32 %v607, %v976
        %v1056 = vadd.f32 %v608, %v978
        %v1057 = vadd.f32 %v609, %v980
        %v1058 = vadd.f32 %v610, %v982
        %v1059 = vadd.f32 %v611, %v984
        %v1060 = vadd.f32 %v612, %v986
        %v1061 = vadd.f32 %v613, %v988
        %v1062 = vadd.f32 %v614, %v990
        %v1063 = vadd.f32 %v615, %v992
        %v1064 = vadd.f32 %v616, %v994
        %v1065 = vadd.f32 %v617, %v996
        %v1066 = vadd.f32 %v618, %v998
        %v1067 = vadd.f32 %v619, %v1000
        %v1068 = vadd.f32 %v620, %v1002
        %v1069 = vadd.f32 %v621, %v1004
        %v1070 = vadd.f32 %v622, %v1006
        %v1071 = vmax.f32 %v1039, 0.0
        %v1072 = vmax.f32 %v1040, 0.0
        %v1073 = vmax.f32 %v1041, 0.0
        %v1074 = vmax.f32 %v1042, 0.0
        %v1075 = vmax.f32 %v1043, 0.0
        %v1076 = vmax.f32 %v1044, 0.0
        %v1077 = vmax.f32 %v1045, 0.0
        %v1078 = vmax.f32 %v1046, 0.0
        %v1079 = vmax.f32 %v1047, 0.0
        %v1080 = vmax.f32 %v1048, 0.0
        %v1081 = vmax.f32 %v1049, 0.0
        %v1082 = vmax.f32 %v1050, 0.0
        %v1083 = vmax.f32 %v1051, 0.0
        %v1084 = vmax.f32 %v1052, 0.0
        %v1085 = vmax.f32 %v1053, 0.0
        %v1086 = vmax.f32 %v1054, 0.0
        %v1087 = vmax.f32 %v1055, 0.0
        %v1088 = vmax.f32 %v1056, 0.0
        %v1089 = vmax.f32 %v1057, 0.0
        %v1090 = vmax.f32 %v1058, 0.0
        %v1091 = vmax.f32 %v1059, 0.0
        %v1092 = vmax.f32 %v1060, 0.0
        %v1093 = vmax.f32 %v1061, 0.0
        %v1094 = vmax.f32 %v1062, 0.0
        %v1095 = vmax.f32 %v1063, 0.0
        %v1096 = vmax.f32 %v1064, 0.0
        %v1097 = vmax.f32 %v1065, 0.0
        %v1098 = vmax.f32 %v1066, 0.0
        %v1099 = vmax.f32 %v1067, 0.0
        %v1100 = vmax.f32 %v1068, 0.0
        %v1101 = vmax.f32 %v1069, 0.0
        %v1102 = vmax.f32 %v1070, 0.0
        %v1103 = vpack.c.bf16 %v1071, %v1071
        %v1104 = vpack.c.bf16 %v1072, %v1072
        %v1105 = vpack.c.bf16 %v1073, %v1073
        %v1106 = vpack.c.bf16 %v1074, %v1074
        %v1107 = vpack.c.bf16 %v1075, %v1075
        %v1108 = vpack.c.bf16 %v1076, %v1076
        %v1109 = vpack.c.bf16 %v1077, %v1077
        %v1110 = vpack.c.bf16 %v1078, %v1078
        %v1111 = vpack.c.bf16 %v1079, %v1079
        %v1112 = vpack.c.bf16 %v1080, %v1080
        %v1113 = vpack.c.bf16 %v1081, %v1081
        %v1114 = vpack.c.bf16 %v1082, %v1082
        %v1115 = vpack.c.bf16 %v1083, %v1083
        %v1116 = vpack.c.bf16 %v1084, %v1084
        %v1117 = vpack.c.bf16 %v1085, %v1085
        %v1118 = vpack.c.bf16 %v1086, %v1086
        %v1119 = vpack.c.bf16 %v1087, %v1087
        %v1120 = vpack.c.bf16 %v1088, %v1088
        %v1121 = vpack.c.bf16 %v1089, %v1089
        %v1122 = vpack.c.bf16 %v1090, %v1090
        %v1123 = vpack.c.bf16 %v1091, %v1091
        %v1124 = vpack.c.bf16 %v1092, %v1092
        %v1125 = vpack.c.bf16 %v1093, %v1093
        %v1126 = vpack.c.bf16 %v1094, %v1094
        %v1127 = vpack.c.bf16 %v1095, %v1095
        %v1128 = vpack.c.bf16 %v1096, %v1096
        %v1129 = vpack.c.bf16 %v1097, %v1097
        %v1130 = vpack.c.bf16 %v1098, %v1098
        %v1131 = vpack.c.bf16 %v1099, %v1099
        %v1132 = vpack.c.bf16 %v1100, %v1100
        %v1133 = vpack.c.bf16 %v1101, %v1101
        %v1134 = vpack.c.bf16 %v1102, %v1102
        %v1135 = vmul.f32 %v493, 0.2857143
        %v1136 = vmul.f32 %v496, 0.2857143
        %v1137 = vmul.f32 %v499, 0.2857143
        %v1138 = vmul.f32 %v502, 0.2857143
        %v1139 = vmul.f32 %v505, 0.2857143
        %v1140 = vmul.f32 %v508, 0.2857143
        %v1141 = vmul.f32 %v511, 0.2857143
        %v1142 = vmul.f32 %v514, 0.2857143
        %v1143 = vmul.f32 %v517, 0.2857143
        %v1144 = vmul.f32 %v520, 0.2857143
        %v1145 = vmul.f32 %v523, 0.2857143
        %v1146 = vmul.f32 %v526, 0.2857143
        %v1147 = vmul.f32 %v529, 0.2857143
        %v1148 = vmul.f32 %v532, 0.2857143
        %v1149 = vmul.f32 %v535, 0.2857143
        %v1150 = vmul.f32 %v538, 0.2857143
        %v1151 = vmul.f32 %v541, 0.2857143
        %v1152 = vmul.f32 %v544, 0.2857143
        %v1153 = vmul.f32 %v547, 0.2857143
        %v1154 = vmul.f32 %v550, 0.2857143
        %v1155 = vmul.f32 %v553, 0.2857143
        %v1156 = vmul.f32 %v556, 0.2857143
        %v1157 = vmul.f32 %v559, 0.2857143
        %v1158 = vmul.f32 %v562, 0.2857143
        %v1159 = vmul.f32 %v565, 0.2857143
        %v1160 = vmul.f32 %v568, 0.2857143
        %v1161 = vmul.f32 %v571, 0.2857143
        %v1162 = vmul.f32 %v574, 0.2857143
        %v1163 = vmul.f32 %v577, 0.2857143
        %v1164 = vmul.f32 %v580, 0.2857143
        %v1165 = vmul.f32 %v583, 0.2857143
        %v1166 = vmul.f32 %v586, 0.2857143
        %1199 = vrot.lane.b32.xlu0 %v1135, 96
        %v1200 = vpop.permute.xlu0 %1199
        %1201 = vrot.lane.b32.xlu0 %v1136, 96
        %v1202 = vpop.permute.xlu0 %1201
        %1203 = vrot.lane.b32.xlu0 %v1137, 96
        %v1204 = vpop.permute.xlu0 %1203
        %1205 = vrot.lane.b32.xlu0 %v1138, 96
        %v1206 = vpop.permute.xlu0 %1205
        %1207 = vrot.lane.b32.xlu0 %v1139, 96
        %v1208 = vpop.permute.xlu0 %1207
        %1209 = vrot.lane.b32.xlu0 %v1140, 96
        %v1210 = vpop.permute.xlu0 %1209
        %1211 = vrot.lane.b32.xlu0 %v1141, 96
        %v1212 = vpop.permute.xlu0 %1211
        %1213 = vrot.lane.b32.xlu0 %v1142, 96
        %v1214 = vpop.permute.xlu0 %1213
        %1215 = vrot.lane.b32.xlu0 %v1143, 96
        %v1216 = vpop.permute.xlu0 %1215
        %1217 = vrot.lane.b32.xlu0 %v1144, 96
        %v1218 = vpop.permute.xlu0 %1217
        %1219 = vrot.lane.b32.xlu0 %v1145, 96
        %v1220 = vpop.permute.xlu0 %1219
        %1221 = vrot.lane.b32.xlu0 %v1146, 96
        %v1222 = vpop.permute.xlu0 %1221
        %1223 = vrot.lane.b32.xlu0 %v1147, 96
        %v1224 = vpop.permute.xlu0 %1223
        %1225 = vrot.lane.b32.xlu0 %v1148, 96
        %v1226 = vpop.permute.xlu0 %1225
        %1227 = vrot.lane.b32.xlu0 %v1149, 96
        %v1228 = vpop.permute.xlu0 %1227
        %1229 = vrot.lane.b32.xlu0 %v1150, 96
        %v1230 = vpop.permute.xlu0 %1229
        %1231 = vrot.lane.b32.xlu0 %v1151, 96
        %v1232 = vpop.permute.xlu0 %1231
        %1233 = vrot.lane.b32.xlu0 %v1152, 96
        %v1234 = vpop.permute.xlu0 %1233
        %1235 = vrot.lane.b32.xlu0 %v1153, 96
        %v1236 = vpop.permute.xlu0 %1235
        %1237 = vrot.lane.b32.xlu0 %v1154, 96
        %v1238 = vpop.permute.xlu0 %1237
        %1239 = vrot.lane.b32.xlu0 %v1155, 96
        %v1240 = vpop.permute.xlu0 %1239
        %1241 = vrot.lane.b32.xlu0 %v1156, 96
        %v1242 = vpop.permute.xlu0 %1241
        %1243 = vrot.lane.b32.xlu0 %v1157, 96
        %v1244 = vpop.permute.xlu0 %1243
        %1245 = vrot.lane.b32.xlu0 %v1158, 96
        %v1246 = vpop.permute.xlu0 %1245
        %1247 = vrot.lane.b32.xlu0 %v1159, 96
        %v1248 = vpop.permute.xlu0 %1247
        %1249 = vrot.lane.b32.xlu0 %v1160, 96
        %v1250 = vpop.permute.xlu0 %1249
        %1251 = vrot.lane.b32.xlu0 %v1161, 96
        %v1252 = vpop.permute.xlu0 %1251
        %1253 = vrot.lane.b32.xlu0 %v1162, 96
        %v1254 = vpop.permute.xlu0 %1253
        %1255 = vrot.lane.b32.xlu0 %v1163, 96
        %v1256 = vpop.permute.xlu0 %1255
        %1257 = vrot.lane.b32.xlu0 %v1164, 96
        %v1258 = vpop.permute.xlu0 %1257
        %1259 = vrot.lane.b32.xlu0 %v1165, 96
        %v1260 = vpop.permute.xlu0 %1259
        %1261 = vrot.lane.b32.xlu0 %v1166, 96
        %v1262 = vpop.permute.xlu0 %1261
        %v1295 = vadd.f32 %v591, %v1200
        %v1296 = vadd.f32 %v592, %v1202
        %v1297 = vadd.f32 %v593, %v1204
        %v1298 = vadd.f32 %v594, %v1206
        %v1299 = vadd.f32 %v595, %v1208
        %v1300 = vadd.f32 %v596, %v1210
        %v1301 = vadd.f32 %v597, %v1212
        %v1302 = vadd.f32 %v598, %v1214
        %v1303 = vadd.f32 %v599, %v1216
        %v1304 = vadd.f32 %v600, %v1218
        %v1305 = vadd.f32 %v601, %v1220
        %v1306 = vadd.f32 %v602, %v1222
        %v1307 = vadd.f32 %v603, %v1224
        %v1308 = vadd.f32 %v604, %v1226
        %v1309 = vadd.f32 %v605, %v1228
        %v1310 = vadd.f32 %v606, %v1230
        %v1311 = vadd.f32 %v607, %v1232
        %v1312 = vadd.f32 %v608, %v1234
        %v1313 = vadd.f32 %v609, %v1236
        %v1314 = vadd.f32 %v610, %v1238
        %v1315 = vadd.f32 %v611, %v1240
        %v1316 = vadd.f32 %v612, %v1242
        %v1317 = vadd.f32 %v613, %v1244
        %v1318 = vadd.f32 %v614, %v1246
        %v1319 = vadd.f32 %v615, %v1248
        %v1320 = vadd.f32 %v616, %v1250
        %v1321 = vadd.f32 %v617, %v1252
        %v1322 = vadd.f32 %v618, %v1254
        %v1323 = vadd.f32 %v619, %v1256
        %v1324 = vadd.f32 %v620, %v1258
        %v1325 = vadd.f32 %v621, %v1260
        %v1326 = vadd.f32 %v622, %v1262
        %v1327 = vmax.f32 %v1295, 0.0
        %v1328 = vmax.f32 %v1296, 0.0
        %v1329 = vmax.f32 %v1297, 0.0
        %v1330 = vmax.f32 %v1298, 0.0
        %v1331 = vmax.f32 %v1299, 0.0
        %v1332 = vmax.f32 %v1300, 0.0
        %v1333 = vmax.f32 %v1301, 0.0
        %v1334 = vmax.f32 %v1302, 0.0
        %v1335 = vmax.f32 %v1303, 0.0
        %v1336 = vmax.f32 %v1304, 0.0
        %v1337 = vmax.f32 %v1305, 0.0
        %v1338 = vmax.f32 %v1306, 0.0
        %v1339 = vmax.f32 %v1307, 0.0
        %v1340 = vmax.f32 %v1308, 0.0
        %v1341 = vmax.f32 %v1309, 0.0
        %v1342 = vmax.f32 %v1310, 0.0
        %v1343 = vmax.f32 %v1311, 0.0
        %v1344 = vmax.f32 %v1312, 0.0
        %v1345 = vmax.f32 %v1313, 0.0
        %v1346 = vmax.f32 %v1314, 0.0
        %v1347 = vmax.f32 %v1315, 0.0
        %v1348 = vmax.f32 %v1316, 0.0
        %v1349 = vmax.f32 %v1317, 0.0
        %v1350 = vmax.f32 %v1318, 0.0
        %v1351 = vmax.f32 %v1319, 0.0
        %v1352 = vmax.f32 %v1320, 0.0
        %v1353 = vmax.f32 %v1321, 0.0
        %v1354 = vmax.f32 %v1322, 0.0
        %v1355 = vmax.f32 %v1323, 0.0
        %v1356 = vmax.f32 %v1324, 0.0
        %v1357 = vmax.f32 %v1325, 0.0
        %v1358 = vmax.f32 %v1326, 0.0
        %v1359 = vpack.c.bf16 %v1327, %v1327
        %v1360 = vpack.c.bf16 %v1328, %v1328
        %v1361 = vpack.c.bf16 %v1329, %v1329
        %v1362 = vpack.c.bf16 %v1330, %v1330
        %v1363 = vpack.c.bf16 %v1331, %v1331
        %v1364 = vpack.c.bf16 %v1332, %v1332
        %v1365 = vpack.c.bf16 %v1333, %v1333
        %v1366 = vpack.c.bf16 %v1334, %v1334
        %v1367 = vpack.c.bf16 %v1335, %v1335
        %v1368 = vpack.c.bf16 %v1336, %v1336
        %v1369 = vpack.c.bf16 %v1337, %v1337
        %v1370 = vpack.c.bf16 %v1338, %v1338
        %v1371 = vpack.c.bf16 %v1339, %v1339
        %v1372 = vpack.c.bf16 %v1340, %v1340
        %v1373 = vpack.c.bf16 %v1341, %v1341
        %v1374 = vpack.c.bf16 %v1342, %v1342
        %v1375 = vpack.c.bf16 %v1343, %v1343
        %v1376 = vpack.c.bf16 %v1344, %v1344
        %v1377 = vpack.c.bf16 %v1345, %v1345
        %v1378 = vpack.c.bf16 %v1346, %v1346
        %v1379 = vpack.c.bf16 %v1347, %v1347
        %v1380 = vpack.c.bf16 %v1348, %v1348
        %v1381 = vpack.c.bf16 %v1349, %v1349
        %v1382 = vpack.c.bf16 %v1350, %v1350
        %v1383 = vpack.c.bf16 %v1351, %v1351
        %v1384 = vpack.c.bf16 %v1352, %v1352
        %v1385 = vpack.c.bf16 %v1353, %v1353
        %v1386 = vpack.c.bf16 %v1354, %v1354
        %v1387 = vpack.c.bf16 %v1355, %v1355
        %v1388 = vpack.c.bf16 %v1356, %v1356
        %v1389 = vpack.c.bf16 %v1357, %v1357
        %v1390 = vpack.c.bf16 %v1358, %v1358
        %v1391 = vmul.f32 %v493, 0.42857143
        %v1392 = vmul.f32 %v496, 0.42857143
        %v1393 = vmul.f32 %v499, 0.42857143
        %v1394 = vmul.f32 %v502, 0.42857143
        %v1395 = vmul.f32 %v505, 0.42857143
        %v1396 = vmul.f32 %v508, 0.42857143
        %v1397 = vmul.f32 %v511, 0.42857143
        %v1398 = vmul.f32 %v514, 0.42857143
        %v1399 = vmul.f32 %v517, 0.42857143
        %v1400 = vmul.f32 %v520, 0.42857143
        %v1401 = vmul.f32 %v523, 0.42857143
        %v1402 = vmul.f32 %v526, 0.42857143
        %v1403 = vmul.f32 %v529, 0.42857143
        %v1404 = vmul.f32 %v532, 0.42857143
        %v1405 = vmul.f32 %v535, 0.42857143
        %v1406 = vmul.f32 %v538, 0.42857143
        %v1407 = vmul.f32 %v541, 0.42857143
        %v1408 = vmul.f32 %v544, 0.42857143
        %v1409 = vmul.f32 %v547, 0.42857143
        %v1410 = vmul.f32 %v550, 0.42857143
        %v1411 = vmul.f32 %v553, 0.42857143
        %v1412 = vmul.f32 %v556, 0.42857143
        %v1413 = vmul.f32 %v559, 0.42857143
        %v1414 = vmul.f32 %v562, 0.42857143
        %v1415 = vmul.f32 %v565, 0.42857143
        %v1416 = vmul.f32 %v568, 0.42857143
        %v1417 = vmul.f32 %v571, 0.42857143
        %v1418 = vmul.f32 %v574, 0.42857143
        %v1419 = vmul.f32 %v577, 0.42857143
        %v1420 = vmul.f32 %v580, 0.42857143
        %v1421 = vmul.f32 %v583, 0.42857143
        %v1422 = vmul.f32 %v586, 0.42857143
        %1455 = vrot.lane.b32.xlu0 %v1391, 96
        %v1456 = vpop.permute.xlu0 %1455
        %1457 = vrot.lane.b32.xlu0 %v1392, 96
        %v1458 = vpop.permute.xlu0 %1457
        %1459 = vrot.lane.b32.xlu0 %v1393, 96
        %v1460 = vpop.permute.xlu0 %1459
        %1461 = vrot.lane.b32.xlu0 %v1394, 96
        %v1462 = vpop.permute.xlu0 %1461
        %1463 = vrot.lane.b32.xlu0 %v1395, 96
        %v1464 = vpop.permute.xlu0 %1463
        %1465 = vrot.lane.b32.xlu0 %v1396, 96
        %v1466 = vpop.permute.xlu0 %1465
        %1467 = vrot.lane.b32.xlu0 %v1397, 96
        %v1468 = vpop.permute.xlu0 %1467
        %1469 = vrot.lane.b32.xlu0 %v1398, 96
        %v1470 = vpop.permute.xlu0 %1469
        %1471 = vrot.lane.b32.xlu0 %v1399, 96
        %v1472 = vpop.permute.xlu0 %1471
        %1473 = vrot.lane.b32.xlu0 %v1400, 96
        %v1474 = vpop.permute.xlu0 %1473
        %1475 = vrot.lane.b32.xlu0 %v1401, 96
        %v1476 = vpop.permute.xlu0 %1475
        %1477 = vrot.lane.b32.xlu0 %v1402, 96
        %v1478 = vpop.permute.xlu0 %1477
        %1479 = vrot.lane.b32.xlu0 %v1403, 96
        %v1480 = vpop.permute.xlu0 %1479
        %1481 = vrot.lane.b32.xlu0 %v1404, 96
        %v1482 = vpop.permute.xlu0 %1481
        %1483 = vrot.lane.b32.xlu0 %v1405, 96
        %v1484 = vpop.permute.xlu0 %1483
        %1485 = vrot.lane.b32.xlu0 %v1406, 96
        %v1486 = vpop.permute.xlu0 %1485
        %1487 = vrot.lane.b32.xlu0 %v1407, 96
        %v1488 = vpop.permute.xlu0 %1487
        %1489 = vrot.lane.b32.xlu0 %v1408, 96
        %v1490 = vpop.permute.xlu0 %1489
        %1491 = vrot.lane.b32.xlu0 %v1409, 96
        %v1492 = vpop.permute.xlu0 %1491
        %1493 = vrot.lane.b32.xlu0 %v1410, 96
        %v1494 = vpop.permute.xlu0 %1493
        %1495 = vrot.lane.b32.xlu0 %v1411, 96
        %v1496 = vpop.permute.xlu0 %1495
        %1497 = vrot.lane.b32.xlu0 %v1412, 96
        %v1498 = vpop.permute.xlu0 %1497
        %1499 = vrot.lane.b32.xlu0 %v1413, 96
        %v1500 = vpop.permute.xlu0 %1499
        %1501 = vrot.lane.b32.xlu0 %v1414, 96
        %v1502 = vpop.permute.xlu0 %1501
        %1503 = vrot.lane.b32.xlu0 %v1415, 96
        %v1504 = vpop.permute.xlu0 %1503
        %1505 = vrot.lane.b32.xlu0 %v1416, 96
        %v1506 = vpop.permute.xlu0 %1505
        %1507 = vrot.lane.b32.xlu0 %v1417, 96
        %v1508 = vpop.permute.xlu0 %1507
        %1509 = vrot.lane.b32.xlu0 %v1418, 96
        %v1510 = vpop.permute.xlu0 %1509
        %1511 = vrot.lane.b32.xlu0 %v1419, 96
        %v1512 = vpop.permute.xlu0 %1511
        %1513 = vrot.lane.b32.xlu0 %v1420, 96
        %v1514 = vpop.permute.xlu0 %1513
        %1515 = vrot.lane.b32.xlu0 %v1421, 96
        %v1516 = vpop.permute.xlu0 %1515
        %1517 = vrot.lane.b32.xlu0 %v1422, 96
        %v1518 = vpop.permute.xlu0 %1517
        %v1551 = vadd.f32 %v591, %v1456
        %v1552 = vadd.f32 %v592, %v1458
        %v1553 = vadd.f32 %v593, %v1460
        %v1554 = vadd.f32 %v594, %v1462
        %v1555 = vadd.f32 %v595, %v1464
        %v1556 = vadd.f32 %v596, %v1466
        %v1557 = vadd.f32 %v597, %v1468
        %v1558 = vadd.f32 %v598, %v1470
        %v1559 = vadd.f32 %v599, %v1472
        %v1560 = vadd.f32 %v600, %v1474
        %v1561 = vadd.f32 %v601, %v1476
        %v1562 = vadd.f32 %v602, %v1478
        %v1563 = vadd.f32 %v603, %v1480
        %v1564 = vadd.f32 %v604, %v1482
        %v1565 = vadd.f32 %v605, %v1484
        %v1566 = vadd.f32 %v606, %v1486
        %v1567 = vadd.f32 %v607, %v1488
        %v1568 = vadd.f32 %v608, %v1490
        %v1569 = vadd.f32 %v609, %v1492
        %v1570 = vadd.f32 %v610, %v1494
        %v1571 = vadd.f32 %v611, %v1496
        %v1572 = vadd.f32 %v612, %v1498
        %v1573 = vadd.f32 %v613, %v1500
        %v1574 = vadd.f32 %v614, %v1502
        %v1575 = vadd.f32 %v615, %v1504
        %v1576 = vadd.f32 %v616, %v1506
        %v1577 = vadd.f32 %v617, %v1508
        %v1578 = vadd.f32 %v618, %v1510
        %v1579 = vadd.f32 %v619, %v1512
        %v1580 = vadd.f32 %v620, %v1514
        %v1581 = vadd.f32 %v621, %v1516
        %v1582 = vadd.f32 %v622, %v1518
        %v1583 = vmax.f32 %v1551, 0.0
        %v1584 = vmax.f32 %v1552, 0.0
        %v1585 = vmax.f32 %v1553, 0.0
        %v1586 = vmax.f32 %v1554, 0.0
        %v1587 = vmax.f32 %v1555, 0.0
        %v1588 = vmax.f32 %v1556, 0.0
        %v1589 = vmax.f32 %v1557, 0.0
        %v1590 = vmax.f32 %v1558, 0.0
        %v1591 = vmax.f32 %v1559, 0.0
        %v1592 = vmax.f32 %v1560, 0.0
        %v1593 = vmax.f32 %v1561, 0.0
        %v1594 = vmax.f32 %v1562, 0.0
        %v1595 = vmax.f32 %v1563, 0.0
        %v1596 = vmax.f32 %v1564, 0.0
        %v1597 = vmax.f32 %v1565, 0.0
        %v1598 = vmax.f32 %v1566, 0.0
        %v1599 = vmax.f32 %v1567, 0.0
        %v1600 = vmax.f32 %v1568, 0.0
        %v1601 = vmax.f32 %v1569, 0.0
        %v1602 = vmax.f32 %v1570, 0.0
        %v1603 = vmax.f32 %v1571, 0.0
        %v1604 = vmax.f32 %v1572, 0.0
        %v1605 = vmax.f32 %v1573, 0.0
        %v1606 = vmax.f32 %v1574, 0.0
        %v1607 = vmax.f32 %v1575, 0.0
        %v1608 = vmax.f32 %v1576, 0.0
        %v1609 = vmax.f32 %v1577, 0.0
        %v1610 = vmax.f32 %v1578, 0.0
        %v1611 = vmax.f32 %v1579, 0.0
        %v1612 = vmax.f32 %v1580, 0.0
        %v1613 = vmax.f32 %v1581, 0.0
        %v1614 = vmax.f32 %v1582, 0.0
        %v1615 = vpack.c.bf16 %v1583, %v1583
        %v1616 = vpack.c.bf16 %v1584, %v1584
        %v1617 = vpack.c.bf16 %v1585, %v1585
        %v1618 = vpack.c.bf16 %v1586, %v1586
        %v1619 = vpack.c.bf16 %v1587, %v1587
        %v1620 = vpack.c.bf16 %v1588, %v1588
        %v1621 = vpack.c.bf16 %v1589, %v1589
        %v1622 = vpack.c.bf16 %v1590, %v1590
        %v1623 = vpack.c.bf16 %v1591, %v1591
        %v1624 = vpack.c.bf16 %v1592, %v1592
        %v1625 = vpack.c.bf16 %v1593, %v1593
        %v1626 = vpack.c.bf16 %v1594, %v1594
        %v1627 = vpack.c.bf16 %v1595, %v1595
        %v1628 = vpack.c.bf16 %v1596, %v1596
        %v1629 = vpack.c.bf16 %v1597, %v1597
        %v1630 = vpack.c.bf16 %v1598, %v1598
        %v1631 = vpack.c.bf16 %v1599, %v1599
        %v1632 = vpack.c.bf16 %v1600, %v1600
        %v1633 = vpack.c.bf16 %v1601, %v1601
        %v1634 = vpack.c.bf16 %v1602, %v1602
        %v1635 = vpack.c.bf16 %v1603, %v1603
        %v1636 = vpack.c.bf16 %v1604, %v1604
        %v1637 = vpack.c.bf16 %v1605, %v1605
        %v1638 = vpack.c.bf16 %v1606, %v1606
        %v1639 = vpack.c.bf16 %v1607, %v1607
        %v1640 = vpack.c.bf16 %v1608, %v1608
        %v1641 = vpack.c.bf16 %v1609, %v1609
        %v1642 = vpack.c.bf16 %v1610, %v1610
        %v1643 = vpack.c.bf16 %v1611, %v1611
        %v1644 = vpack.c.bf16 %v1612, %v1612
        %v1645 = vpack.c.bf16 %v1613, %v1613
        %v1646 = vpack.c.bf16 %v1614, %v1614
        %v1647 = vmul.f32 %v493, 0.5714286
        %v1648 = vmul.f32 %v496, 0.5714286
        %v1649 = vmul.f32 %v499, 0.5714286
        %v1650 = vmul.f32 %v502, 0.5714286
        %v1651 = vmul.f32 %v505, 0.5714286
        %v1652 = vmul.f32 %v508, 0.5714286
        %v1653 = vmul.f32 %v511, 0.5714286
        %v1654 = vmul.f32 %v514, 0.5714286
        %v1655 = vmul.f32 %v517, 0.5714286
        %v1656 = vmul.f32 %v520, 0.5714286
        %v1657 = vmul.f32 %v523, 0.5714286
        %v1658 = vmul.f32 %v526, 0.5714286
        %v1659 = vmul.f32 %v529, 0.5714286
        %v1660 = vmul.f32 %v532, 0.5714286
        %v1661 = vmul.f32 %v535, 0.5714286
        %v1662 = vmul.f32 %v538, 0.5714286
        %v1663 = vmul.f32 %v541, 0.5714286
        %v1664 = vmul.f32 %v544, 0.5714286
        %v1665 = vmul.f32 %v547, 0.5714286
        %v1666 = vmul.f32 %v550, 0.5714286
        %v1667 = vmul.f32 %v553, 0.5714286
        %v1668 = vmul.f32 %v556, 0.5714286
        %v1669 = vmul.f32 %v559, 0.5714286
        %v1670 = vmul.f32 %v562, 0.5714286
        %v1671 = vmul.f32 %v565, 0.5714286
        %v1672 = vmul.f32 %v568, 0.5714286
        %v1673 = vmul.f32 %v571, 0.5714286
        %v1674 = vmul.f32 %v574, 0.5714286
        %v1675 = vmul.f32 %v577, 0.5714286
        %v1676 = vmul.f32 %v580, 0.5714286
        %v1677 = vmul.f32 %v583, 0.5714286
        %v1678 = vmul.f32 %v586, 0.5714286
        %1711 = vrot.lane.b32.xlu0 %v1647, 96
        %v1712 = vpop.permute.xlu0 %1711
        %1713 = vrot.lane.b32.xlu0 %v1648, 96
        %v1714 = vpop.permute.xlu0 %1713
        %1715 = vrot.lane.b32.xlu0 %v1649, 96
        %v1716 = vpop.permute.xlu0 %1715
        %1717 = vrot.lane.b32.xlu0 %v1650, 96
        %v1718 = vpop.permute.xlu0 %1717
        %1719 = vrot.lane.b32.xlu0 %v1651, 96
        %v1720 = vpop.permute.xlu0 %1719
        %1721 = vrot.lane.b32.xlu0 %v1652, 96
        %v1722 = vpop.permute.xlu0 %1721
        %1723 = vrot.lane.b32.xlu0 %v1653, 96
        %v1724 = vpop.permute.xlu0 %1723
        %1725 = vrot.lane.b32.xlu0 %v1654, 96
        %v1726 = vpop.permute.xlu0 %1725
        %1727 = vrot.lane.b32.xlu0 %v1655, 96
        %v1728 = vpop.permute.xlu0 %1727
        %1729 = vrot.lane.b32.xlu0 %v1656, 96
        %v1730 = vpop.permute.xlu0 %1729
        %1731 = vrot.lane.b32.xlu0 %v1657, 96
        %v1732 = vpop.permute.xlu0 %1731
        %1733 = vrot.lane.b32.xlu0 %v1658, 96
        %v1734 = vpop.permute.xlu0 %1733
        %1735 = vrot.lane.b32.xlu0 %v1659, 96
        %v1736 = vpop.permute.xlu0 %1735
        %1737 = vrot.lane.b32.xlu0 %v1660, 96
        %v1738 = vpop.permute.xlu0 %1737
        %1739 = vrot.lane.b32.xlu0 %v1661, 96
        %v1740 = vpop.permute.xlu0 %1739
        %1741 = vrot.lane.b32.xlu0 %v1662, 96
        %v1742 = vpop.permute.xlu0 %1741
        %1743 = vrot.lane.b32.xlu0 %v1663, 96
        %v1744 = vpop.permute.xlu0 %1743
        %1745 = vrot.lane.b32.xlu0 %v1664, 96
        %v1746 = vpop.permute.xlu0 %1745
        %1747 = vrot.lane.b32.xlu0 %v1665, 96
        %v1748 = vpop.permute.xlu0 %1747
        %1749 = vrot.lane.b32.xlu0 %v1666, 96
        %v1750 = vpop.permute.xlu0 %1749
        %1751 = vrot.lane.b32.xlu0 %v1667, 96
        %v1752 = vpop.permute.xlu0 %1751
        %1753 = vrot.lane.b32.xlu0 %v1668, 96
        %v1754 = vpop.permute.xlu0 %1753
        %1755 = vrot.lane.b32.xlu0 %v1669, 96
        %v1756 = vpop.permute.xlu0 %1755
        %1757 = vrot.lane.b32.xlu0 %v1670, 96
        %v1758 = vpop.permute.xlu0 %1757
        %1759 = vrot.lane.b32.xlu0 %v1671, 96
        %v1760 = vpop.permute.xlu0 %1759
        %1761 = vrot.lane.b32.xlu0 %v1672, 96
        %v1762 = vpop.permute.xlu0 %1761
        %1763 = vrot.lane.b32.xlu0 %v1673, 96
        %v1764 = vpop.permute.xlu0 %1763
        %1765 = vrot.lane.b32.xlu0 %v1674, 96
        %v1766 = vpop.permute.xlu0 %1765
        %1767 = vrot.lane.b32.xlu0 %v1675, 96
        %v1768 = vpop.permute.xlu0 %1767
        %1769 = vrot.lane.b32.xlu0 %v1676, 96
        %v1770 = vpop.permute.xlu0 %1769
        %1771 = vrot.lane.b32.xlu0 %v1677, 96
        %v1772 = vpop.permute.xlu0 %1771
        %1773 = vrot.lane.b32.xlu0 %v1678, 96
        %v1774 = vpop.permute.xlu0 %1773
        %v1807 = vadd.f32 %v591, %v1712
        %v1808 = vadd.f32 %v592, %v1714
        %v1809 = vadd.f32 %v593, %v1716
        %v1810 = vadd.f32 %v594, %v1718
        %v1811 = vadd.f32 %v595, %v1720
        %v1812 = vadd.f32 %v596, %v1722
        %v1813 = vadd.f32 %v597, %v1724
        %v1814 = vadd.f32 %v598, %v1726
        %v1815 = vadd.f32 %v599, %v1728
        %v1816 = vadd.f32 %v600, %v1730
        %v1817 = vadd.f32 %v601, %v1732
        %v1818 = vadd.f32 %v602, %v1734
        %v1819 = vadd.f32 %v603, %v1736
        %v1820 = vadd.f32 %v604, %v1738
        %v1821 = vadd.f32 %v605, %v1740
        %v1822 = vadd.f32 %v606, %v1742
        %v1823 = vadd.f32 %v607, %v1744
        %v1824 = vadd.f32 %v608, %v1746
        %v1825 = vadd.f32 %v609, %v1748
        %v1826 = vadd.f32 %v610, %v1750
        %v1827 = vadd.f32 %v611, %v1752
        %v1828 = vadd.f32 %v612, %v1754
        %v1829 = vadd.f32 %v613, %v1756
        %v1830 = vadd.f32 %v614, %v1758
        %v1831 = vadd.f32 %v615, %v1760
        %v1832 = vadd.f32 %v616, %v1762
        %v1833 = vadd.f32 %v617, %v1764
        %v1834 = vadd.f32 %v618, %v1766
        %v1835 = vadd.f32 %v619, %v1768
        %v1836 = vadd.f32 %v620, %v1770
        %v1837 = vadd.f32 %v621, %v1772
        %v1838 = vadd.f32 %v622, %v1774
        %v1839 = vmax.f32 %v1807, 0.0
        %v1840 = vmax.f32 %v1808, 0.0
        %v1841 = vmax.f32 %v1809, 0.0
        %v1842 = vmax.f32 %v1810, 0.0
        %v1843 = vmax.f32 %v1811, 0.0
        %v1844 = vmax.f32 %v1812, 0.0
        %v1845 = vmax.f32 %v1813, 0.0
        %v1846 = vmax.f32 %v1814, 0.0
        %v1847 = vmax.f32 %v1815, 0.0
        %v1848 = vmax.f32 %v1816, 0.0
        %v1849 = vmax.f32 %v1817, 0.0
        %v1850 = vmax.f32 %v1818, 0.0
        %v1851 = vmax.f32 %v1819, 0.0
        %v1852 = vmax.f32 %v1820, 0.0
        %v1853 = vmax.f32 %v1821, 0.0
        %v1854 = vmax.f32 %v1822, 0.0
        %v1855 = vmax.f32 %v1823, 0.0
        %v1856 = vmax.f32 %v1824, 0.0
        %v1857 = vmax.f32 %v1825, 0.0
        %v1858 = vmax.f32 %v1826, 0.0
        %v1859 = vmax.f32 %v1827, 0.0
        %v1860 = vmax.f32 %v1828, 0.0
        %v1861 = vmax.f32 %v1829, 0.0
        %v1862 = vmax.f32 %v1830, 0.0
        %v1863 = vmax.f32 %v1831, 0.0
        %v1864 = vmax.f32 %v1832, 0.0
        %v1865 = vmax.f32 %v1833, 0.0
        %v1866 = vmax.f32 %v1834, 0.0
        %v1867 = vmax.f32 %v1835, 0.0
        %v1868 = vmax.f32 %v1836, 0.0
        %v1869 = vmax.f32 %v1837, 0.0
        %v1870 = vmax.f32 %v1838, 0.0
        %v1871 = vpack.c.bf16 %v1839, %v1839
        %v1872 = vpack.c.bf16 %v1840, %v1840
        %v1873 = vpack.c.bf16 %v1841, %v1841
        %v1874 = vpack.c.bf16 %v1842, %v1842
        %v1875 = vpack.c.bf16 %v1843, %v1843
        %v1876 = vpack.c.bf16 %v1844, %v1844
        %v1877 = vpack.c.bf16 %v1845, %v1845
        %v1878 = vpack.c.bf16 %v1846, %v1846
        %v1879 = vpack.c.bf16 %v1847, %v1847
        %v1880 = vpack.c.bf16 %v1848, %v1848
        %v1881 = vpack.c.bf16 %v1849, %v1849
        %v1882 = vpack.c.bf16 %v1850, %v1850
        %v1883 = vpack.c.bf16 %v1851, %v1851
        %v1884 = vpack.c.bf16 %v1852, %v1852
        %v1885 = vpack.c.bf16 %v1853, %v1853
        %v1886 = vpack.c.bf16 %v1854, %v1854
        %v1887 = vpack.c.bf16 %v1855, %v1855
        %v1888 = vpack.c.bf16 %v1856, %v1856
        %v1889 = vpack.c.bf16 %v1857, %v1857
        %v1890 = vpack.c.bf16 %v1858, %v1858
        %v1891 = vpack.c.bf16 %v1859, %v1859
        %v1892 = vpack.c.bf16 %v1860, %v1860
        %v1893 = vpack.c.bf16 %v1861, %v1861
        %v1894 = vpack.c.bf16 %v1862, %v1862
        %v1895 = vpack.c.bf16 %v1863, %v1863
        %v1896 = vpack.c.bf16 %v1864, %v1864
        %v1897 = vpack.c.bf16 %v1865, %v1865
        %v1898 = vpack.c.bf16 %v1866, %v1866
        %v1899 = vpack.c.bf16 %v1867, %v1867
        %v1900 = vpack.c.bf16 %v1868, %v1868
        %v1901 = vpack.c.bf16 %v1869, %v1869
        %v1902 = vpack.c.bf16 %v1870, %v1870
        %v1903 = vmul.f32 %v493, 0.71428573
        %v1904 = vmul.f32 %v496, 0.71428573
        %v1905 = vmul.f32 %v499, 0.71428573
        %v1906 = vmul.f32 %v502, 0.71428573
        %v1907 = vmul.f32 %v505, 0.71428573
        %v1908 = vmul.f32 %v508, 0.71428573
        %v1909 = vmul.f32 %v511, 0.71428573
        %v1910 = vmul.f32 %v514, 0.71428573
        %v1911 = vmul.f32 %v517, 0.71428573
        %v1912 = vmul.f32 %v520, 0.71428573
        %v1913 = vmul.f32 %v523, 0.71428573
        %v1914 = vmul.f32 %v526, 0.71428573
        %v1915 = vmul.f32 %v529, 0.71428573
        %v1916 = vmul.f32 %v532, 0.71428573
        %v1917 = vmul.f32 %v535, 0.71428573
        %v1918 = vmul.f32 %v538, 0.71428573
        %v1919 = vmul.f32 %v541, 0.71428573
        %v1920 = vmul.f32 %v544, 0.71428573
        %v1921 = vmul.f32 %v547, 0.71428573
        %v1922 = vmul.f32 %v550, 0.71428573
        %v1923 = vmul.f32 %v553, 0.71428573
        %v1924 = vmul.f32 %v556, 0.71428573
        %v1925 = vmul.f32 %v559, 0.71428573
        %v1926 = vmul.f32 %v562, 0.71428573
        %v1927 = vmul.f32 %v565, 0.71428573
        %v1928 = vmul.f32 %v568, 0.71428573
        %v1929 = vmul.f32 %v571, 0.71428573
        %v1930 = vmul.f32 %v574, 0.71428573
        %v1931 = vmul.f32 %v577, 0.71428573
        %v1932 = vmul.f32 %v580, 0.71428573
        %v1933 = vmul.f32 %v583, 0.71428573
        %v1934 = vmul.f32 %v586, 0.71428573
        %1967 = vrot.lane.b32.xlu0 %v1903, 96
        %v1968 = vpop.permute.xlu0 %1967
        %1969 = vrot.lane.b32.xlu0 %v1904, 96
        %v1970 = vpop.permute.xlu0 %1969
        %1971 = vrot.lane.b32.xlu0 %v1905, 96
        %v1972 = vpop.permute.xlu0 %1971
        %1973 = vrot.lane.b32.xlu0 %v1906, 96
        %v1974 = vpop.permute.xlu0 %1973
        %1975 = vrot.lane.b32.xlu0 %v1907, 96
        %v1976 = vpop.permute.xlu0 %1975
        %1977 = vrot.lane.b32.xlu0 %v1908, 96
        %v1978 = vpop.permute.xlu0 %1977
        %1979 = vrot.lane.b32.xlu0 %v1909, 96
        %v1980 = vpop.permute.xlu0 %1979
        %1981 = vrot.lane.b32.xlu0 %v1910, 96
        %v1982 = vpop.permute.xlu0 %1981
        %1983 = vrot.lane.b32.xlu0 %v1911, 96
        %v1984 = vpop.permute.xlu0 %1983
        %1985 = vrot.lane.b32.xlu0 %v1912, 96
        %v1986 = vpop.permute.xlu0 %1985
        %1987 = vrot.lane.b32.xlu0 %v1913, 96
        %v1988 = vpop.permute.xlu0 %1987
        %1989 = vrot.lane.b32.xlu0 %v1914, 96
        %v1990 = vpop.permute.xlu0 %1989
        %1991 = vrot.lane.b32.xlu0 %v1915, 96
        %v1992 = vpop.permute.xlu0 %1991
        %1993 = vrot.lane.b32.xlu0 %v1916, 96
        %v1994 = vpop.permute.xlu0 %1993
        %1995 = vrot.lane.b32.xlu0 %v1917, 96
        %v1996 = vpop.permute.xlu0 %1995
        %1997 = vrot.lane.b32.xlu0 %v1918, 96
        %v1998 = vpop.permute.xlu0 %1997
        %1999 = vrot.lane.b32.xlu0 %v1919, 96
        %v2000 = vpop.permute.xlu0 %1999
        %2001 = vrot.lane.b32.xlu0 %v1920, 96
        %v2002 = vpop.permute.xlu0 %2001
        %2003 = vrot.lane.b32.xlu0 %v1921, 96
        %v2004 = vpop.permute.xlu0 %2003
        %2005 = vrot.lane.b32.xlu0 %v1922, 96
        %v2006 = vpop.permute.xlu0 %2005
        %2007 = vrot.lane.b32.xlu0 %v1923, 96
        %v2008 = vpop.permute.xlu0 %2007
        %2009 = vrot.lane.b32.xlu0 %v1924, 96
        %v2010 = vpop.permute.xlu0 %2009
        %2011 = vrot.lane.b32.xlu0 %v1925, 96
        %v2012 = vpop.permute.xlu0 %2011
        %2013 = vrot.lane.b32.xlu0 %v1926, 96
        %v2014 = vpop.permute.xlu0 %2013
        %2015 = vrot.lane.b32.xlu0 %v1927, 96
        %v2016 = vpop.permute.xlu0 %2015
        %2017 = vrot.lane.b32.xlu0 %v1928, 96
        %v2018 = vpop.permute.xlu0 %2017
        %2019 = vrot.lane.b32.xlu0 %v1929, 96
        %v2020 = vpop.permute.xlu0 %2019
        %2021 = vrot.lane.b32.xlu0 %v1930, 96
        %v2022 = vpop.permute.xlu0 %2021
        %2023 = vrot.lane.b32.xlu0 %v1931, 96
        %v2024 = vpop.permute.xlu0 %2023
        %2025 = vrot.lane.b32.xlu0 %v1932, 96
        %v2026 = vpop.permute.xlu0 %2025
        %2027 = vrot.lane.b32.xlu0 %v1933, 96
        %v2028 = vpop.permute.xlu0 %2027
        %2029 = vrot.lane.b32.xlu0 %v1934, 96
        %v2030 = vpop.permute.xlu0 %2029
        %v2063 = vadd.f32 %v591, %v1968
        %v2064 = vadd.f32 %v592, %v1970
        %v2065 = vadd.f32 %v593, %v1972
        %v2066 = vadd.f32 %v594, %v1974
        %v2067 = vadd.f32 %v595, %v1976
        %v2068 = vadd.f32 %v596, %v1978
        %v2069 = vadd.f32 %v597, %v1980
        %v2070 = vadd.f32 %v598, %v1982
        %v2071 = vadd.f32 %v599, %v1984
        %v2072 = vadd.f32 %v600, %v1986
        %v2073 = vadd.f32 %v601, %v1988
        %v2074 = vadd.f32 %v602, %v1990
        %v2075 = vadd.f32 %v603, %v1992
        %v2076 = vadd.f32 %v604, %v1994
        %v2077 = vadd.f32 %v605, %v1996
        %v2078 = vadd.f32 %v606, %v1998
        %v2079 = vadd.f32 %v607, %v2000
        %v2080 = vadd.f32 %v608, %v2002
        %v2081 = vadd.f32 %v609, %v2004
        %v2082 = vadd.f32 %v610, %v2006
        %v2083 = vadd.f32 %v611, %v2008
        %v2084 = vadd.f32 %v612, %v2010
        %v2085 = vadd.f32 %v613, %v2012
        %v2086 = vadd.f32 %v614, %v2014
        %v2087 = vadd.f32 %v615, %v2016
        %v2088 = vadd.f32 %v616, %v2018
        %v2089 = vadd.f32 %v617, %v2020
        %v2090 = vadd.f32 %v618, %v2022
        %v2091 = vadd.f32 %v619, %v2024
        %v2092 = vadd.f32 %v620, %v2026
        %v2093 = vadd.f32 %v621, %v2028
        %v2094 = vadd.f32 %v622, %v2030
        %v2095 = vmax.f32 %v2063, 0.0
        %v2096 = vmax.f32 %v2064, 0.0
        %v2097 = vmax.f32 %v2065, 0.0
        %v2098 = vmax.f32 %v2066, 0.0
        %v2099 = vmax.f32 %v2067, 0.0
        %v2100 = vmax.f32 %v2068, 0.0
        %v2101 = vmax.f32 %v2069, 0.0
        %v2102 = vmax.f32 %v2070, 0.0
        %v2103 = vmax.f32 %v2071, 0.0
        %v2104 = vmax.f32 %v2072, 0.0
        %v2105 = vmax.f32 %v2073, 0.0
        %v2106 = vmax.f32 %v2074, 0.0
        %v2107 = vmax.f32 %v2075, 0.0
        %v2108 = vmax.f32 %v2076, 0.0
        %v2109 = vmax.f32 %v2077, 0.0
        %v2110 = vmax.f32 %v2078, 0.0
        %v2111 = vmax.f32 %v2079, 0.0
        %v2112 = vmax.f32 %v2080, 0.0
        %v2113 = vmax.f32 %v2081, 0.0
        %v2114 = vmax.f32 %v2082, 0.0
        %v2115 = vmax.f32 %v2083, 0.0
        %v2116 = vmax.f32 %v2084, 0.0
        %v2117 = vmax.f32 %v2085, 0.0
        %v2118 = vmax.f32 %v2086, 0.0
        %v2119 = vmax.f32 %v2087, 0.0
        %v2120 = vmax.f32 %v2088, 0.0
        %v2121 = vmax.f32 %v2089, 0.0
        %v2122 = vmax.f32 %v2090, 0.0
        %v2123 = vmax.f32 %v2091, 0.0
        %v2124 = vmax.f32 %v2092, 0.0
        %v2125 = vmax.f32 %v2093, 0.0
        %v2126 = vmax.f32 %v2094, 0.0
        %v2127 = vpack.c.bf16 %v2095, %v2095
        %v2128 = vpack.c.bf16 %v2096, %v2096
        %v2129 = vpack.c.bf16 %v2097, %v2097
        %v2130 = vpack.c.bf16 %v2098, %v2098
        %v2131 = vpack.c.bf16 %v2099, %v2099
        %v2132 = vpack.c.bf16 %v2100, %v2100
        %v2133 = vpack.c.bf16 %v2101, %v2101
        %v2134 = vpack.c.bf16 %v2102, %v2102
        %v2135 = vpack.c.bf16 %v2103, %v2103
        %v2136 = vpack.c.bf16 %v2104, %v2104
        %v2137 = vpack.c.bf16 %v2105, %v2105
        %v2138 = vpack.c.bf16 %v2106, %v2106
        %v2139 = vpack.c.bf16 %v2107, %v2107
        %v2140 = vpack.c.bf16 %v2108, %v2108
        %v2141 = vpack.c.bf16 %v2109, %v2109
        %v2142 = vpack.c.bf16 %v2110, %v2110
        %v2143 = vpack.c.bf16 %v2111, %v2111
        %v2144 = vpack.c.bf16 %v2112, %v2112
        %v2145 = vpack.c.bf16 %v2113, %v2113
        %v2146 = vpack.c.bf16 %v2114, %v2114
        %v2147 = vpack.c.bf16 %v2115, %v2115
        %v2148 = vpack.c.bf16 %v2116, %v2116
        %v2149 = vpack.c.bf16 %v2117, %v2117
        %v2150 = vpack.c.bf16 %v2118, %v2118
        %v2151 = vpack.c.bf16 %v2119, %v2119
        %v2152 = vpack.c.bf16 %v2120, %v2120
        %v2153 = vpack.c.bf16 %v2121, %v2121
        %v2154 = vpack.c.bf16 %v2122, %v2122
        %v2155 = vpack.c.bf16 %v2123, %v2123
        %v2156 = vpack.c.bf16 %v2124, %v2124
        %v2157 = vpack.c.bf16 %v2125, %v2125
        %v2158 = vpack.c.bf16 %v2126, %v2126
        %v2159 = vmul.f32 %v493, 0.85714287
        %v2160 = vmul.f32 %v496, 0.85714287
        %v2161 = vmul.f32 %v499, 0.85714287
        %v2162 = vmul.f32 %v502, 0.85714287
        %v2163 = vmul.f32 %v505, 0.85714287
        %v2164 = vmul.f32 %v508, 0.85714287
        %v2165 = vmul.f32 %v511, 0.85714287
        %v2166 = vmul.f32 %v514, 0.85714287
        %v2167 = vmul.f32 %v517, 0.85714287
        %v2168 = vmul.f32 %v520, 0.85714287
        %v2169 = vmul.f32 %v523, 0.85714287
        %v2170 = vmul.f32 %v526, 0.85714287
        %v2171 = vmul.f32 %v529, 0.85714287
        %v2172 = vmul.f32 %v532, 0.85714287
        %v2173 = vmul.f32 %v535, 0.85714287
        %v2174 = vmul.f32 %v538, 0.85714287
        %v2175 = vmul.f32 %v541, 0.85714287
        %v2176 = vmul.f32 %v544, 0.85714287
        %v2177 = vmul.f32 %v547, 0.85714287
        %v2178 = vmul.f32 %v550, 0.85714287
        %v2179 = vmul.f32 %v553, 0.85714287
        %v2180 = vmul.f32 %v556, 0.85714287
        %v2181 = vmul.f32 %v559, 0.85714287
        %v2182 = vmul.f32 %v562, 0.85714287
        %v2183 = vmul.f32 %v565, 0.85714287
        %v2184 = vmul.f32 %v568, 0.85714287
        %v2185 = vmul.f32 %v571, 0.85714287
        %v2186 = vmul.f32 %v574, 0.85714287
        %v2187 = vmul.f32 %v577, 0.85714287
        %v2188 = vmul.f32 %v580, 0.85714287
        %v2189 = vmul.f32 %v583, 0.85714287
        %v2190 = vmul.f32 %v586, 0.85714287
        %2223 = vrot.lane.b32.xlu0 %v2159, 96
        %v2224 = vpop.permute.xlu0 %2223
        %2225 = vrot.lane.b32.xlu0 %v2160, 96
        %v2226 = vpop.permute.xlu0 %2225
        %2227 = vrot.lane.b32.xlu0 %v2161, 96
        %v2228 = vpop.permute.xlu0 %2227
        %2229 = vrot.lane.b32.xlu0 %v2162, 96
        %v2230 = vpop.permute.xlu0 %2229
        %2231 = vrot.lane.b32.xlu0 %v2163, 96
        %v2232 = vpop.permute.xlu0 %2231
        %2233 = vrot.lane.b32.xlu0 %v2164, 96
        %v2234 = vpop.permute.xlu0 %2233
        %2235 = vrot.lane.b32.xlu0 %v2165, 96
        %v2236 = vpop.permute.xlu0 %2235
        %2237 = vrot.lane.b32.xlu0 %v2166, 96
        %v2238 = vpop.permute.xlu0 %2237
        %2239 = vrot.lane.b32.xlu0 %v2167, 96
        %v2240 = vpop.permute.xlu0 %2239
        %2241 = vrot.lane.b32.xlu0 %v2168, 96
        %v2242 = vpop.permute.xlu0 %2241
        %2243 = vrot.lane.b32.xlu0 %v2169, 96
        %v2244 = vpop.permute.xlu0 %2243
        %2245 = vrot.lane.b32.xlu0 %v2170, 96
        %v2246 = vpop.permute.xlu0 %2245
        %2247 = vrot.lane.b32.xlu0 %v2171, 96
        %v2248 = vpop.permute.xlu0 %2247
        %2249 = vrot.lane.b32.xlu0 %v2172, 96
        %v2250 = vpop.permute.xlu0 %2249
        %2251 = vrot.lane.b32.xlu0 %v2173, 96
        %v2252 = vpop.permute.xlu0 %2251
        %2253 = vrot.lane.b32.xlu0 %v2174, 96
        %v2254 = vpop.permute.xlu0 %2253
        %2255 = vrot.lane.b32.xlu0 %v2175, 96
        %v2256 = vpop.permute.xlu0 %2255
        %2257 = vrot.lane.b32.xlu0 %v2176, 96
        %v2258 = vpop.permute.xlu0 %2257
        %2259 = vrot.lane.b32.xlu0 %v2177, 96
        %v2260 = vpop.permute.xlu0 %2259
        %2261 = vrot.lane.b32.xlu0 %v2178, 96
        %v2262 = vpop.permute.xlu0 %2261
        %2263 = vrot.lane.b32.xlu0 %v2179, 96
        %v2264 = vpop.permute.xlu0 %2263
        %2265 = vrot.lane.b32.xlu0 %v2180, 96
        %v2266 = vpop.permute.xlu0 %2265
        %2267 = vrot.lane.b32.xlu0 %v2181, 96
        %v2268 = vpop.permute.xlu0 %2267
        %2269 = vrot.lane.b32.xlu0 %v2182, 96
        %v2270 = vpop.permute.xlu0 %2269
        %2271 = vrot.lane.b32.xlu0 %v2183, 96
        %v2272 = vpop.permute.xlu0 %2271
        %2273 = vrot.lane.b32.xlu0 %v2184, 96
        %v2274 = vpop.permute.xlu0 %2273
        %2275 = vrot.lane.b32.xlu0 %v2185, 96
        %v2276 = vpop.permute.xlu0 %2275
        %2277 = vrot.lane.b32.xlu0 %v2186, 96
        %v2278 = vpop.permute.xlu0 %2277
        %2279 = vrot.lane.b32.xlu0 %v2187, 96
        %v2280 = vpop.permute.xlu0 %2279
        %2281 = vrot.lane.b32.xlu0 %v2188, 96
        %v2282 = vpop.permute.xlu0 %2281
        %2283 = vrot.lane.b32.xlu0 %v2189, 96
        %v2284 = vpop.permute.xlu0 %2283
        %2285 = vrot.lane.b32.xlu0 %v2190, 96
        %v2286 = vpop.permute.xlu0 %2285
        %v2319 = vadd.f32 %v591, %v2224
        %v2320 = vadd.f32 %v592, %v2226
        %v2321 = vadd.f32 %v593, %v2228
        %v2322 = vadd.f32 %v594, %v2230
        %v2323 = vadd.f32 %v595, %v2232
        %v2324 = vadd.f32 %v596, %v2234
        %v2325 = vadd.f32 %v597, %v2236
        %v2326 = vadd.f32 %v598, %v2238
        %v2327 = vadd.f32 %v599, %v2240
        %v2328 = vadd.f32 %v600, %v2242
        %v2329 = vadd.f32 %v601, %v2244
        %v2330 = vadd.f32 %v602, %v2246
        %v2331 = vadd.f32 %v603, %v2248
        %v2332 = vadd.f32 %v604, %v2250
        %v2333 = vadd.f32 %v605, %v2252
        %v2334 = vadd.f32 %v606, %v2254
        %v2335 = vadd.f32 %v607, %v2256
        %v2336 = vadd.f32 %v608, %v2258
        %v2337 = vadd.f32 %v609, %v2260
        %v2338 = vadd.f32 %v610, %v2262
        %v2339 = vadd.f32 %v611, %v2264
        %v2340 = vadd.f32 %v612, %v2266
        %v2341 = vadd.f32 %v613, %v2268
        %v2342 = vadd.f32 %v614, %v2270
        %v2343 = vadd.f32 %v615, %v2272
        %v2344 = vadd.f32 %v616, %v2274
        %v2345 = vadd.f32 %v617, %v2276
        %v2346 = vadd.f32 %v618, %v2278
        %v2347 = vadd.f32 %v619, %v2280
        %v2348 = vadd.f32 %v620, %v2282
        %v2349 = vadd.f32 %v621, %v2284
        %v2350 = vadd.f32 %v622, %v2286
        %v2351 = vmax.f32 %v2319, 0.0
        %v2352 = vmax.f32 %v2320, 0.0
        %v2353 = vmax.f32 %v2321, 0.0
        %v2354 = vmax.f32 %v2322, 0.0
        %v2355 = vmax.f32 %v2323, 0.0
        %v2356 = vmax.f32 %v2324, 0.0
        %v2357 = vmax.f32 %v2325, 0.0
        %v2358 = vmax.f32 %v2326, 0.0
        %v2359 = vmax.f32 %v2327, 0.0
        %v2360 = vmax.f32 %v2328, 0.0
        %v2361 = vmax.f32 %v2329, 0.0
        %v2362 = vmax.f32 %v2330, 0.0
        %v2363 = vmax.f32 %v2331, 0.0
        %v2364 = vmax.f32 %v2332, 0.0
        %v2365 = vmax.f32 %v2333, 0.0
        %v2366 = vmax.f32 %v2334, 0.0
        %v2367 = vmax.f32 %v2335, 0.0
        %v2368 = vmax.f32 %v2336, 0.0
        %v2369 = vmax.f32 %v2337, 0.0
        %v2370 = vmax.f32 %v2338, 0.0
        %v2371 = vmax.f32 %v2339, 0.0
        %v2372 = vmax.f32 %v2340, 0.0
        %v2373 = vmax.f32 %v2341, 0.0
        %v2374 = vmax.f32 %v2342, 0.0
        %v2375 = vmax.f32 %v2343, 0.0
        %v2376 = vmax.f32 %v2344, 0.0
        %v2377 = vmax.f32 %v2345, 0.0
        %v2378 = vmax.f32 %v2346, 0.0
        %v2379 = vmax.f32 %v2347, 0.0
        %v2380 = vmax.f32 %v2348, 0.0
        %v2381 = vmax.f32 %v2349, 0.0
        %v2382 = vmax.f32 %v2350, 0.0
        %v2383 = vpack.c.bf16 %v2351, %v2351
        %v2384 = vpack.c.bf16 %v2352, %v2352
        %v2385 = vpack.c.bf16 %v2353, %v2353
        %v2386 = vpack.c.bf16 %v2354, %v2354
        %v2387 = vpack.c.bf16 %v2355, %v2355
        %v2388 = vpack.c.bf16 %v2356, %v2356
        %v2389 = vpack.c.bf16 %v2357, %v2357
        %v2390 = vpack.c.bf16 %v2358, %v2358
        %v2391 = vpack.c.bf16 %v2359, %v2359
        %v2392 = vpack.c.bf16 %v2360, %v2360
        %v2393 = vpack.c.bf16 %v2361, %v2361
        %v2394 = vpack.c.bf16 %v2362, %v2362
        %v2395 = vpack.c.bf16 %v2363, %v2363
        %v2396 = vpack.c.bf16 %v2364, %v2364
        %v2397 = vpack.c.bf16 %v2365, %v2365
        %v2398 = vpack.c.bf16 %v2366, %v2366
        %v2399 = vpack.c.bf16 %v2367, %v2367
        %v2400 = vpack.c.bf16 %v2368, %v2368
        %v2401 = vpack.c.bf16 %v2369, %v2369
        %v2402 = vpack.c.bf16 %v2370, %v2370
        %v2403 = vpack.c.bf16 %v2371, %v2371
        %v2404 = vpack.c.bf16 %v2372, %v2372
        %v2405 = vpack.c.bf16 %v2373, %v2373
        %v2406 = vpack.c.bf16 %v2374, %v2374
        %v2407 = vpack.c.bf16 %v2375, %v2375
        %v2408 = vpack.c.bf16 %v2376, %v2376
        %v2409 = vpack.c.bf16 %v2377, %v2377
        %v2410 = vpack.c.bf16 %v2378, %v2378
        %v2411 = vpack.c.bf16 %v2379, %v2379
        %v2412 = vpack.c.bf16 %v2380, %v2380
        %v2413 = vpack.c.bf16 %v2381, %v2381
        %v2414 = vpack.c.bf16 %v2382, %v2382
        %2447 = vrot.lane.b32.xlu0 %v493, 96
        %v2448 = vpop.permute.xlu0 %2447
        %2449 = vrot.lane.b32.xlu0 %v496, 96
        %v2450 = vpop.permute.xlu0 %2449
        %2451 = vrot.lane.b32.xlu0 %v499, 96
        %v2452 = vpop.permute.xlu0 %2451
        %2453 = vrot.lane.b32.xlu0 %v502, 96
        %v2454 = vpop.permute.xlu0 %2453
        %2455 = vrot.lane.b32.xlu0 %v505, 96
        %v2456 = vpop.permute.xlu0 %2455
        %2457 = vrot.lane.b32.xlu0 %v508, 96
        %v2458 = vpop.permute.xlu0 %2457
        %2459 = vrot.lane.b32.xlu0 %v511, 96
        %v2460 = vpop.permute.xlu0 %2459
        %2461 = vrot.lane.b32.xlu0 %v514, 96
        %v2462 = vpop.permute.xlu0 %2461
        %2463 = vrot.lane.b32.xlu0 %v517, 96
        %v2464 = vpop.permute.xlu0 %2463
        %2465 = vrot.lane.b32.xlu0 %v520, 96
        %v2466 = vpop.permute.xlu0 %2465
        %2467 = vrot.lane.b32.xlu0 %v523, 96
        %v2468 = vpop.permute.xlu0 %2467
        %2469 = vrot.lane.b32.xlu0 %v526, 96
        %v2470 = vpop.permute.xlu0 %2469
        %2471 = vrot.lane.b32.xlu0 %v529, 96
        %v2472 = vpop.permute.xlu0 %2471
        %2473 = vrot.lane.b32.xlu0 %v532, 96
        %v2474 = vpop.permute.xlu0 %2473
        %2475 = vrot.lane.b32.xlu0 %v535, 96
        %v2476 = vpop.permute.xlu0 %2475
        %2477 = vrot.lane.b32.xlu0 %v538, 96
        %v2478 = vpop.permute.xlu0 %2477
        %2479 = vrot.lane.b32.xlu0 %v541, 96
        %v2480 = vpop.permute.xlu0 %2479
        %2481 = vrot.lane.b32.xlu0 %v544, 96
        %v2482 = vpop.permute.xlu0 %2481
        %2483 = vrot.lane.b32.xlu0 %v547, 96
        %v2484 = vpop.permute.xlu0 %2483
        %2485 = vrot.lane.b32.xlu0 %v550, 96
        %v2486 = vpop.permute.xlu0 %2485
        %2487 = vrot.lane.b32.xlu0 %v553, 96
        %v2488 = vpop.permute.xlu0 %2487
        %2489 = vrot.lane.b32.xlu0 %v556, 96
        %v2490 = vpop.permute.xlu0 %2489
        %2491 = vrot.lane.b32.xlu0 %v559, 96
        %v2492 = vpop.permute.xlu0 %2491
        %2493 = vrot.lane.b32.xlu0 %v562, 96
        %v2494 = vpop.permute.xlu0 %2493
        %2495 = vrot.lane.b32.xlu0 %v565, 96
        %v2496 = vpop.permute.xlu0 %2495
        %2497 = vrot.lane.b32.xlu0 %v568, 96
        %v2498 = vpop.permute.xlu0 %2497
        %2499 = vrot.lane.b32.xlu0 %v571, 96
        %v2500 = vpop.permute.xlu0 %2499
        %2501 = vrot.lane.b32.xlu0 %v574, 96
        %v2502 = vpop.permute.xlu0 %2501
        %2503 = vrot.lane.b32.xlu0 %v577, 96
        %v2504 = vpop.permute.xlu0 %2503
        %2505 = vrot.lane.b32.xlu0 %v580, 96
        %v2506 = vpop.permute.xlu0 %2505
        %2507 = vrot.lane.b32.xlu0 %v583, 96
        %v2508 = vpop.permute.xlu0 %2507
        %2509 = vrot.lane.b32.xlu0 %v586, 96
        %v2510 = vpop.permute.xlu0 %2509
        %v2543 = vadd.f32 %v591, %v2448
        %v2544 = vadd.f32 %v592, %v2450
        %v2545 = vadd.f32 %v593, %v2452
        %v2546 = vadd.f32 %v594, %v2454
        %v2547 = vadd.f32 %v595, %v2456
        %v2548 = vadd.f32 %v596, %v2458
        %v2549 = vadd.f32 %v597, %v2460
        %v2550 = vadd.f32 %v598, %v2462
        %v2551 = vadd.f32 %v599, %v2464
        %v2552 = vadd.f32 %v600, %v2466
        %v2553 = vadd.f32 %v601, %v2468
        %v2554 = vadd.f32 %v602, %v2470
        %v2555 = vadd.f32 %v603, %v2472
        %v2556 = vadd.f32 %v604, %v2474
        %v2557 = vadd.f32 %v605, %v2476
        %v2558 = vadd.f32 %v606, %v2478
        %v2559 = vadd.f32 %v607, %v2480
        %v2560 = vadd.f32 %v608, %v2482
        %v2561 = vadd.f32 %v609, %v2484
        %v2562 = vadd.f32 %v610, %v2486
        %v2563 = vadd.f32 %v611, %v2488
        %v2564 = vadd.f32 %v612, %v2490
        %v2565 = vadd.f32 %v613, %v2492
        %v2566 = vadd.f32 %v614, %v2494
        %v2567 = vadd.f32 %v615, %v2496
        %v2568 = vadd.f32 %v616, %v2498
        %v2569 = vadd.f32 %v617, %v2500
        %v2570 = vadd.f32 %v618, %v2502
        %v2571 = vadd.f32 %v619, %v2504
        %v2572 = vadd.f32 %v620, %v2506
        %v2573 = vadd.f32 %v621, %v2508
        %v2574 = vadd.f32 %v622, %v2510
        %v2575 = vmax.f32 %v2543, 0.0
        %v2576 = vmax.f32 %v2544, 0.0
        %v2577 = vmax.f32 %v2545, 0.0
        %v2578 = vmax.f32 %v2546, 0.0
        %v2579 = vmax.f32 %v2547, 0.0
        %v2580 = vmax.f32 %v2548, 0.0
        %v2581 = vmax.f32 %v2549, 0.0
        %v2582 = vmax.f32 %v2550, 0.0
        %v2583 = vmax.f32 %v2551, 0.0
        %v2584 = vmax.f32 %v2552, 0.0
        %v2585 = vmax.f32 %v2553, 0.0
        %v2586 = vmax.f32 %v2554, 0.0
        %v2587 = vmax.f32 %v2555, 0.0
        %v2588 = vmax.f32 %v2556, 0.0
        %v2589 = vmax.f32 %v2557, 0.0
        %v2590 = vmax.f32 %v2558, 0.0
        %v2591 = vmax.f32 %v2559, 0.0
        %v2592 = vmax.f32 %v2560, 0.0
        %v2593 = vmax.f32 %v2561, 0.0
        %v2594 = vmax.f32 %v2562, 0.0
        %v2595 = vmax.f32 %v2563, 0.0
        %v2596 = vmax.f32 %v2564, 0.0
        %v2597 = vmax.f32 %v2565, 0.0
        %v2598 = vmax.f32 %v2566, 0.0
        %v2599 = vmax.f32 %v2567, 0.0
        %v2600 = vmax.f32 %v2568, 0.0
        %v2601 = vmax.f32 %v2569, 0.0
        %v2602 = vmax.f32 %v2570, 0.0
        %v2603 = vmax.f32 %v2571, 0.0
        %v2604 = vmax.f32 %v2572, 0.0
        %v2605 = vmax.f32 %v2573, 0.0
        %v2606 = vmax.f32 %v2574, 0.0
        %v2607 = vpack.c.bf16 %v2575, %v2575
        %v2608 = vpack.c.bf16 %v2576, %v2576
        %v2609 = vpack.c.bf16 %v2577, %v2577
        %v2610 = vpack.c.bf16 %v2578, %v2578
        %v2611 = vpack.c.bf16 %v2579, %v2579
        %v2612 = vpack.c.bf16 %v2580, %v2580
        %v2613 = vpack.c.bf16 %v2581, %v2581
        %v2614 = vpack.c.bf16 %v2582, %v2582
        %v2615 = vpack.c.bf16 %v2583, %v2583
        %v2616 = vpack.c.bf16 %v2584, %v2584
        %v2617 = vpack.c.bf16 %v2585, %v2585
        %v2618 = vpack.c.bf16 %v2586, %v2586
        %v2619 = vpack.c.bf16 %v2587, %v2587
        %v2620 = vpack.c.bf16 %v2588, %v2588
        %v2621 = vpack.c.bf16 %v2589, %v2589
        %v2622 = vpack.c.bf16 %v2590, %v2590
        %v2623 = vpack.c.bf16 %v2591, %v2591
        %v2624 = vpack.c.bf16 %v2592, %v2592
        %v2625 = vpack.c.bf16 %v2593, %v2593
        %v2626 = vpack.c.bf16 %v2594, %v2594
        %v2627 = vpack.c.bf16 %v2595, %v2595
        %v2628 = vpack.c.bf16 %v2596, %v2596
        %v2629 = vpack.c.bf16 %v2597, %v2597
        %v2630 = vpack.c.bf16 %v2598, %v2598
        %v2631 = vpack.c.bf16 %v2599, %v2599
        %v2632 = vpack.c.bf16 %v2600, %v2600
        %v2633 = vpack.c.bf16 %v2601, %v2601
        %v2634 = vpack.c.bf16 %v2602, %v2602
        %v2635 = vpack.c.bf16 %v2603, %v2603
        %v2636 = vpack.c.bf16 %v2604, %v2604
        %v2637 = vpack.c.bf16 %v2605, %v2605
        %v2638 = vpack.c.bf16 %v2606, %v2606
        %v2671 = vunpack.c.l.b16 %v847
        %v2672 = vunpack.c.l.b16 %v848
        %v2673 = vunpack.c.l.b16 %v849
        %v2674 = vunpack.c.l.b16 %v850
        %v2675 = vunpack.c.l.b16 %v851
        %v2676 = vunpack.c.l.b16 %v852
        %v2677 = vunpack.c.l.b16 %v853
        %v2678 = vunpack.c.l.b16 %v854
        %v2679 = vunpack.c.l.b16 %v855
        %v2680 = vunpack.c.l.b16 %v856
        %v2681 = vunpack.c.l.b16 %v857
        %v2682 = vunpack.c.l.b16 %v858
        %v2683 = vunpack.c.l.b16 %v859
        %v2684 = vunpack.c.l.b16 %v860
        %v2685 = vunpack.c.l.b16 %v861
        %v2686 = vunpack.c.l.b16 %v862
        %v2687 = vunpack.c.l.b16 %v863
        %v2688 = vunpack.c.l.b16 %v864
        %v2689 = vunpack.c.l.b16 %v865
        %v2690 = vunpack.c.l.b16 %v866
        %v2691 = vunpack.c.l.b16 %v867
        %v2692 = vunpack.c.l.b16 %v868
        %v2693 = vunpack.c.l.b16 %v869
        %v2694 = vunpack.c.l.b16 %v870
        %v2695 = vunpack.c.l.b16 %v871
        %v2696 = vunpack.c.l.b16 %v872
        %v2697 = vunpack.c.l.b16 %v873
        %v2698 = vunpack.c.l.b16 %v874
        %v2699 = vunpack.c.l.b16 %v875
        %v2700 = vunpack.c.l.b16 %v876
        %v2701 = vunpack.c.l.b16 %v877
        %v2702 = vunpack.c.l.b16 %v878
        %v2703 = vpack.c.b16 %v2672, %v2671
        %v2704 = vpack.c.b16 %v2674, %v2673
        %v2705 = vpack.c.b16 %v2676, %v2675
        %v2706 = vpack.c.b16 %v2678, %v2677
        %v2707 = vpack.c.b16 %v2680, %v2679
        %v2708 = vpack.c.b16 %v2682, %v2681
        %v2709 = vpack.c.b16 %v2684, %v2683
        %v2710 = vpack.c.b16 %v2686, %v2685
        %v2711 = vpack.c.b16 %v2688, %v2687
        %v2712 = vpack.c.b16 %v2690, %v2689
        %v2713 = vpack.c.b16 %v2692, %v2691
        %v2714 = vpack.c.b16 %v2694, %v2693
        %v2715 = vpack.c.b16 %v2696, %v2695
        %v2716 = vpack.c.b16 %v2698, %v2697
        %v2717 = vpack.c.b16 %v2700, %v2699
        %v2718 = vpack.c.b16 %v2702, %v2701
        %v2751 = vunpack.c.l.b16 %v1103
        %v2752 = vunpack.c.l.b16 %v1104
        %v2753 = vunpack.c.l.b16 %v1105
        %v2754 = vunpack.c.l.b16 %v1106
        %v2755 = vunpack.c.l.b16 %v1107
        %v2756 = vunpack.c.l.b16 %v1108
        %v2757 = vunpack.c.l.b16 %v1109
        %v2758 = vunpack.c.l.b16 %v1110
        %v2759 = vunpack.c.l.b16 %v1111
        %v2760 = vunpack.c.l.b16 %v1112
        %v2761 = vunpack.c.l.b16 %v1113
        %v2762 = vunpack.c.l.b16 %v1114
        %v2763 = vunpack.c.l.b16 %v1115
        %v2764 = vunpack.c.l.b16 %v1116
        %v2765 = vunpack.c.l.b16 %v1117
        %v2766 = vunpack.c.l.b16 %v1118
        %v2767 = vunpack.c.l.b16 %v1119
        %v2768 = vunpack.c.l.b16 %v1120
        %v2769 = vunpack.c.l.b16 %v1121
        %v2770 = vunpack.c.l.b16 %v1122
        %v2771 = vunpack.c.l.b16 %v1123
        %v2772 = vunpack.c.l.b16 %v1124
        %v2773 = vunpack.c.l.b16 %v1125
        %v2774 = vunpack.c.l.b16 %v1126
        %v2775 = vunpack.c.l.b16 %v1127
        %v2776 = vunpack.c.l.b16 %v1128
        %v2777 = vunpack.c.l.b16 %v1129
        %v2778 = vunpack.c.l.b16 %v1130
        %v2779 = vunpack.c.l.b16 %v1131
        %v2780 = vunpack.c.l.b16 %v1132
        %v2781 = vunpack.c.l.b16 %v1133
        %v2782 = vunpack.c.l.b16 %v1134
        %v2783 = vpack.c.b16 %v2752, %v2751
        %v2784 = vpack.c.b16 %v2754, %v2753
        %v2785 = vpack.c.b16 %v2756, %v2755
        %v2786 = vpack.c.b16 %v2758, %v2757
        %v2787 = vpack.c.b16 %v2760, %v2759
        %v2788 = vpack.c.b16 %v2762, %v2761
        %v2789 = vpack.c.b16 %v2764, %v2763
        %v2790 = vpack.c.b16 %v2766, %v2765
        %v2791 = vpack.c.b16 %v2768, %v2767
        %v2792 = vpack.c.b16 %v2770, %v2769
        %v2793 = vpack.c.b16 %v2772, %v2771
        %v2794 = vpack.c.b16 %v2774, %v2773
        %v2795 = vpack.c.b16 %v2776, %v2775
        %v2796 = vpack.c.b16 %v2778, %v2777
        %v2797 = vpack.c.b16 %v2780, %v2779
        %v2798 = vpack.c.b16 %v2782, %v2781
        %v2831 = vunpack.c.l.b16 %v1359
        %v2832 = vunpack.c.l.b16 %v1360
        %v2833 = vunpack.c.l.b16 %v1361
        %v2834 = vunpack.c.l.b16 %v1362
        %v2835 = vunpack.c.l.b16 %v1363
        %v2836 = vunpack.c.l.b16 %v1364
        %v2837 = vunpack.c.l.b16 %v1365
        %v2838 = vunpack.c.l.b16 %v1366
        %v2839 = vunpack.c.l.b16 %v1367
        %v2840 = vunpack.c.l.b16 %v1368
        %v2841 = vunpack.c.l.b16 %v1369
        %v2842 = vunpack.c.l.b16 %v1370
        %v2843 = vunpack.c.l.b16 %v1371
        %v2844 = vunpack.c.l.b16 %v1372
        %v2845 = vunpack.c.l.b16 %v1373
        %v2846 = vunpack.c.l.b16 %v1374
        %v2847 = vunpack.c.l.b16 %v1375
        %v2848 = vunpack.c.l.b16 %v1376
        %v2849 = vunpack.c.l.b16 %v1377
        %v2850 = vunpack.c.l.b16 %v1378
        %v2851 = vunpack.c.l.b16 %v1379
        %v2852 = vunpack.c.l.b16 %v1380
        %v2853 = vunpack.c.l.b16 %v1381
        %v2854 = vunpack.c.l.b16 %v1382
        %v2855 = vunpack.c.l.b16 %v1383
        %v2856 = vunpack.c.l.b16 %v1384
        %v2857 = vunpack.c.l.b16 %v1385
        %v2858 = vunpack.c.l.b16 %v1386
        %v2859 = vunpack.c.l.b16 %v1387
        %v2860 = vunpack.c.l.b16 %v1388
        %v2861 = vunpack.c.l.b16 %v1389
        %v2862 = vunpack.c.l.b16 %v1390
        %v2863 = vpack.c.b16 %v2832, %v2831
        %v2864 = vpack.c.b16 %v2834, %v2833
        %v2865 = vpack.c.b16 %v2836, %v2835
        %v2866 = vpack.c.b16 %v2838, %v2837
        %v2867 = vpack.c.b16 %v2840, %v2839
        %v2868 = vpack.c.b16 %v2842, %v2841
        %v2869 = vpack.c.b16 %v2844, %v2843
        %v2870 = vpack.c.b16 %v2846, %v2845
        %v2871 = vpack.c.b16 %v2848, %v2847
        %v2872 = vpack.c.b16 %v2850, %v2849
        %v2873 = vpack.c.b16 %v2852, %v2851
        %v2874 = vpack.c.b16 %v2854, %v2853
        %v2875 = vpack.c.b16 %v2856, %v2855
        %v2876 = vpack.c.b16 %v2858, %v2857
        %v2877 = vpack.c.b16 %v2860, %v2859
        %v2878 = vpack.c.b16 %v2862, %v2861
        %v2911 = vunpack.c.l.b16 %v1615
        %v2912 = vunpack.c.l.b16 %v1616
        %v2913 = vunpack.c.l.b16 %v1617
        %v2914 = vunpack.c.l.b16 %v1618
        %v2915 = vunpack.c.l.b16 %v1619
        %v2916 = vunpack.c.l.b16 %v1620
        %v2917 = vunpack.c.l.b16 %v1621
        %v2918 = vunpack.c.l.b16 %v1622
        %v2919 = vunpack.c.l.b16 %v1623
        %v2920 = vunpack.c.l.b16 %v1624
        %v2921 = vunpack.c.l.b16 %v1625
        %v2922 = vunpack.c.l.b16 %v1626
        %v2923 = vunpack.c.l.b16 %v1627
        %v2924 = vunpack.c.l.b16 %v1628
        %v2925 = vunpack.c.l.b16 %v1629
        %v2926 = vunpack.c.l.b16 %v1630
        %v2927 = vunpack.c.l.b16 %v1631
        %v2928 = vunpack.c.l.b16 %v1632
        %v2929 = vunpack.c.l.b16 %v1633
        %v2930 = vunpack.c.l.b16 %v1634
        %v2931 = vunpack.c.l.b16 %v1635
        %v2932 = vunpack.c.l.b16 %v1636
        %v2933 = vunpack.c.l.b16 %v1637
        %v2934 = vunpack.c.l.b16 %v1638
        %v2935 = vunpack.c.l.b16 %v1639
        %v2936 = vunpack.c.l.b16 %v1640
        %v2937 = vunpack.c.l.b16 %v1641
        %v2938 = vunpack.c.l.b16 %v1642
        %v2939 = vunpack.c.l.b16 %v1643
        %v2940 = vunpack.c.l.b16 %v1644
        %v2941 = vunpack.c.l.b16 %v1645
        %v2942 = vunpack.c.l.b16 %v1646
        %v2943 = vpack.c.b16 %v2912, %v2911
        %v2944 = vpack.c.b16 %v2914, %v2913
        %v2945 = vpack.c.b16 %v2916, %v2915
        %v2946 = vpack.c.b16 %v2918, %v2917
        %v2947 = vpack.c.b16 %v2920, %v2919
        %v2948 = vpack.c.b16 %v2922, %v2921
        %v2949 = vpack.c.b16 %v2924, %v2923
        %v2950 = vpack.c.b16 %v2926, %v2925
        %v2951 = vpack.c.b16 %v2928, %v2927
        %v2952 = vpack.c.b16 %v2930, %v2929
        %v2953 = vpack.c.b16 %v2932, %v2931
        %v2954 = vpack.c.b16 %v2934, %v2933
        %v2955 = vpack.c.b16 %v2936, %v2935
        %v2956 = vpack.c.b16 %v2938, %v2937
        %v2957 = vpack.c.b16 %v2940, %v2939
        %v2958 = vpack.c.b16 %v2942, %v2941
        %v2991 = vunpack.c.l.b16 %v1871
        %v2992 = vunpack.c.l.b16 %v1872
        %v2993 = vunpack.c.l.b16 %v1873
        %v2994 = vunpack.c.l.b16 %v1874
        %v2995 = vunpack.c.l.b16 %v1875
        %v2996 = vunpack.c.l.b16 %v1876
        %v2997 = vunpack.c.l.b16 %v1877
        %v2998 = vunpack.c.l.b16 %v1878
        %v2999 = vunpack.c.l.b16 %v1879
        %v3000 = vunpack.c.l.b16 %v1880
        %v3001 = vunpack.c.l.b16 %v1881
        %v3002 = vunpack.c.l.b16 %v1882
        %v3003 = vunpack.c.l.b16 %v1883
        %v3004 = vunpack.c.l.b16 %v1884
        %v3005 = vunpack.c.l.b16 %v1885
        %v3006 = vunpack.c.l.b16 %v1886
        %v3007 = vunpack.c.l.b16 %v1887
        %v3008 = vunpack.c.l.b16 %v1888
        %v3009 = vunpack.c.l.b16 %v1889
        %v3010 = vunpack.c.l.b16 %v1890
        %v3011 = vunpack.c.l.b16 %v1891
        %v3012 = vunpack.c.l.b16 %v1892
        %v3013 = vunpack.c.l.b16 %v1893
        %v3014 = vunpack.c.l.b16 %v1894
        %v3015 = vunpack.c.l.b16 %v1895
        %v3016 = vunpack.c.l.b16 %v1896
        %v3017 = vunpack.c.l.b16 %v1897
        %v3018 = vunpack.c.l.b16 %v1898
        %v3019 = vunpack.c.l.b16 %v1899
        %v3020 = vunpack.c.l.b16 %v1900
        %v3021 = vunpack.c.l.b16 %v1901
        %v3022 = vunpack.c.l.b16 %v1902
        %v3023 = vpack.c.b16 %v2992, %v2991
        %v3024 = vpack.c.b16 %v2994, %v2993
        %v3025 = vpack.c.b16 %v2996, %v2995
        %v3026 = vpack.c.b16 %v2998, %v2997
        %v3027 = vpack.c.b16 %v3000, %v2999
        %v3028 = vpack.c.b16 %v3002, %v3001
        %v3029 = vpack.c.b16 %v3004, %v3003
        %v3030 = vpack.c.b16 %v3006, %v3005
        %v3031 = vpack.c.b16 %v3008, %v3007
        %v3032 = vpack.c.b16 %v3010, %v3009
        %v3033 = vpack.c.b16 %v3012, %v3011
        %v3034 = vpack.c.b16 %v3014, %v3013
        %v3035 = vpack.c.b16 %v3016, %v3015
        %v3036 = vpack.c.b16 %v3018, %v3017
        %v3037 = vpack.c.b16 %v3020, %v3019
        %v3038 = vpack.c.b16 %v3022, %v3021
        %v3071 = vunpack.c.l.b16 %v2127
        %v3072 = vunpack.c.l.b16 %v2128
        %v3073 = vunpack.c.l.b16 %v2129
        %v3074 = vunpack.c.l.b16 %v2130
        %v3075 = vunpack.c.l.b16 %v2131
        %v3076 = vunpack.c.l.b16 %v2132
        %v3077 = vunpack.c.l.b16 %v2133
        %v3078 = vunpack.c.l.b16 %v2134
        %v3079 = vunpack.c.l.b16 %v2135
        %v3080 = vunpack.c.l.b16 %v2136
        %v3081 = vunpack.c.l.b16 %v2137
        %v3082 = vunpack.c.l.b16 %v2138
        %v3083 = vunpack.c.l.b16 %v2139
        %v3084 = vunpack.c.l.b16 %v2140
        %v3085 = vunpack.c.l.b16 %v2141
        %v3086 = vunpack.c.l.b16 %v2142
        %v3087 = vunpack.c.l.b16 %v2143
        %v3088 = vunpack.c.l.b16 %v2144
        %v3089 = vunpack.c.l.b16 %v2145
        %v3090 = vunpack.c.l.b16 %v2146
        %v3091 = vunpack.c.l.b16 %v2147
        %v3092 = vunpack.c.l.b16 %v2148
        %v3093 = vunpack.c.l.b16 %v2149
        %v3094 = vunpack.c.l.b16 %v2150
        %v3095 = vunpack.c.l.b16 %v2151
        %v3096 = vunpack.c.l.b16 %v2152
        %v3097 = vunpack.c.l.b16 %v2153
        %v3098 = vunpack.c.l.b16 %v2154
        %v3099 = vunpack.c.l.b16 %v2155
        %v3100 = vunpack.c.l.b16 %v2156
        %v3101 = vunpack.c.l.b16 %v2157
        %v3102 = vunpack.c.l.b16 %v2158
        %v3103 = vpack.c.b16 %v3072, %v3071
        %v3104 = vpack.c.b16 %v3074, %v3073
        %v3105 = vpack.c.b16 %v3076, %v3075
        %v3106 = vpack.c.b16 %v3078, %v3077
        %v3107 = vpack.c.b16 %v3080, %v3079
        %v3108 = vpack.c.b16 %v3082, %v3081
        %v3109 = vpack.c.b16 %v3084, %v3083
        %v3110 = vpack.c.b16 %v3086, %v3085
        %v3111 = vpack.c.b16 %v3088, %v3087
        %v3112 = vpack.c.b16 %v3090, %v3089
        %v3113 = vpack.c.b16 %v3092, %v3091
        %v3114 = vpack.c.b16 %v3094, %v3093
        %v3115 = vpack.c.b16 %v3096, %v3095
        %v3116 = vpack.c.b16 %v3098, %v3097
        %v3117 = vpack.c.b16 %v3100, %v3099
        %v3118 = vpack.c.b16 %v3102, %v3101
        %v3151 = vunpack.c.l.b16 %v2383
        %v3152 = vunpack.c.l.b16 %v2384
        %v3153 = vunpack.c.l.b16 %v2385
        %v3154 = vunpack.c.l.b16 %v2386
        %v3155 = vunpack.c.l.b16 %v2387
        %v3156 = vunpack.c.l.b16 %v2388
        %v3157 = vunpack.c.l.b16 %v2389
        %v3158 = vunpack.c.l.b16 %v2390
        %v3159 = vunpack.c.l.b16 %v2391
        %v3160 = vunpack.c.l.b16 %v2392
        %v3161 = vunpack.c.l.b16 %v2393
        %v3162 = vunpack.c.l.b16 %v2394
        %v3163 = vunpack.c.l.b16 %v2395
        %v3164 = vunpack.c.l.b16 %v2396
        %v3165 = vunpack.c.l.b16 %v2397
        %v3166 = vunpack.c.l.b16 %v2398
        %v3167 = vunpack.c.l.b16 %v2399
        %v3168 = vunpack.c.l.b16 %v2400
        %v3169 = vunpack.c.l.b16 %v2401
        %v3170 = vunpack.c.l.b16 %v2402
        %v3171 = vunpack.c.l.b16 %v2403
        %v3172 = vunpack.c.l.b16 %v2404
        %v3173 = vunpack.c.l.b16 %v2405
        %v3174 = vunpack.c.l.b16 %v2406
        %v3175 = vunpack.c.l.b16 %v2407
        %v3176 = vunpack.c.l.b16 %v2408
        %v3177 = vunpack.c.l.b16 %v2409
        %v3178 = vunpack.c.l.b16 %v2410
        %v3179 = vunpack.c.l.b16 %v2411
        %v3180 = vunpack.c.l.b16 %v2412
        %v3181 = vunpack.c.l.b16 %v2413
        %v3182 = vunpack.c.l.b16 %v2414
        %v3183 = vpack.c.b16 %v3152, %v3151
        %v3184 = vpack.c.b16 %v3154, %v3153
        %v3185 = vpack.c.b16 %v3156, %v3155
        %v3186 = vpack.c.b16 %v3158, %v3157
        %v3187 = vpack.c.b16 %v3160, %v3159
        %v3188 = vpack.c.b16 %v3162, %v3161
        %v3189 = vpack.c.b16 %v3164, %v3163
        %v3190 = vpack.c.b16 %v3166, %v3165
        %v3191 = vpack.c.b16 %v3168, %v3167
        %v3192 = vpack.c.b16 %v3170, %v3169
        %v3193 = vpack.c.b16 %v3172, %v3171
        %v3194 = vpack.c.b16 %v3174, %v3173
        %v3195 = vpack.c.b16 %v3176, %v3175
        %v3196 = vpack.c.b16 %v3178, %v3177
        %v3197 = vpack.c.b16 %v3180, %v3179
        %v3198 = vpack.c.b16 %v3182, %v3181
        %v3231 = vunpack.c.l.b16 %v2607
        %v3232 = vunpack.c.l.b16 %v2608
        %v3233 = vunpack.c.l.b16 %v2609
        %v3234 = vunpack.c.l.b16 %v2610
        %v3235 = vunpack.c.l.b16 %v2611
        %v3236 = vunpack.c.l.b16 %v2612
        %v3237 = vunpack.c.l.b16 %v2613
        %v3238 = vunpack.c.l.b16 %v2614
        %v3239 = vunpack.c.l.b16 %v2615
        %v3240 = vunpack.c.l.b16 %v2616
        %v3241 = vunpack.c.l.b16 %v2617
        %v3242 = vunpack.c.l.b16 %v2618
        %v3243 = vunpack.c.l.b16 %v2619
        %v3244 = vunpack.c.l.b16 %v2620
        %v3245 = vunpack.c.l.b16 %v2621
        %v3246 = vunpack.c.l.b16 %v2622
        %v3247 = vunpack.c.l.b16 %v2623
        %v3248 = vunpack.c.l.b16 %v2624
        %v3249 = vunpack.c.l.b16 %v2625
        %v3250 = vunpack.c.l.b16 %v2626
        %v3251 = vunpack.c.l.b16 %v2627
        %v3252 = vunpack.c.l.b16 %v2628
        %v3253 = vunpack.c.l.b16 %v2629
        %v3254 = vunpack.c.l.b16 %v2630
        %v3255 = vunpack.c.l.b16 %v2631
        %v3256 = vunpack.c.l.b16 %v2632
        %v3257 = vunpack.c.l.b16 %v2633
        %v3258 = vunpack.c.l.b16 %v2634
        %v3259 = vunpack.c.l.b16 %v2635
        %v3260 = vunpack.c.l.b16 %v2636
        %v3261 = vunpack.c.l.b16 %v2637
        %v3262 = vunpack.c.l.b16 %v2638
        %v3263 = vpack.c.b16 %v3232, %v3231
        %v3264 = vpack.c.b16 %v3234, %v3233
        %v3265 = vpack.c.b16 %v3236, %v3235
        %v3266 = vpack.c.b16 %v3238, %v3237
        %v3267 = vpack.c.b16 %v3240, %v3239
        %v3268 = vpack.c.b16 %v3242, %v3241
        %v3269 = vpack.c.b16 %v3244, %v3243
        %v3270 = vpack.c.b16 %v3246, %v3245
        %v3271 = vpack.c.b16 %v3248, %v3247
        %v3272 = vpack.c.b16 %v3250, %v3249
        %v3273 = vpack.c.b16 %v3252, %v3251
        %v3274 = vpack.c.b16 %v3254, %v3253
        %v3275 = vpack.c.b16 %v3256, %v3255
        %v3276 = vpack.c.b16 %v3258, %v3257
        %v3277 = vpack.c.b16 %v3260, %v3259
        %v3278 = vpack.c.b16 %v3262, %v3261
        %v3280 = vperm.slane %v367, 0
        %v3286 = vunpack.c.l.b16 %v363
        %v3287 = vunpack.c.l.b16 %v364
        %v3288 = vunpack.c.l.b16 %v365
        %v3289 = vunpack.c.l.b16 %v366
        %v3290 = vpack.c.b16 %v3287, %v3286
        %v3291 = vpack.c.b16 %v3289, %v3288
        %vm3294 = vcmask 261120
        %v3296 = vsel %vm3294, %v2703, 0
        %v3299 = vsel %vm3294, %v2704, 0
        %v3302 = vsel %vm3294, %v2705, 0
        %v3305 = vsel %vm3294, %v2706, 0
        %v3308 = vsel %vm3294, %v2707, 0
        %v3311 = vsel %vm3294, %v2708, 0
        %v3314 = vsel %vm3294, %v2709, 0
        %v3317 = vsel %vm3294, %v2710, 0
        %v3320 = vsel %vm3294, %v2711, 0
        %v3323 = vsel %vm3294, %v2712, 0
        %v3326 = vsel %vm3294, %v2713, 0
        %v3329 = vsel %vm3294, %v2714, 0
        %v3332 = vsel %vm3294, %v2715, 0
        %v3335 = vsel %vm3294, %v2716, 0
        %v3338 = vsel %vm3294, %v2717, 0
        %v3341 = vsel %vm3294, %v2718, 0
        %v3344 = vsel %vm3294, %v2783, 0
        %v3347 = vsel %vm3294, %v2784, 0
        %v3350 = vsel %vm3294, %v2785, 0
        %v3353 = vsel %vm3294, %v2786, 0
        %v3356 = vsel %vm3294, %v2787, 0
        %v3359 = vsel %vm3294, %v2788, 0
        %v3362 = vsel %vm3294, %v2789, 0
        %v3365 = vsel %vm3294, %v2790, 0
        %v3368 = vsel %vm3294, %v2791, 0
        %v3371 = vsel %vm3294, %v2792, 0
        %v3374 = vsel %vm3294, %v2793, 0
        %v3377 = vsel %vm3294, %v2794, 0
        %v3380 = vsel %vm3294, %v2795, 0
        %v3383 = vsel %vm3294, %v2796, 0
        %v3386 = vsel %vm3294, %v2797, 0
        %v3389 = vsel %vm3294, %v2798, 0
        %v3392 = vsel %vm3294, %v2863, 0
        %v3395 = vsel %vm3294, %v2864, 0
        %v3398 = vsel %vm3294, %v2865, 0
        %v3401 = vsel %vm3294, %v2866, 0
        %v3404 = vsel %vm3294, %v2867, 0
        %v3407 = vsel %vm3294, %v2868, 0
        %v3410 = vsel %vm3294, %v2869, 0
        %v3413 = vsel %vm3294, %v2870, 0
        %v3416 = vsel %vm3294, %v2871, 0
        %v3419 = vsel %vm3294, %v2872, 0
        %v3422 = vsel %vm3294, %v2873, 0
        %v3425 = vsel %vm3294, %v2874, 0
        %v3428 = vsel %vm3294, %v2875, 0
        %v3431 = vsel %vm3294, %v2876, 0
        %v3434 = vsel %vm3294, %v2877, 0
        %v3437 = vsel %vm3294, %v2878, 0
        %v3440 = vsel %vm3294, %v2943, 0
        %v3443 = vsel %vm3294, %v2944, 0
        %v3446 = vsel %vm3294, %v2945, 0
        %v3449 = vsel %vm3294, %v2946, 0
        %v3452 = vsel %vm3294, %v2947, 0
        %v3455 = vsel %vm3294, %v2948, 0
        %v3458 = vsel %vm3294, %v2949, 0
        %v3461 = vsel %vm3294, %v2950, 0
        %v3464 = vsel %vm3294, %v2951, 0
        %v3467 = vsel %vm3294, %v2952, 0
        %v3470 = vsel %vm3294, %v2953, 0
        %v3473 = vsel %vm3294, %v2954, 0
        %v3476 = vsel %vm3294, %v2955, 0
        %v3479 = vsel %vm3294, %v2956, 0
        %v3482 = vsel %vm3294, %v2957, 0
        %v3485 = vsel %vm3294, %v2958, 0
        %v3488 = vsel %vm3294, %v3023, 0
        %v3491 = vsel %vm3294, %v3024, 0
        %v3494 = vsel %vm3294, %v3025, 0
        %v3497 = vsel %vm3294, %v3026, 0
        %v3500 = vsel %vm3294, %v3027, 0
        %v3503 = vsel %vm3294, %v3028, 0
        %v3506 = vsel %vm3294, %v3029, 0
        %v3509 = vsel %vm3294, %v3030, 0
        %v3512 = vsel %vm3294, %v3031, 0
        %v3515 = vsel %vm3294, %v3032, 0
        %v3518 = vsel %vm3294, %v3033, 0
        %v3521 = vsel %vm3294, %v3034, 0
        %v3524 = vsel %vm3294, %v3035, 0
        %v3527 = vsel %vm3294, %v3036, 0
        %v3530 = vsel %vm3294, %v3037, 0
        %v3533 = vsel %vm3294, %v3038, 0
        %v3536 = vsel %vm3294, %v3103, 0
        %v3539 = vsel %vm3294, %v3104, 0
        %v3542 = vsel %vm3294, %v3105, 0
        %v3545 = vsel %vm3294, %v3106, 0
        %v3548 = vsel %vm3294, %v3107, 0
        %v3551 = vsel %vm3294, %v3108, 0
        %v3554 = vsel %vm3294, %v3109, 0
        %v3557 = vsel %vm3294, %v3110, 0
        %v3560 = vsel %vm3294, %v3111, 0
        %v3563 = vsel %vm3294, %v3112, 0
        %v3566 = vsel %vm3294, %v3113, 0
        %v3569 = vsel %vm3294, %v3114, 0
        %v3572 = vsel %vm3294, %v3115, 0
        %v3575 = vsel %vm3294, %v3116, 0
        %v3578 = vsel %vm3294, %v3117, 0
        %v3581 = vsel %vm3294, %v3118, 0
        %v3584 = vsel %vm3294, %v3183, 0
        %v3587 = vsel %vm3294, %v3184, 0
        %v3590 = vsel %vm3294, %v3185, 0
        %v3593 = vsel %vm3294, %v3186, 0
        %v3596 = vsel %vm3294, %v3187, 0
        %v3599 = vsel %vm3294, %v3188, 0
        %v3602 = vsel %vm3294, %v3189, 0
        %v3605 = vsel %vm3294, %v3190, 0
        %v3608 = vsel %vm3294, %v3191, 0
        %v3611 = vsel %vm3294, %v3192, 0
        %v3614 = vsel %vm3294, %v3193, 0
        %v3617 = vsel %vm3294, %v3194, 0
        %v3620 = vsel %vm3294, %v3195, 0
        %v3623 = vsel %vm3294, %v3196, 0
        %v3626 = vsel %vm3294, %v3197, 0
        %v3629 = vsel %vm3294, %v3198, 0
        %v3632 = vsel %vm3294, %v3263, 0
        %v3635 = vsel %vm3294, %v3264, 0
        %v3638 = vsel %vm3294, %v3265, 0
        %v3641 = vsel %vm3294, %v3266, 0
        %v3644 = vsel %vm3294, %v3267, 0
        %v3647 = vsel %vm3294, %v3268, 0
        %v3650 = vsel %vm3294, %v3269, 0
        %v3653 = vsel %vm3294, %v3270, 0
        %v3656 = vsel %vm3294, %v3271, 0
        %v3659 = vsel %vm3294, %v3272, 0
        %v3662 = vsel %vm3294, %v3273, 0
        %v3665 = vsel %vm3294, %v3274, 0
        %v3668 = vsel %vm3294, %v3275, 0
        %v3671 = vsel %vm3294, %v3276, 0
        %v3674 = vsel %vm3294, %v3277, 0
        %v3677 = vsel %vm3294, %v3278, 0
        %3679 = vmatpush.bf16.msra.mxu0 0
        %3680 = vmatpush.bf16.msra.mxu0 0
        %3681 = vmatpush.bf16.msra.mxu0 0
        %3682 = vmatpush.bf16.msra.mxu0 0
        %3683 = vmatpush.bf16.msra.mxu0 0
        %3684 = vmatpush.bf16.msra.mxu0 0
        %3685 = vmatpush.bf16.msra.mxu0 %v3291
        %3686 = vmatpush.bf16.msra.mxu0 %v3290
        %3687 = vmatmul.bf16.gmra.mxu0 %v3296
        %v3688 = vpop.f32.mrf.mxu0
        %v3689 = vadd.f32 %v3280, %v3688
        %v3690 = vpop.f32.mrf.mxu0
        %v3691 = vadd.f32 %v3280, %v3690
        %3692 = vmatmul.bf16.gmra.mxu0 %v3299
        %v3693 = vpop.f32.mrf.mxu0
        %v3694 = vadd.f32 %v3280, %v3693
        %v3695 = vpop.f32.mrf.mxu0
        %v3696 = vadd.f32 %v3280, %v3695
        %3697 = vmatmul.bf16.gmra.mxu0 %v3302
        %v3698 = vpop.f32.mrf.mxu0
        %v3699 = vadd.f32 %v3280, %v3698
        %v3700 = vpop.f32.mrf.mxu0
        %v3701 = vadd.f32 %v3280, %v3700
        %3702 = vmatmul.bf16.gmra.mxu0 %v3305
        %v3703 = vpop.f32.mrf.mxu0
        %v3704 = vadd.f32 %v3280, %v3703
        %v3705 = vpop.f32.mrf.mxu0
        %v3706 = vadd.f32 %v3280, %v3705
        %3707 = vmatmul.bf16.gmra.mxu0 %v3308
        %v3708 = vpop.f32.mrf.mxu0
        %v3709 = vadd.f32 %v3280, %v3708
        %v3710 = vpop.f32.mrf.mxu0
        %v3711 = vadd.f32 %v3280, %v3710
        %3712 = vmatmul.bf16.gmra.mxu0 %v3311
        %v3713 = vpop.f32.mrf.mxu0
        %v3714 = vadd.f32 %v3280, %v3713
        %v3715 = vpop.f32.mrf.mxu0
        %v3716 = vadd.f32 %v3280, %v3715
        %3717 = vmatmul.bf16.gmra.mxu0 %v3314
        %v3718 = vpop.f32.mrf.mxu0
        %v3719 = vadd.f32 %v3280, %v3718
        %v3720 = vpop.f32.mrf.mxu0
        %v3721 = vadd.f32 %v3280, %v3720
        %3722 = vmatmul.bf16.gmra.mxu0 %v3317
        %v3723 = vpop.f32.mrf.mxu0
        %v3724 = vadd.f32 %v3280, %v3723
        %v3725 = vpop.f32.mrf.mxu0
        %v3726 = vadd.f32 %v3280, %v3725
        %3727 = vmatmul.bf16.gmra.mxu0 %v3320
        %v3728 = vpop.f32.mrf.mxu0
        %v3729 = vadd.f32 %v3280, %v3728
        %v3730 = vpop.f32.mrf.mxu0
        %v3731 = vadd.f32 %v3280, %v3730
        %3732 = vmatmul.bf16.gmra.mxu0 %v3323
        %v3733 = vpop.f32.mrf.mxu0
        %v3734 = vadd.f32 %v3280, %v3733
        %v3735 = vpop.f32.mrf.mxu0
        %v3736 = vadd.f32 %v3280, %v3735
        %3737 = vmatmul.bf16.gmra.mxu0 %v3326
        %v3738 = vpop.f32.mrf.mxu0
        %v3739 = vadd.f32 %v3280, %v3738
        %v3740 = vpop.f32.mrf.mxu0
        %v3741 = vadd.f32 %v3280, %v3740
        %3742 = vmatmul.bf16.gmra.mxu0 %v3329
        %v3743 = vpop.f32.mrf.mxu0
        %v3744 = vadd.f32 %v3280, %v3743
        %v3745 = vpop.f32.mrf.mxu0
        %v3746 = vadd.f32 %v3280, %v3745
        %3747 = vmatmul.bf16.gmra.mxu0 %v3332
        %v3748 = vpop.f32.mrf.mxu0
        %v3749 = vadd.f32 %v3280, %v3748
        %v3750 = vpop.f32.mrf.mxu0
        %v3751 = vadd.f32 %v3280, %v3750
        %3752 = vmatmul.bf16.gmra.mxu0 %v3335
        %v3753 = vpop.f32.mrf.mxu0
        %v3754 = vadd.f32 %v3280, %v3753
        %v3755 = vpop.f32.mrf.mxu0
        %v3756 = vadd.f32 %v3280, %v3755
        %3757 = vmatmul.bf16.gmra.mxu0 %v3338
        %v3758 = vpop.f32.mrf.mxu0
        %v3759 = vadd.f32 %v3280, %v3758
        %v3760 = vpop.f32.mrf.mxu0
        %v3761 = vadd.f32 %v3280, %v3760
        %3762 = vmatmul.bf16.gmra.mxu0 %v3341
        %v3763 = vpop.f32.mrf.mxu0
        %v3764 = vadd.f32 %v3280, %v3763
        %v3765 = vpop.f32.mrf.mxu0
        %v3766 = vadd.f32 %v3280, %v3765
        %3767 = vmatmul.bf16.gmra.mxu0 %v3344
        %v3768 = vpop.f32.mrf.mxu0
        %v3769 = vadd.f32 %v3280, %v3768
        %v3770 = vpop.f32.mrf.mxu0
        %v3771 = vadd.f32 %v3280, %v3770
        %3772 = vmatmul.bf16.gmra.mxu0 %v3347
        %v3773 = vpop.f32.mrf.mxu0
        %v3774 = vadd.f32 %v3280, %v3773
        %v3775 = vpop.f32.mrf.mxu0
        %v3776 = vadd.f32 %v3280, %v3775
        %3777 = vmatmul.bf16.gmra.mxu0 %v3350
        %v3778 = vpop.f32.mrf.mxu0
        %v3779 = vadd.f32 %v3280, %v3778
        %v3780 = vpop.f32.mrf.mxu0
        %v3781 = vadd.f32 %v3280, %v3780
        %3782 = vmatmul.bf16.gmra.mxu0 %v3353
        %v3783 = vpop.f32.mrf.mxu0
        %v3784 = vadd.f32 %v3280, %v3783
        %v3785 = vpop.f32.mrf.mxu0
        %v3786 = vadd.f32 %v3280, %v3785
        %3787 = vmatmul.bf16.gmra.mxu0 %v3356
        %v3788 = vpop.f32.mrf.mxu0
        %v3789 = vadd.f32 %v3280, %v3788
        %v3790 = vpop.f32.mrf.mxu0
        %v3791 = vadd.f32 %v3280, %v3790
        %3792 = vmatmul.bf16.gmra.mxu0 %v3359
        %v3793 = vpop.f32.mrf.mxu0
        %v3794 = vadd.f32 %v3280, %v3793
        %v3795 = vpop.f32.mrf.mxu0
        %v3796 = vadd.f32 %v3280, %v3795
        %3797 = vmatmul.bf16.gmra.mxu0 %v3362
        %v3798 = vpop.f32.mrf.mxu0
        %v3799 = vadd.f32 %v3280, %v3798
        %v3800 = vpop.f32.mrf.mxu0
        %v3801 = vadd.f32 %v3280, %v3800
        %3802 = vmatmul.bf16.gmra.mxu0 %v3365
        %v3803 = vpop.f32.mrf.mxu0
        %v3804 = vadd.f32 %v3280, %v3803
        %v3805 = vpop.f32.mrf.mxu0
        %v3806 = vadd.f32 %v3280, %v3805
        %3807 = vmatmul.bf16.gmra.mxu0 %v3368
        %v3808 = vpop.f32.mrf.mxu0
        %v3809 = vadd.f32 %v3280, %v3808
        %v3810 = vpop.f32.mrf.mxu0
        %v3811 = vadd.f32 %v3280, %v3810
        %3812 = vmatmul.bf16.gmra.mxu0 %v3371
        %v3813 = vpop.f32.mrf.mxu0
        %v3814 = vadd.f32 %v3280, %v3813
        %v3815 = vpop.f32.mrf.mxu0
        %v3816 = vadd.f32 %v3280, %v3815
        %3817 = vmatmul.bf16.gmra.mxu0 %v3374
        %v3818 = vpop.f32.mrf.mxu0
        %v3819 = vadd.f32 %v3280, %v3818
        %v3820 = vpop.f32.mrf.mxu0
        %v3821 = vadd.f32 %v3280, %v3820
        %3822 = vmatmul.bf16.gmra.mxu0 %v3377
        %v3823 = vpop.f32.mrf.mxu0
        %v3824 = vadd.f32 %v3280, %v3823
        %v3825 = vpop.f32.mrf.mxu0
        %v3826 = vadd.f32 %v3280, %v3825
        %3827 = vmatmul.bf16.gmra.mxu0 %v3380
        %v3828 = vpop.f32.mrf.mxu0
        %v3829 = vadd.f32 %v3280, %v3828
        %v3830 = vpop.f32.mrf.mxu0
        %v3831 = vadd.f32 %v3280, %v3830
        %3832 = vmatmul.bf16.gmra.mxu0 %v3383
        %v3833 = vpop.f32.mrf.mxu0
        %v3834 = vadd.f32 %v3280, %v3833
        %v3835 = vpop.f32.mrf.mxu0
        %v3836 = vadd.f32 %v3280, %v3835
        %3837 = vmatmul.bf16.gmra.mxu0 %v3386
        %v3838 = vpop.f32.mrf.mxu0
        %v3839 = vadd.f32 %v3280, %v3838
        %v3840 = vpop.f32.mrf.mxu0
        %v3841 = vadd.f32 %v3280, %v3840
        %3842 = vmatmul.bf16.gmra.mxu0 %v3389
        %v3843 = vpop.f32.mrf.mxu0
        %v3844 = vadd.f32 %v3280, %v3843
        %v3845 = vpop.f32.mrf.mxu0
        %v3846 = vadd.f32 %v3280, %v3845
        %3847 = vmatmul.bf16.gmra.mxu0 %v3392
        %v3848 = vpop.f32.mrf.mxu0
        %v3849 = vadd.f32 %v3280, %v3848
        %v3850 = vpop.f32.mrf.mxu0
        %v3851 = vadd.f32 %v3280, %v3850
        %3852 = vmatmul.bf16.gmra.mxu0 %v3395
        %v3853 = vpop.f32.mrf.mxu0
        %v3854 = vadd.f32 %v3280, %v3853
        %v3855 = vpop.f32.mrf.mxu0
        %v3856 = vadd.f32 %v3280, %v3855
        %3857 = vmatmul.bf16.gmra.mxu0 %v3398
        %v3858 = vpop.f32.mrf.mxu0
        %v3859 = vadd.f32 %v3280, %v3858
        %v3860 = vpop.f32.mrf.mxu0
        %v3861 = vadd.f32 %v3280, %v3860
        %3862 = vmatmul.bf16.gmra.mxu0 %v3401
        %v3863 = vpop.f32.mrf.mxu0
        %v3864 = vadd.f32 %v3280, %v3863
        %v3865 = vpop.f32.mrf.mxu0
        %v3866 = vadd.f32 %v3280, %v3865
        %3867 = vmatmul.bf16.gmra.mxu0 %v3404
        %v3868 = vpop.f32.mrf.mxu0
        %v3869 = vadd.f32 %v3280, %v3868
        %v3870 = vpop.f32.mrf.mxu0
        %v3871 = vadd.f32 %v3280, %v3870
        %3872 = vmatmul.bf16.gmra.mxu0 %v3407
        %v3873 = vpop.f32.mrf.mxu0
        %v3874 = vadd.f32 %v3280, %v3873
        %v3875 = vpop.f32.mrf.mxu0
        %v3876 = vadd.f32 %v3280, %v3875
        %3877 = vmatmul.bf16.gmra.mxu0 %v3410
        %v3878 = vpop.f32.mrf.mxu0
        %v3879 = vadd.f32 %v3280, %v3878
        %v3880 = vpop.f32.mrf.mxu0
        %v3881 = vadd.f32 %v3280, %v3880
        %3882 = vmatmul.bf16.gmra.mxu0 %v3413
        %v3883 = vpop.f32.mrf.mxu0
        %v3884 = vadd.f32 %v3280, %v3883
        %v3885 = vpop.f32.mrf.mxu0
        %v3886 = vadd.f32 %v3280, %v3885
        %3887 = vmatmul.bf16.gmra.mxu0 %v3416
        %v3888 = vpop.f32.mrf.mxu0
        %v3889 = vadd.f32 %v3280, %v3888
        %v3890 = vpop.f32.mrf.mxu0
        %v3891 = vadd.f32 %v3280, %v3890
        %3892 = vmatmul.bf16.gmra.mxu0 %v3419
        %v3893 = vpop.f32.mrf.mxu0
        %v3894 = vadd.f32 %v3280, %v3893
        %v3895 = vpop.f32.mrf.mxu0
        %v3896 = vadd.f32 %v3280, %v3895
        %3897 = vmatmul.bf16.gmra.mxu0 %v3422
        %v3898 = vpop.f32.mrf.mxu0
        %v3899 = vadd.f32 %v3280, %v3898
        %v3900 = vpop.f32.mrf.mxu0
        %v3901 = vadd.f32 %v3280, %v3900
        %3902 = vmatmul.bf16.gmra.mxu0 %v3425
        %v3903 = vpop.f32.mrf.mxu0
        %v3904 = vadd.f32 %v3280, %v3903
        %v3905 = vpop.f32.mrf.mxu0
        %v3906 = vadd.f32 %v3280, %v3905
        %3907 = vmatmul.bf16.gmra.mxu0 %v3428
        %v3908 = vpop.f32.mrf.mxu0
        %v3909 = vadd.f32 %v3280, %v3908
        %v3910 = vpop.f32.mrf.mxu0
        %v3911 = vadd.f32 %v3280, %v3910
        %3912 = vmatmul.bf16.gmra.mxu0 %v3431
        %v3913 = vpop.f32.mrf.mxu0
        %v3914 = vadd.f32 %v3280, %v3913
        %v3915 = vpop.f32.mrf.mxu0
        %v3916 = vadd.f32 %v3280, %v3915
        %3917 = vmatmul.bf16.gmra.mxu0 %v3434
        %v3918 = vpop.f32.mrf.mxu0
        %v3919 = vadd.f32 %v3280, %v3918
        %v3920 = vpop.f32.mrf.mxu0
        %v3921 = vadd.f32 %v3280, %v3920
        %3922 = vmatmul.bf16.gmra.mxu0 %v3437
        %v3923 = vpop.f32.mrf.mxu0
        %v3924 = vadd.f32 %v3280, %v3923
        %v3925 = vpop.f32.mrf.mxu0
        %v3926 = vadd.f32 %v3280, %v3925
        %3927 = vmatmul.bf16.gmra.mxu0 %v3440
        %v3928 = vpop.f32.mrf.mxu0
        %v3929 = vadd.f32 %v3280, %v3928
        %v3930 = vpop.f32.mrf.mxu0
        %v3931 = vadd.f32 %v3280, %v3930
        %3932 = vmatmul.bf16.gmra.mxu0 %v3443
        %v3933 = vpop.f32.mrf.mxu0
        %v3934 = vadd.f32 %v3280, %v3933
        %v3935 = vpop.f32.mrf.mxu0
        %v3936 = vadd.f32 %v3280, %v3935
        %3937 = vmatmul.bf16.gmra.mxu0 %v3446
        %v3938 = vpop.f32.mrf.mxu0
        %v3939 = vadd.f32 %v3280, %v3938
        %v3940 = vpop.f32.mrf.mxu0
        %v3941 = vadd.f32 %v3280, %v3940
        %3942 = vmatmul.bf16.gmra.mxu0 %v3449
        %v3943 = vpop.f32.mrf.mxu0
        %v3944 = vadd.f32 %v3280, %v3943
        %v3945 = vpop.f32.mrf.mxu0
        %v3946 = vadd.f32 %v3280, %v3945
        %3947 = vmatmul.bf16.gmra.mxu0 %v3452
        %v3948 = vpop.f32.mrf.mxu0
        %v3949 = vadd.f32 %v3280, %v3948
        %v3950 = vpop.f32.mrf.mxu0
        %v3951 = vadd.f32 %v3280, %v3950
        %3952 = vmatmul.bf16.gmra.mxu0 %v3455
        %v3953 = vpop.f32.mrf.mxu0
        %v3954 = vadd.f32 %v3280, %v3953
        %v3955 = vpop.f32.mrf.mxu0
        %v3956 = vadd.f32 %v3280, %v3955
        %3957 = vmatmul.bf16.gmra.mxu0 %v3458
        %v3958 = vpop.f32.mrf.mxu0
        %v3959 = vadd.f32 %v3280, %v3958
        %v3960 = vpop.f32.mrf.mxu0
        %v3961 = vadd.f32 %v3280, %v3960
        %3962 = vmatmul.bf16.gmra.mxu0 %v3461
        %v3963 = vpop.f32.mrf.mxu0
        %v3964 = vadd.f32 %v3280, %v3963
        %v3965 = vpop.f32.mrf.mxu0
        %v3966 = vadd.f32 %v3280, %v3965
        %3967 = vmatmul.bf16.gmra.mxu0 %v3464
        %v3968 = vpop.f32.mrf.mxu0
        %v3969 = vadd.f32 %v3280, %v3968
        %v3970 = vpop.f32.mrf.mxu0
        %v3971 = vadd.f32 %v3280, %v3970
        %3972 = vmatmul.bf16.gmra.mxu0 %v3467
        %v3973 = vpop.f32.mrf.mxu0
        %v3974 = vadd.f32 %v3280, %v3973
        %v3975 = vpop.f32.mrf.mxu0
        %v3976 = vadd.f32 %v3280, %v3975
        %3977 = vmatmul.bf16.gmra.mxu0 %v3470
        %v3978 = vpop.f32.mrf.mxu0
        %v3979 = vadd.f32 %v3280, %v3978
        %v3980 = vpop.f32.mrf.mxu0
        %v3981 = vadd.f32 %v3280, %v3980
        %3982 = vmatmul.bf16.gmra.mxu0 %v3473
        %v3983 = vpop.f32.mrf.mxu0
        %v3984 = vadd.f32 %v3280, %v3983
        %v3985 = vpop.f32.mrf.mxu0
        %v3986 = vadd.f32 %v3280, %v3985
        %3987 = vmatmul.bf16.gmra.mxu0 %v3476
        %v3988 = vpop.f32.mrf.mxu0
        %v3989 = vadd.f32 %v3280, %v3988
        %v3990 = vpop.f32.mrf.mxu0
        %v3991 = vadd.f32 %v3280, %v3990
        %3992 = vmatmul.bf16.gmra.mxu0 %v3479
        %v3993 = vpop.f32.mrf.mxu0
        %v3994 = vadd.f32 %v3280, %v3993
        %v3995 = vpop.f32.mrf.mxu0
        %v3996 = vadd.f32 %v3280, %v3995
        %3997 = vmatmul.bf16.gmra.mxu0 %v3482
        %v3998 = vpop.f32.mrf.mxu0
        %v3999 = vadd.f32 %v3280, %v3998
        %v4000 = vpop.f32.mrf.mxu0
        %v4001 = vadd.f32 %v3280, %v4000
        %4002 = vmatmul.bf16.gmra.mxu0 %v3485
        %v4003 = vpop.f32.mrf.mxu0
        %v4004 = vadd.f32 %v3280, %v4003
        %v4005 = vpop.f32.mrf.mxu0
        %v4006 = vadd.f32 %v3280, %v4005
        %4007 = vmatmul.bf16.gmra.mxu0 %v3488
        %v4008 = vpop.f32.mrf.mxu0
        %v4009 = vadd.f32 %v3280, %v4008
        %v4010 = vpop.f32.mrf.mxu0
        %v4011 = vadd.f32 %v3280, %v4010
        %4012 = vmatmul.bf16.gmra.mxu0 %v3491
        %v4013 = vpop.f32.mrf.mxu0
        %v4014 = vadd.f32 %v3280, %v4013
        %v4015 = vpop.f32.mrf.mxu0
        %v4016 = vadd.f32 %v3280, %v4015
        %4017 = vmatmul.bf16.gmra.mxu0 %v3494
        %v4018 = vpop.f32.mrf.mxu0
        %v4019 = vadd.f32 %v3280, %v4018
        %v4020 = vpop.f32.mrf.mxu0
        %v4021 = vadd.f32 %v3280, %v4020
        %4022 = vmatmul.bf16.gmra.mxu0 %v3497
        %v4023 = vpop.f32.mrf.mxu0
        %v4024 = vadd.f32 %v3280, %v4023
        %v4025 = vpop.f32.mrf.mxu0
        %v4026 = vadd.f32 %v3280, %v4025
        %4027 = vmatmul.bf16.gmra.mxu0 %v3500
        %v4028 = vpop.f32.mrf.mxu0
        %v4029 = vadd.f32 %v3280, %v4028
        %v4030 = vpop.f32.mrf.mxu0
        %v4031 = vadd.f32 %v3280, %v4030
        %4032 = vmatmul.bf16.gmra.mxu0 %v3503
        %v4033 = vpop.f32.mrf.mxu0
        %v4034 = vadd.f32 %v3280, %v4033
        %v4035 = vpop.f32.mrf.mxu0
        %v4036 = vadd.f32 %v3280, %v4035
        %4037 = vmatmul.bf16.gmra.mxu0 %v3506
        %v4038 = vpop.f32.mrf.mxu0
        %v4039 = vadd.f32 %v3280, %v4038
        %v4040 = vpop.f32.mrf.mxu0
        %v4041 = vadd.f32 %v3280, %v4040
        %4042 = vmatmul.bf16.gmra.mxu0 %v3509
        %v4043 = vpop.f32.mrf.mxu0
        %v4044 = vadd.f32 %v3280, %v4043
        %v4045 = vpop.f32.mrf.mxu0
        %v4046 = vadd.f32 %v3280, %v4045
        %4047 = vmatmul.bf16.gmra.mxu0 %v3512
        %v4048 = vpop.f32.mrf.mxu0
        %v4049 = vadd.f32 %v3280, %v4048
        %v4050 = vpop.f32.mrf.mxu0
        %v4051 = vadd.f32 %v3280, %v4050
        %4052 = vmatmul.bf16.gmra.mxu0 %v3515
        %v4053 = vpop.f32.mrf.mxu0
        %v4054 = vadd.f32 %v3280, %v4053
        %v4055 = vpop.f32.mrf.mxu0
        %v4056 = vadd.f32 %v3280, %v4055
        %4057 = vmatmul.bf16.gmra.mxu0 %v3518
        %v4058 = vpop.f32.mrf.mxu0
        %v4059 = vadd.f32 %v3280, %v4058
        %v4060 = vpop.f32.mrf.mxu0
        %v4061 = vadd.f32 %v3280, %v4060
        %4062 = vmatmul.bf16.gmra.mxu0 %v3521
        %v4063 = vpop.f32.mrf.mxu0
        %v4064 = vadd.f32 %v3280, %v4063
        %v4065 = vpop.f32.mrf.mxu0
        %v4066 = vadd.f32 %v3280, %v4065
        %4067 = vmatmul.bf16.gmra.mxu0 %v3524
        %v4068 = vpop.f32.mrf.mxu0
        %v4069 = vadd.f32 %v3280, %v4068
        %v4070 = vpop.f32.mrf.mxu0
        %v4071 = vadd.f32 %v3280, %v4070
        %4072 = vmatmul.bf16.gmra.mxu0 %v3527
        %v4073 = vpop.f32.mrf.mxu0
        %v4074 = vadd.f32 %v3280, %v4073
        %v4075 = vpop.f32.mrf.mxu0
        %v4076 = vadd.f32 %v3280, %v4075
        %4077 = vmatmul.bf16.gmra.mxu0 %v3530
        %v4078 = vpop.f32.mrf.mxu0
        %v4079 = vadd.f32 %v3280, %v4078
        %v4080 = vpop.f32.mrf.mxu0
        %v4081 = vadd.f32 %v3280, %v4080
        %4082 = vmatmul.bf16.gmra.mxu0 %v3533
        %v4083 = vpop.f32.mrf.mxu0
        %v4084 = vadd.f32 %v3280, %v4083
        %v4085 = vpop.f32.mrf.mxu0
        %v4086 = vadd.f32 %v3280, %v4085
        %4087 = vmatmul.bf16.gmra.mxu0 %v3536
        %v4088 = vpop.f32.mrf.mxu0
        %v4089 = vadd.f32 %v3280, %v4088
        %v4090 = vpop.f32.mrf.mxu0
        %v4091 = vadd.f32 %v3280, %v4090
        %4092 = vmatmul.bf16.gmra.mxu0 %v3539
        %v4093 = vpop.f32.mrf.mxu0
        %v4094 = vadd.f32 %v3280, %v4093
        %v4095 = vpop.f32.mrf.mxu0
        %v4096 = vadd.f32 %v3280, %v4095
        %4097 = vmatmul.bf16.gmra.mxu0 %v3542
        %v4098 = vpop.f32.mrf.mxu0
        %v4099 = vadd.f32 %v3280, %v4098
        %v4100 = vpop.f32.mrf.mxu0
        %v4101 = vadd.f32 %v3280, %v4100
        %4102 = vmatmul.bf16.gmra.mxu0 %v3545
        %v4103 = vpop.f32.mrf.mxu0
        %v4104 = vadd.f32 %v3280, %v4103
        %v4105 = vpop.f32.mrf.mxu0
        %v4106 = vadd.f32 %v3280, %v4105
        %4107 = vmatmul.bf16.gmra.mxu0 %v3548
        %v4108 = vpop.f32.mrf.mxu0
        %v4109 = vadd.f32 %v3280, %v4108
        %v4110 = vpop.f32.mrf.mxu0
        %v4111 = vadd.f32 %v3280, %v4110
        %4112 = vmatmul.bf16.gmra.mxu0 %v3551
        %v4113 = vpop.f32.mrf.mxu0
        %v4114 = vadd.f32 %v3280, %v4113
        %v4115 = vpop.f32.mrf.mxu0
        %v4116 = vadd.f32 %v3280, %v4115
        %4117 = vmatmul.bf16.gmra.mxu0 %v3554
        %v4118 = vpop.f32.mrf.mxu0
        %v4119 = vadd.f32 %v3280, %v4118
        %v4120 = vpop.f32.mrf.mxu0
        %v4121 = vadd.f32 %v3280, %v4120
        %4122 = vmatmul.bf16.gmra.mxu0 %v3557
        %v4123 = vpop.f32.mrf.mxu0
        %v4124 = vadd.f32 %v3280, %v4123
        %v4125 = vpop.f32.mrf.mxu0
        %v4126 = vadd.f32 %v3280, %v4125
        %4127 = vmatmul.bf16.gmra.mxu0 %v3560
        %v4128 = vpop.f32.mrf.mxu0
        %v4129 = vadd.f32 %v3280, %v4128
        %v4130 = vpop.f32.mrf.mxu0
        %v4131 = vadd.f32 %v3280, %v4130
        %4132 = vmatmul.bf16.gmra.mxu0 %v3563
        %v4133 = vpop.f32.mrf.mxu0
        %v4134 = vadd.f32 %v3280, %v4133
        %v4135 = vpop.f32.mrf.mxu0
        %v4136 = vadd.f32 %v3280, %v4135
        %4137 = vmatmul.bf16.gmra.mxu0 %v3566
        %v4138 = vpop.f32.mrf.mxu0
        %v4139 = vadd.f32 %v3280, %v4138
        %v4140 = vpop.f32.mrf.mxu0
        %v4141 = vadd.f32 %v3280, %v4140
        %4142 = vmatmul.bf16.gmra.mxu0 %v3569
        %v4143 = vpop.f32.mrf.mxu0
        %v4144 = vadd.f32 %v3280, %v4143
        %v4145 = vpop.f32.mrf.mxu0
        %v4146 = vadd.f32 %v3280, %v4145
        %4147 = vmatmul.bf16.gmra.mxu0 %v3572
        %v4148 = vpop.f32.mrf.mxu0
        %v4149 = vadd.f32 %v3280, %v4148
        %v4150 = vpop.f32.mrf.mxu0
        %v4151 = vadd.f32 %v3280, %v4150
        %4152 = vmatmul.bf16.gmra.mxu0 %v3575
        %v4153 = vpop.f32.mrf.mxu0
        %v4154 = vadd.f32 %v3280, %v4153
        %v4155 = vpop.f32.mrf.mxu0
        %v4156 = vadd.f32 %v3280, %v4155
        %4157 = vmatmul.bf16.gmra.mxu0 %v3578
        %v4158 = vpop.f32.mrf.mxu0
        %v4159 = vadd.f32 %v3280, %v4158
        %v4160 = vpop.f32.mrf.mxu0
        %v4161 = vadd.f32 %v3280, %v4160
        %4162 = vmatmul.bf16.gmra.mxu0 %v3581
        %v4163 = vpop.f32.mrf.mxu0
        %v4164 = vadd.f32 %v3280, %v4163
        %v4165 = vpop.f32.mrf.mxu0
        %v4166 = vadd.f32 %v3280, %v4165
        %4167 = vmatmul.bf16.gmra.mxu0 %v3584
        %v4168 = vpop.f32.mrf.mxu0
        %v4169 = vadd.f32 %v3280, %v4168
        %v4170 = vpop.f32.mrf.mxu0
        %v4171 = vadd.f32 %v3280, %v4170
        %4172 = vmatmul.bf16.gmra.mxu0 %v3587
        %v4173 = vpop.f32.mrf.mxu0
        %v4174 = vadd.f32 %v3280, %v4173
        %v4175 = vpop.f32.mrf.mxu0
        %v4176 = vadd.f32 %v3280, %v4175
        %4177 = vmatmul.bf16.gmra.mxu0 %v3590
        %v4178 = vpop.f32.mrf.mxu0
        %v4179 = vadd.f32 %v3280, %v4178
        %v4180 = vpop.f32.mrf.mxu0
        %v4181 = vadd.f32 %v3280, %v4180
        %4182 = vmatmul.bf16.gmra.mxu0 %v3593
        %v4183 = vpop.f32.mrf.mxu0
        %v4184 = vadd.f32 %v3280, %v4183
        %v4185 = vpop.f32.mrf.mxu0
        %v4186 = vadd.f32 %v3280, %v4185
        %4187 = vmatmul.bf16.gmra.mxu0 %v3596
        %v4188 = vpop.f32.mrf.mxu0
        %v4189 = vadd.f32 %v3280, %v4188
        %v4190 = vpop.f32.mrf.mxu0
        %v4191 = vadd.f32 %v3280, %v4190
        %4192 = vmatmul.bf16.gmra.mxu0 %v3599
        %v4193 = vpop.f32.mrf.mxu0
        %v4194 = vadd.f32 %v3280, %v4193
        %v4195 = vpop.f32.mrf.mxu0
        %v4196 = vadd.f32 %v3280, %v4195
        %4197 = vmatmul.bf16.gmra.mxu0 %v3602
        %v4198 = vpop.f32.mrf.mxu0
        %v4199 = vadd.f32 %v3280, %v4198
        %v4200 = vpop.f32.mrf.mxu0
        %v4201 = vadd.f32 %v3280, %v4200
        %4202 = vmatmul.bf16.gmra.mxu0 %v3605
        %v4203 = vpop.f32.mrf.mxu0
        %v4204 = vadd.f32 %v3280, %v4203
        %v4205 = vpop.f32.mrf.mxu0
        %v4206 = vadd.f32 %v3280, %v4205
        %4207 = vmatmul.bf16.gmra.mxu0 %v3608
        %v4208 = vpop.f32.mrf.mxu0
        %v4209 = vadd.f32 %v3280, %v4208
        %v4210 = vpop.f32.mrf.mxu0
        %v4211 = vadd.f32 %v3280, %v4210
        %4212 = vmatmul.bf16.gmra.mxu0 %v3611
        %v4213 = vpop.f32.mrf.mxu0
        %v4214 = vadd.f32 %v3280, %v4213
        %v4215 = vpop.f32.mrf.mxu0
        %v4216 = vadd.f32 %v3280, %v4215
        %4217 = vmatmul.bf16.gmra.mxu0 %v3614
        %v4218 = vpop.f32.mrf.mxu0
        %v4219 = vadd.f32 %v3280, %v4218
        %v4220 = vpop.f32.mrf.mxu0
        %v4221 = vadd.f32 %v3280, %v4220
        %4222 = vmatmul.bf16.gmra.mxu0 %v3617
        %v4223 = vpop.f32.mrf.mxu0
        %v4224 = vadd.f32 %v3280, %v4223
        %v4225 = vpop.f32.mrf.mxu0
        %v4226 = vadd.f32 %v3280, %v4225
        %4227 = vmatmul.bf16.gmra.mxu0 %v3620
        %v4228 = vpop.f32.mrf.mxu0
        %v4229 = vadd.f32 %v3280, %v4228
        %v4230 = vpop.f32.mrf.mxu0
        %v4231 = vadd.f32 %v3280, %v4230
        %4232 = vmatmul.bf16.gmra.mxu0 %v3623
        %v4233 = vpop.f32.mrf.mxu0
        %v4234 = vadd.f32 %v3280, %v4233
        %v4235 = vpop.f32.mrf.mxu0
        %v4236 = vadd.f32 %v3280, %v4235
        %4237 = vmatmul.bf16.gmra.mxu0 %v3626
        %v4238 = vpop.f32.mrf.mxu0
        %v4239 = vadd.f32 %v3280, %v4238
        %v4240 = vpop.f32.mrf.mxu0
        %v4241 = vadd.f32 %v3280, %v4240
        %4242 = vmatmul.bf16.gmra.mxu0 %v3629
        %v4243 = vpop.f32.mrf.mxu0
        %v4244 = vadd.f32 %v3280, %v4243
        %v4245 = vpop.f32.mrf.mxu0
        %v4246 = vadd.f32 %v3280, %v4245
        %4247 = vmatmul.bf16.gmra.mxu0 %v3632
        %v4248 = vpop.f32.mrf.mxu0
        %v4249 = vadd.f32 %v3280, %v4248
        %v4250 = vpop.f32.mrf.mxu0
        %v4251 = vadd.f32 %v3280, %v4250
        %4252 = vmatmul.bf16.gmra.mxu0 %v3635
        %v4253 = vpop.f32.mrf.mxu0
        %v4254 = vadd.f32 %v3280, %v4253
        %v4255 = vpop.f32.mrf.mxu0
        %v4256 = vadd.f32 %v3280, %v4255
        %4257 = vmatmul.bf16.gmra.mxu0 %v3638
        %v4258 = vpop.f32.mrf.mxu0
        %v4259 = vadd.f32 %v3280, %v4258
        %v4260 = vpop.f32.mrf.mxu0
        %v4261 = vadd.f32 %v3280, %v4260
        %4262 = vmatmul.bf16.gmra.mxu0 %v3641
        %v4263 = vpop.f32.mrf.mxu0
        %v4264 = vadd.f32 %v3280, %v4263
        %v4265 = vpop.f32.mrf.mxu0
        %v4266 = vadd.f32 %v3280, %v4265
        %4267 = vmatmul.bf16.gmra.mxu0 %v3644
        %v4268 = vpop.f32.mrf.mxu0
        %v4269 = vadd.f32 %v3280, %v4268
        %v4270 = vpop.f32.mrf.mxu0
        %v4271 = vadd.f32 %v3280, %v4270
        %4272 = vmatmul.bf16.gmra.mxu0 %v3647
        %v4273 = vpop.f32.mrf.mxu0
        %v4274 = vadd.f32 %v3280, %v4273
        %v4275 = vpop.f32.mrf.mxu0
        %v4276 = vadd.f32 %v3280, %v4275
        %4277 = vmatmul.bf16.gmra.mxu0 %v3650
        %v4278 = vpop.f32.mrf.mxu0
        %v4279 = vadd.f32 %v3280, %v4278
        %v4280 = vpop.f32.mrf.mxu0
        %v4281 = vadd.f32 %v3280, %v4280
        %4282 = vmatmul.bf16.gmra.mxu0 %v3653
        %v4283 = vpop.f32.mrf.mxu0
        %v4284 = vadd.f32 %v3280, %v4283
        %v4285 = vpop.f32.mrf.mxu0
        %v4286 = vadd.f32 %v3280, %v4285
        %4287 = vmatmul.bf16.gmra.mxu0 %v3656
        %v4288 = vpop.f32.mrf.mxu0
        %v4289 = vadd.f32 %v3280, %v4288
        %v4290 = vpop.f32.mrf.mxu0
        %v4291 = vadd.f32 %v3280, %v4290
        %4292 = vmatmul.bf16.gmra.mxu0 %v3659
        %v4293 = vpop.f32.mrf.mxu0
        %v4294 = vadd.f32 %v3280, %v4293
        %v4295 = vpop.f32.mrf.mxu0
        %v4296 = vadd.f32 %v3280, %v4295
        %4297 = vmatmul.bf16.gmra.mxu0 %v3662
        %v4298 = vpop.f32.mrf.mxu0
        %v4299 = vadd.f32 %v3280, %v4298
        %v4300 = vpop.f32.mrf.mxu0
        %v4301 = vadd.f32 %v3280, %v4300
        %4302 = vmatmul.bf16.gmra.mxu0 %v3665
        %v4303 = vpop.f32.mrf.mxu0
        %v4304 = vadd.f32 %v3280, %v4303
        %v4305 = vpop.f32.mrf.mxu0
        %v4306 = vadd.f32 %v3280, %v4305
        %4307 = vmatmul.bf16.gmra.mxu0 %v3668
        %v4308 = vpop.f32.mrf.mxu0
        %v4309 = vadd.f32 %v3280, %v4308
        %v4310 = vpop.f32.mrf.mxu0
        %v4311 = vadd.f32 %v3280, %v4310
        %4312 = vmatmul.bf16.gmra.mxu0 %v3671
        %v4313 = vpop.f32.mrf.mxu0
        %v4314 = vadd.f32 %v3280, %v4313
        %v4315 = vpop.f32.mrf.mxu0
        %v4316 = vadd.f32 %v3280, %v4315
        %4317 = vmatmul.bf16.gmra.mxu0 %v3674
        %v4318 = vpop.f32.mrf.mxu0
        %v4319 = vadd.f32 %v3280, %v4318
        %v4320 = vpop.f32.mrf.mxu0
        %v4321 = vadd.f32 %v3280, %v4320
        %4322 = vmatmul.bf16.gmra.mxu0 %v3677
        %v4323 = vpop.f32.mrf.mxu0
        %v4324 = vadd.f32 %v3280, %v4323
        %v4325 = vpop.f32.mrf.mxu0
        %v4326 = vadd.f32 %v3280, %v4325
        %4327 = vdwg.mxu0
        %v4328 = vmax.f32 %v3689, 0.0
        %v4329 = vmax.f32 %v3691, 0.0
        %v4330 = vmax.f32 %v3694, 0.0
        %v4331 = vmax.f32 %v3696, 0.0
        %v4332 = vmax.f32 %v3699, 0.0
        %v4333 = vmax.f32 %v3701, 0.0
        %v4334 = vmax.f32 %v3704, 0.0
        %v4335 = vmax.f32 %v3706, 0.0
        %v4336 = vmax.f32 %v3709, 0.0
        %v4337 = vmax.f32 %v3711, 0.0
        %v4338 = vmax.f32 %v3714, 0.0
        %v4339 = vmax.f32 %v3716, 0.0
        %v4340 = vmax.f32 %v3719, 0.0
        %v4341 = vmax.f32 %v3721, 0.0
        %v4342 = vmax.f32 %v3724, 0.0
        %v4343 = vmax.f32 %v3726, 0.0
        %v4344 = vmax.f32 %v3729, 0.0
        %v4345 = vmax.f32 %v3731, 0.0
        %v4346 = vmax.f32 %v3734, 0.0
        %v4347 = vmax.f32 %v3736, 0.0
        %v4348 = vmax.f32 %v3739, 0.0
        %v4349 = vmax.f32 %v3741, 0.0
        %v4350 = vmax.f32 %v3744, 0.0
        %v4351 = vmax.f32 %v3746, 0.0
        %v4352 = vmax.f32 %v3749, 0.0
        %v4353 = vmax.f32 %v3751, 0.0
        %v4354 = vmax.f32 %v3754, 0.0
        %v4355 = vmax.f32 %v3756, 0.0
        %v4356 = vmax.f32 %v3759, 0.0
        %v4357 = vmax.f32 %v3761, 0.0
        %v4358 = vmax.f32 %v3764, 0.0
        %v4359 = vmax.f32 %v3766, 0.0
        %v4360 = vmax.f32 %v3769, 0.0
        %v4361 = vmax.f32 %v3771, 0.0
        %v4362 = vmax.f32 %v3774, 0.0
        %v4363 = vmax.f32 %v3776, 0.0
        %v4364 = vmax.f32 %v3779, 0.0
        %v4365 = vmax.f32 %v3781, 0.0
        %v4366 = vmax.f32 %v3784, 0.0
        %v4367 = vmax.f32 %v3786, 0.0
        %v4368 = vmax.f32 %v3789, 0.0
        %v4369 = vmax.f32 %v3791, 0.0
        %v4370 = vmax.f32 %v3794, 0.0
        %v4371 = vmax.f32 %v3796, 0.0
        %v4372 = vmax.f32 %v3799, 0.0
        %v4373 = vmax.f32 %v3801, 0.0
        %v4374 = vmax.f32 %v3804, 0.0
        %v4375 = vmax.f32 %v3806, 0.0
        %v4376 = vmax.f32 %v3809, 0.0
        %v4377 = vmax.f32 %v3811, 0.0
        %v4378 = vmax.f32 %v3814, 0.0
        %v4379 = vmax.f32 %v3816, 0.0
        %v4380 = vmax.f32 %v3819, 0.0
        %v4381 = vmax.f32 %v3821, 0.0
        %v4382 = vmax.f32 %v3824, 0.0
        %v4383 = vmax.f32 %v3826, 0.0
        %v4384 = vmax.f32 %v3829, 0.0
        %v4385 = vmax.f32 %v3831, 0.0
        %v4386 = vmax.f32 %v3834, 0.0
        %v4387 = vmax.f32 %v3836, 0.0
        %v4388 = vmax.f32 %v3839, 0.0
        %v4389 = vmax.f32 %v3841, 0.0
        %v4390 = vmax.f32 %v3844, 0.0
        %v4391 = vmax.f32 %v3846, 0.0
        %v4392 = vmax.f32 %v3849, 0.0
        %v4393 = vmax.f32 %v3851, 0.0
        %v4394 = vmax.f32 %v3854, 0.0
        %v4395 = vmax.f32 %v3856, 0.0
        %v4396 = vmax.f32 %v3859, 0.0
        %v4397 = vmax.f32 %v3861, 0.0
        %v4398 = vmax.f32 %v3864, 0.0
        %v4399 = vmax.f32 %v3866, 0.0
        %v4400 = vmax.f32 %v3869, 0.0
        %v4401 = vmax.f32 %v3871, 0.0
        %v4402 = vmax.f32 %v3874, 0.0
        %v4403 = vmax.f32 %v3876, 0.0
        %v4404 = vmax.f32 %v3879, 0.0
        %v4405 = vmax.f32 %v3881, 0.0
        %v4406 = vmax.f32 %v3884, 0.0
        %v4407 = vmax.f32 %v3886, 0.0
        %v4408 = vmax.f32 %v3889, 0.0
        %v4409 = vmax.f32 %v3891, 0.0
        %v4410 = vmax.f32 %v3894, 0.0
        %v4411 = vmax.f32 %v3896, 0.0
        %v4412 = vmax.f32 %v3899, 0.0
        %v4413 = vmax.f32 %v3901, 0.0
        %v4414 = vmax.f32 %v3904, 0.0
        %v4415 = vmax.f32 %v3906, 0.0
        %v4416 = vmax.f32 %v3909, 0.0
        %v4417 = vmax.f32 %v3911, 0.0
        %v4418 = vmax.f32 %v3914, 0.0
        %v4419 = vmax.f32 %v3916, 0.0
        %v4420 = vmax.f32 %v3919, 0.0
        %v4421 = vmax.f32 %v3921, 0.0
        %v4422 = vmax.f32 %v3924, 0.0
        %v4423 = vmax.f32 %v3926, 0.0
        %v4424 = vmax.f32 %v3929, 0.0
        %v4425 = vmax.f32 %v3931, 0.0
        %v4426 = vmax.f32 %v3934, 0.0
        %v4427 = vmax.f32 %v3936, 0.0
        %v4428 = vmax.f32 %v3939, 0.0
        %v4429 = vmax.f32 %v3941, 0.0
        %v4430 = vmax.f32 %v3944, 0.0
        %v4431 = vmax.f32 %v3946, 0.0
        %v4432 = vmax.f32 %v3949, 0.0
        %v4433 = vmax.f32 %v3951, 0.0
        %v4434 = vmax.f32 %v3954, 0.0
        %v4435 = vmax.f32 %v3956, 0.0
        %v4436 = vmax.f32 %v3959, 0.0
        %v4437 = vmax.f32 %v3961, 0.0
        %v4438 = vmax.f32 %v3964, 0.0
        %v4439 = vmax.f32 %v3966, 0.0
        %v4440 = vmax.f32 %v3969, 0.0
        %v4441 = vmax.f32 %v3971, 0.0
        %v4442 = vmax.f32 %v3974, 0.0
        %v4443 = vmax.f32 %v3976, 0.0
        %v4444 = vmax.f32 %v3979, 0.0
        %v4445 = vmax.f32 %v3981, 0.0
        %v4446 = vmax.f32 %v3984, 0.0
        %v4447 = vmax.f32 %v3986, 0.0
        %v4448 = vmax.f32 %v3989, 0.0
        %v4449 = vmax.f32 %v3991, 0.0
        %v4450 = vmax.f32 %v3994, 0.0
        %v4451 = vmax.f32 %v3996, 0.0
        %v4452 = vmax.f32 %v3999, 0.0
        %v4453 = vmax.f32 %v4001, 0.0
        %v4454 = vmax.f32 %v4004, 0.0
        %v4455 = vmax.f32 %v4006, 0.0
        %v4456 = vmax.f32 %v4009, 0.0
        %v4457 = vmax.f32 %v4011, 0.0
        %v4458 = vmax.f32 %v4014, 0.0
        %v4459 = vmax.f32 %v4016, 0.0
        %v4460 = vmax.f32 %v4019, 0.0
        %v4461 = vmax.f32 %v4021, 0.0
        %v4462 = vmax.f32 %v4024, 0.0
        %v4463 = vmax.f32 %v4026, 0.0
        %v4464 = vmax.f32 %v4029, 0.0
        %v4465 = vmax.f32 %v4031, 0.0
        %v4466 = vmax.f32 %v4034, 0.0
        %v4467 = vmax.f32 %v4036, 0.0
        %v4468 = vmax.f32 %v4039, 0.0
        %v4469 = vmax.f32 %v4041, 0.0
        %v4470 = vmax.f32 %v4044, 0.0
        %v4471 = vmax.f32 %v4046, 0.0
        %v4472 = vmax.f32 %v4049, 0.0
        %v4473 = vmax.f32 %v4051, 0.0
        %v4474 = vmax.f32 %v4054, 0.0
        %v4475 = vmax.f32 %v4056, 0.0
        %v4476 = vmax.f32 %v4059, 0.0
        %v4477 = vmax.f32 %v4061, 0.0
        %v4478 = vmax.f32 %v4064, 0.0
        %v4479 = vmax.f32 %v4066, 0.0
        %v4480 = vmax.f32 %v4069, 0.0
        %v4481 = vmax.f32 %v4071, 0.0
        %v4482 = vmax.f32 %v4074, 0.0
        %v4483 = vmax.f32 %v4076, 0.0
        %v4484 = vmax.f32 %v4079, 0.0
        %v4485 = vmax.f32 %v4081, 0.0
        %v4486 = vmax.f32 %v4084, 0.0
        %v4487 = vmax.f32 %v4086, 0.0
        %v4488 = vmax.f32 %v4089, 0.0
        %v4489 = vmax.f32 %v4091, 0.0
        %v4490 = vmax.f32 %v4094, 0.0
        %v4491 = vmax.f32 %v4096, 0.0
        %v4492 = vmax.f32 %v4099, 0.0
        %v4493 = vmax.f32 %v4101, 0.0
        %v4494 = vmax.f32 %v4104, 0.0
        %v4495 = vmax.f32 %v4106, 0.0
        %v4496 = vmax.f32 %v4109, 0.0
        %v4497 = vmax.f32 %v4111, 0.0
        %v4498 = vmax.f32 %v4114, 0.0
        %v4499 = vmax.f32 %v4116, 0.0
        %v4500 = vmax.f32 %v4119, 0.0
        %v4501 = vmax.f32 %v4121, 0.0
        %v4502 = vmax.f32 %v4124, 0.0
        %v4503 = vmax.f32 %v4126, 0.0
        %v4504 = vmax.f32 %v4129, 0.0
        %v4505 = vmax.f32 %v4131, 0.0
        %v4506 = vmax.f32 %v4134, 0.0
        %v4507 = vmax.f32 %v4136, 0.0
        %v4508 = vmax.f32 %v4139, 0.0
        %v4509 = vmax.f32 %v4141, 0.0
        %v4510 = vmax.f32 %v4144, 0.0
        %v4511 = vmax.f32 %v4146, 0.0
        %v4512 = vmax.f32 %v4149, 0.0
        %v4513 = vmax.f32 %v4151, 0.0
        %v4514 = vmax.f32 %v4154, 0.0
        %v4515 = vmax.f32 %v4156, 0.0
        %v4516 = vmax.f32 %v4159, 0.0
        %v4517 = vmax.f32 %v4161, 0.0
        %v4518 = vmax.f32 %v4164, 0.0
        %v4519 = vmax.f32 %v4166, 0.0
        %v4520 = vmax.f32 %v4169, 0.0
        %v4521 = vmax.f32 %v4171, 0.0
        %v4522 = vmax.f32 %v4174, 0.0
        %v4523 = vmax.f32 %v4176, 0.0
        %v4524 = vmax.f32 %v4179, 0.0
        %v4525 = vmax.f32 %v4181, 0.0
        %v4526 = vmax.f32 %v4184, 0.0
        %v4527 = vmax.f32 %v4186, 0.0
        %v4528 = vmax.f32 %v4189, 0.0
        %v4529 = vmax.f32 %v4191, 0.0
        %v4530 = vmax.f32 %v4194, 0.0
        %v4531 = vmax.f32 %v4196, 0.0
        %v4532 = vmax.f32 %v4199, 0.0
        %v4533 = vmax.f32 %v4201, 0.0
        %v4534 = vmax.f32 %v4204, 0.0
        %v4535 = vmax.f32 %v4206, 0.0
        %v4536 = vmax.f32 %v4209, 0.0
        %v4537 = vmax.f32 %v4211, 0.0
        %v4538 = vmax.f32 %v4214, 0.0
        %v4539 = vmax.f32 %v4216, 0.0
        %v4540 = vmax.f32 %v4219, 0.0
        %v4541 = vmax.f32 %v4221, 0.0
        %v4542 = vmax.f32 %v4224, 0.0
        %v4543 = vmax.f32 %v4226, 0.0
        %v4544 = vmax.f32 %v4229, 0.0
        %v4545 = vmax.f32 %v4231, 0.0
        %v4546 = vmax.f32 %v4234, 0.0
        %v4547 = vmax.f32 %v4236, 0.0
        %v4548 = vmax.f32 %v4239, 0.0
        %v4549 = vmax.f32 %v4241, 0.0
        %v4550 = vmax.f32 %v4244, 0.0
        %v4551 = vmax.f32 %v4246, 0.0
        %v4552 = vmax.f32 %v4249, 0.0
        %v4553 = vmax.f32 %v4251, 0.0
        %v4554 = vmax.f32 %v4254, 0.0
        %v4555 = vmax.f32 %v4256, 0.0
        %v4556 = vmax.f32 %v4259, 0.0
        %v4557 = vmax.f32 %v4261, 0.0
        %v4558 = vmax.f32 %v4264, 0.0
        %v4559 = vmax.f32 %v4266, 0.0
        %v4560 = vmax.f32 %v4269, 0.0
        %v4561 = vmax.f32 %v4271, 0.0
        %v4562 = vmax.f32 %v4274, 0.0
        %v4563 = vmax.f32 %v4276, 0.0
        %v4564 = vmax.f32 %v4279, 0.0
        %v4565 = vmax.f32 %v4281, 0.0
        %v4566 = vmax.f32 %v4284, 0.0
        %v4567 = vmax.f32 %v4286, 0.0
        %v4568 = vmax.f32 %v4289, 0.0
        %v4569 = vmax.f32 %v4291, 0.0
        %v4570 = vmax.f32 %v4294, 0.0
        %v4571 = vmax.f32 %v4296, 0.0
        %v4572 = vmax.f32 %v4299, 0.0
        %v4573 = vmax.f32 %v4301, 0.0
        %v4574 = vmax.f32 %v4304, 0.0
        %v4575 = vmax.f32 %v4306, 0.0
        %v4576 = vmax.f32 %v4309, 0.0
        %v4577 = vmax.f32 %v4311, 0.0
        %v4578 = vmax.f32 %v4314, 0.0
        %v4579 = vmax.f32 %v4316, 0.0
        %v4580 = vmax.f32 %v4319, 0.0
        %v4581 = vmax.f32 %v4321, 0.0
        %v4582 = vmax.f32 %v4324, 0.0
        %v4583 = vmax.f32 %v4326, 0.0
        %v4584 = vpack.c.bf16 %v4329, %v4328
        %v4585 = vpack.c.bf16 %v4331, %v4330
        %v4586 = vpack.c.bf16 %v4333, %v4332
        %v4587 = vpack.c.bf16 %v4335, %v4334
        %v4588 = vpack.c.bf16 %v4337, %v4336
        %v4589 = vpack.c.bf16 %v4339, %v4338
        %v4590 = vpack.c.bf16 %v4341, %v4340
        %v4591 = vpack.c.bf16 %v4343, %v4342
        %v4592 = vpack.c.bf16 %v4345, %v4344
        %v4593 = vpack.c.bf16 %v4347, %v4346
        %v4594 = vpack.c.bf16 %v4349, %v4348
        %v4595 = vpack.c.bf16 %v4351, %v4350
        %v4596 = vpack.c.bf16 %v4353, %v4352
        %v4597 = vpack.c.bf16 %v4355, %v4354
        %v4598 = vpack.c.bf16 %v4357, %v4356
        %v4599 = vpack.c.bf16 %v4359, %v4358
        %v4600 = vpack.c.bf16 %v4361, %v4360
        %v4601 = vpack.c.bf16 %v4363, %v4362
        %v4602 = vpack.c.bf16 %v4365, %v4364
        %v4603 = vpack.c.bf16 %v4367, %v4366
        %v4604 = vpack.c.bf16 %v4369, %v4368
        %v4605 = vpack.c.bf16 %v4371, %v4370
        %v4606 = vpack.c.bf16 %v4373, %v4372
        %v4607 = vpack.c.bf16 %v4375, %v4374
        %v4608 = vpack.c.bf16 %v4377, %v4376
        %v4609 = vpack.c.bf16 %v4379, %v4378
        %v4610 = vpack.c.bf16 %v4381, %v4380
        %v4611 = vpack.c.bf16 %v4383, %v4382
        %v4612 = vpack.c.bf16 %v4385, %v4384
        %v4613 = vpack.c.bf16 %v4387, %v4386
        %v4614 = vpack.c.bf16 %v4389, %v4388
        %v4615 = vpack.c.bf16 %v4391, %v4390
        %v4616 = vpack.c.bf16 %v4393, %v4392
        %v4617 = vpack.c.bf16 %v4395, %v4394
        %v4618 = vpack.c.bf16 %v4397, %v4396
        %v4619 = vpack.c.bf16 %v4399, %v4398
        %v4620 = vpack.c.bf16 %v4401, %v4400
        %v4621 = vpack.c.bf16 %v4403, %v4402
        %v4622 = vpack.c.bf16 %v4405, %v4404
        %v4623 = vpack.c.bf16 %v4407, %v4406
        %v4624 = vpack.c.bf16 %v4409, %v4408
        %v4625 = vpack.c.bf16 %v4411, %v4410
        %v4626 = vpack.c.bf16 %v4413, %v4412
        %v4627 = vpack.c.bf16 %v4415, %v4414
        %v4628 = vpack.c.bf16 %v4417, %v4416
        %v4629 = vpack.c.bf16 %v4419, %v4418
        %v4630 = vpack.c.bf16 %v4421, %v4420
        %v4631 = vpack.c.bf16 %v4423, %v4422
        %v4632 = vpack.c.bf16 %v4425, %v4424
        %v4633 = vpack.c.bf16 %v4427, %v4426
        %v4634 = vpack.c.bf16 %v4429, %v4428
        %v4635 = vpack.c.bf16 %v4431, %v4430
        %v4636 = vpack.c.bf16 %v4433, %v4432
        %v4637 = vpack.c.bf16 %v4435, %v4434
        %v4638 = vpack.c.bf16 %v4437, %v4436
        %v4639 = vpack.c.bf16 %v4439, %v4438
        %v4640 = vpack.c.bf16 %v4441, %v4440
        %v4641 = vpack.c.bf16 %v4443, %v4442
        %v4642 = vpack.c.bf16 %v4445, %v4444
        %v4643 = vpack.c.bf16 %v4447, %v4446
        %v4644 = vpack.c.bf16 %v4449, %v4448
        %v4645 = vpack.c.bf16 %v4451, %v4450
        %v4646 = vpack.c.bf16 %v4453, %v4452
        %v4647 = vpack.c.bf16 %v4455, %v4454
        %v4648 = vpack.c.bf16 %v4457, %v4456
        %v4649 = vpack.c.bf16 %v4459, %v4458
        %v4650 = vpack.c.bf16 %v4461, %v4460
        %v4651 = vpack.c.bf16 %v4463, %v4462
        %v4652 = vpack.c.bf16 %v4465, %v4464
        %v4653 = vpack.c.bf16 %v4467, %v4466
        %v4654 = vpack.c.bf16 %v4469, %v4468
        %v4655 = vpack.c.bf16 %v4471, %v4470
        %v4656 = vpack.c.bf16 %v4473, %v4472
        %v4657 = vpack.c.bf16 %v4475, %v4474
        %v4658 = vpack.c.bf16 %v4477, %v4476
        %v4659 = vpack.c.bf16 %v4479, %v4478
        %v4660 = vpack.c.bf16 %v4481, %v4480
        %v4661 = vpack.c.bf16 %v4483, %v4482
        %v4662 = vpack.c.bf16 %v4485, %v4484
        %v4663 = vpack.c.bf16 %v4487, %v4486
        %v4664 = vpack.c.bf16 %v4489, %v4488
        %v4665 = vpack.c.bf16 %v4491, %v4490
        %v4666 = vpack.c.bf16 %v4493, %v4492
        %v4667 = vpack.c.bf16 %v4495, %v4494
        %v4668 = vpack.c.bf16 %v4497, %v4496
        %v4669 = vpack.c.bf16 %v4499, %v4498
        %v4670 = vpack.c.bf16 %v4501, %v4500
        %v4671 = vpack.c.bf16 %v4503, %v4502
        %v4672 = vpack.c.bf16 %v4505, %v4504
        %v4673 = vpack.c.bf16 %v4507, %v4506
        %v4674 = vpack.c.bf16 %v4509, %v4508
        %v4675 = vpack.c.bf16 %v4511, %v4510
        %v4676 = vpack.c.bf16 %v4513, %v4512
        %v4677 = vpack.c.bf16 %v4515, %v4514
        %v4678 = vpack.c.bf16 %v4517, %v4516
        %v4679 = vpack.c.bf16 %v4519, %v4518
        %v4680 = vpack.c.bf16 %v4521, %v4520
        %v4681 = vpack.c.bf16 %v4523, %v4522
        %v4682 = vpack.c.bf16 %v4525, %v4524
        %v4683 = vpack.c.bf16 %v4527, %v4526
        %v4684 = vpack.c.bf16 %v4529, %v4528
        %v4685 = vpack.c.bf16 %v4531, %v4530
        %v4686 = vpack.c.bf16 %v4533, %v4532
        %v4687 = vpack.c.bf16 %v4535, %v4534
        %v4688 = vpack.c.bf16 %v4537, %v4536
        %v4689 = vpack.c.bf16 %v4539, %v4538
        %v4690 = vpack.c.bf16 %v4541, %v4540
        %v4691 = vpack.c.bf16 %v4543, %v4542
        %v4692 = vpack.c.bf16 %v4545, %v4544
        %v4693 = vpack.c.bf16 %v4547, %v4546
        %v4694 = vpack.c.bf16 %v4549, %v4548
        %v4695 = vpack.c.bf16 %v4551, %v4550
        %v4696 = vpack.c.bf16 %v4553, %v4552
        %v4697 = vpack.c.bf16 %v4555, %v4554
        %v4698 = vpack.c.bf16 %v4557, %v4556
        %v4699 = vpack.c.bf16 %v4559, %v4558
        %v4700 = vpack.c.bf16 %v4561, %v4560
        %v4701 = vpack.c.bf16 %v4563, %v4562
        %v4702 = vpack.c.bf16 %v4565, %v4564
        %v4703 = vpack.c.bf16 %v4567, %v4566
        %v4704 = vpack.c.bf16 %v4569, %v4568
        %v4705 = vpack.c.bf16 %v4571, %v4570
        %v4706 = vpack.c.bf16 %v4573, %v4572
        %v4707 = vpack.c.bf16 %v4575, %v4574
        %v4708 = vpack.c.bf16 %v4577, %v4576
        %v4709 = vpack.c.bf16 %v4579, %v4578
        %v4710 = vpack.c.bf16 %v4581, %v4580
        %v4711 = vpack.c.bf16 %v4583, %v4582
        %v4713 = vperm.slane %v372, 0
        %v4719 = vunpack.c.l.b16 %v368
        %v4720 = vunpack.c.l.b16 %v369
        %v4721 = vunpack.c.l.b16 %v370
        %v4722 = vunpack.c.l.b16 %v371
        %v4723 = vpack.c.b16 %v4720, %v4719
        %v4724 = vpack.c.b16 %v4722, %v4721
        %v4728 = vsel %vm3294, %v4584, 0
        %v4731 = vsel %vm3294, %v4585, 0
        %v4734 = vsel %vm3294, %v4586, 0
        %v4737 = vsel %vm3294, %v4587, 0
        %v4740 = vsel %vm3294, %v4588, 0
        %v4743 = vsel %vm3294, %v4589, 0
        %v4746 = vsel %vm3294, %v4590, 0
        %v4749 = vsel %vm3294, %v4591, 0
        %v4752 = vsel %vm3294, %v4592, 0
        %v4755 = vsel %vm3294, %v4593, 0
        %v4758 = vsel %vm3294, %v4594, 0
        %v4761 = vsel %vm3294, %v4595, 0
        %v4764 = vsel %vm3294, %v4596, 0
        %v4767 = vsel %vm3294, %v4597, 0
        %v4770 = vsel %vm3294, %v4598, 0
        %v4773 = vsel %vm3294, %v4599, 0
        %v4776 = vsel %vm3294, %v4600, 0
        %v4779 = vsel %vm3294, %v4601, 0
        %v4782 = vsel %vm3294, %v4602, 0
        %v4785 = vsel %vm3294, %v4603, 0
        %v4788 = vsel %vm3294, %v4604, 0
        %v4791 = vsel %vm3294, %v4605, 0
        %v4794 = vsel %vm3294, %v4606, 0
        %v4797 = vsel %vm3294, %v4607, 0
        %v4800 = vsel %vm3294, %v4608, 0
        %v4803 = vsel %vm3294, %v4609, 0
        %v4806 = vsel %vm3294, %v4610, 0
        %v4809 = vsel %vm3294, %v4611, 0
        %v4812 = vsel %vm3294, %v4612, 0
        %v4815 = vsel %vm3294, %v4613, 0
        %v4818 = vsel %vm3294, %v4614, 0
        %v4821 = vsel %vm3294, %v4615, 0
        %v4824 = vsel %vm3294, %v4616, 0
        %v4827 = vsel %vm3294, %v4617, 0
        %v4830 = vsel %vm3294, %v4618, 0
        %v4833 = vsel %vm3294, %v4619, 0
        %v4836 = vsel %vm3294, %v4620, 0
        %v4839 = vsel %vm3294, %v4621, 0
        %v4842 = vsel %vm3294, %v4622, 0
        %v4845 = vsel %vm3294, %v4623, 0
        %v4848 = vsel %vm3294, %v4624, 0
        %v4851 = vsel %vm3294, %v4625, 0
        %v4854 = vsel %vm3294, %v4626, 0
        %v4857 = vsel %vm3294, %v4627, 0
        %v4860 = vsel %vm3294, %v4628, 0
        %v4863 = vsel %vm3294, %v4629, 0
        %v4866 = vsel %vm3294, %v4630, 0
        %v4869 = vsel %vm3294, %v4631, 0
        %v4872 = vsel %vm3294, %v4632, 0
        %v4875 = vsel %vm3294, %v4633, 0
        %v4878 = vsel %vm3294, %v4634, 0
        %v4881 = vsel %vm3294, %v4635, 0
        %v4884 = vsel %vm3294, %v4636, 0
        %v4887 = vsel %vm3294, %v4637, 0
        %v4890 = vsel %vm3294, %v4638, 0
        %v4893 = vsel %vm3294, %v4639, 0
        %v4896 = vsel %vm3294, %v4640, 0
        %v4899 = vsel %vm3294, %v4641, 0
        %v4902 = vsel %vm3294, %v4642, 0
        %v4905 = vsel %vm3294, %v4643, 0
        %v4908 = vsel %vm3294, %v4644, 0
        %v4911 = vsel %vm3294, %v4645, 0
        %v4914 = vsel %vm3294, %v4646, 0
        %v4917 = vsel %vm3294, %v4647, 0
        %v4920 = vsel %vm3294, %v4648, 0
        %v4923 = vsel %vm3294, %v4649, 0
        %v4926 = vsel %vm3294, %v4650, 0
        %v4929 = vsel %vm3294, %v4651, 0
        %v4932 = vsel %vm3294, %v4652, 0
        %v4935 = vsel %vm3294, %v4653, 0
        %v4938 = vsel %vm3294, %v4654, 0
        %v4941 = vsel %vm3294, %v4655, 0
        %v4944 = vsel %vm3294, %v4656, 0
        %v4947 = vsel %vm3294, %v4657, 0
        %v4950 = vsel %vm3294, %v4658, 0
        %v4953 = vsel %vm3294, %v4659, 0
        %v4956 = vsel %vm3294, %v4660, 0
        %v4959 = vsel %vm3294, %v4661, 0
        %v4962 = vsel %vm3294, %v4662, 0
        %v4965 = vsel %vm3294, %v4663, 0
        %v4968 = vsel %vm3294, %v4664, 0
        %v4971 = vsel %vm3294, %v4665, 0
        %v4974 = vsel %vm3294, %v4666, 0
        %v4977 = vsel %vm3294, %v4667, 0
        %v4980 = vsel %vm3294, %v4668, 0
        %v4983 = vsel %vm3294, %v4669, 0
        %v4986 = vsel %vm3294, %v4670, 0
        %v4989 = vsel %vm3294, %v4671, 0
        %v4992 = vsel %vm3294, %v4672, 0
        %v4995 = vsel %vm3294, %v4673, 0
        %v4998 = vsel %vm3294, %v4674, 0
        %v5001 = vsel %vm3294, %v4675, 0
        %v5004 = vsel %vm3294, %v4676, 0
        %v5007 = vsel %vm3294, %v4677, 0
        %v5010 = vsel %vm3294, %v4678, 0
        %v5013 = vsel %vm3294, %v4679, 0
        %v5016 = vsel %vm3294, %v4680, 0
        %v5019 = vsel %vm3294, %v4681, 0
        %v5022 = vsel %vm3294, %v4682, 0
        %v5025 = vsel %vm3294, %v4683, 0
        %v5028 = vsel %vm3294, %v4684, 0
        %v5031 = vsel %vm3294, %v4685, 0
        %v5034 = vsel %vm3294, %v4686, 0
        %v5037 = vsel %vm3294, %v4687, 0
        %v5040 = vsel %vm3294, %v4688, 0
        %v5043 = vsel %vm3294, %v4689, 0
        %v5046 = vsel %vm3294, %v4690, 0
        %v5049 = vsel %vm3294, %v4691, 0
        %v5052 = vsel %vm3294, %v4692, 0
        %v5055 = vsel %vm3294, %v4693, 0
        %v5058 = vsel %vm3294, %v4694, 0
        %v5061 = vsel %vm3294, %v4695, 0
        %v5064 = vsel %vm3294, %v4696, 0
        %v5067 = vsel %vm3294, %v4697, 0
        %v5070 = vsel %vm3294, %v4698, 0
        %v5073 = vsel %vm3294, %v4699, 0
        %v5076 = vsel %vm3294, %v4700, 0
        %v5079 = vsel %vm3294, %v4701, 0
        %v5082 = vsel %vm3294, %v4702, 0
        %v5085 = vsel %vm3294, %v4703, 0
        %v5088 = vsel %vm3294, %v4704, 0
        %v5091 = vsel %vm3294, %v4705, 0
        %v5094 = vsel %vm3294, %v4706, 0
        %v5097 = vsel %vm3294, %v4707, 0
        %v5100 = vsel %vm3294, %v4708, 0
        %v5103 = vsel %vm3294, %v4709, 0
        %v5106 = vsel %vm3294, %v4710, 0
        %v5109 = vsel %vm3294, %v4711, 0
        %5111 = vmatpush.bf16.msra.mxu0 0
        %5112 = vmatpush.bf16.msra.mxu0 0
        %5113 = vmatpush.bf16.msra.mxu0 0
        %5114 = vmatpush.bf16.msra.mxu0 0
        %5115 = vmatpush.bf16.msra.mxu0 0
        %5116 = vmatpush.bf16.msra.mxu0 0
        %5117 = vmatpush.bf16.msra.mxu0 %v4724
        %5118 = vmatpush.bf16.msra.mxu0 %v4723
        %5119 = vmatmul.bf16.gmra.mxu0 %v4728
        %v5120 = vpop.f32.mrf.mxu0
        %v5121 = vadd.f32 %v4713, %v5120
        %v5122 = vpop.f32.mrf.mxu0
        %v5123 = vadd.f32 %v4713, %v5122
        %5124 = vmatmul.bf16.gmra.mxu0 %v4731
        %v5125 = vpop.f32.mrf.mxu0
        %v5126 = vadd.f32 %v4713, %v5125
        %v5127 = vpop.f32.mrf.mxu0
        %v5128 = vadd.f32 %v4713, %v5127
        %5129 = vmatmul.bf16.gmra.mxu0 %v4734
        %v5130 = vpop.f32.mrf.mxu0
        %v5131 = vadd.f32 %v4713, %v5130
        %v5132 = vpop.f32.mrf.mxu0
        %v5133 = vadd.f32 %v4713, %v5132
        %5134 = vmatmul.bf16.gmra.mxu0 %v4737
        %v5135 = vpop.f32.mrf.mxu0
        %v5136 = vadd.f32 %v4713, %v5135
        %v5137 = vpop.f32.mrf.mxu0
        %v5138 = vadd.f32 %v4713, %v5137
        %5139 = vmatmul.bf16.gmra.mxu0 %v4740
        %v5140 = vpop.f32.mrf.mxu0
        %v5141 = vadd.f32 %v4713, %v5140
        %v5142 = vpop.f32.mrf.mxu0
        %v5143 = vadd.f32 %v4713, %v5142
        %5144 = vmatmul.bf16.gmra.mxu0 %v4743
        %v5145 = vpop.f32.mrf.mxu0
        %v5146 = vadd.f32 %v4713, %v5145
        %v5147 = vpop.f32.mrf.mxu0
        %v5148 = vadd.f32 %v4713, %v5147
        %5149 = vmatmul.bf16.gmra.mxu0 %v4746
        %v5150 = vpop.f32.mrf.mxu0
        %v5151 = vadd.f32 %v4713, %v5150
        %v5152 = vpop.f32.mrf.mxu0
        %v5153 = vadd.f32 %v4713, %v5152
        %5154 = vmatmul.bf16.gmra.mxu0 %v4749
        %v5155 = vpop.f32.mrf.mxu0
        %v5156 = vadd.f32 %v4713, %v5155
        %v5157 = vpop.f32.mrf.mxu0
        %v5158 = vadd.f32 %v4713, %v5157
        %5159 = vmatmul.bf16.gmra.mxu0 %v4752
        %v5160 = vpop.f32.mrf.mxu0
        %v5161 = vadd.f32 %v4713, %v5160
        %v5162 = vpop.f32.mrf.mxu0
        %v5163 = vadd.f32 %v4713, %v5162
        %5164 = vmatmul.bf16.gmra.mxu0 %v4755
        %v5165 = vpop.f32.mrf.mxu0
        %v5166 = vadd.f32 %v4713, %v5165
        %v5167 = vpop.f32.mrf.mxu0
        %v5168 = vadd.f32 %v4713, %v5167
        %5169 = vmatmul.bf16.gmra.mxu0 %v4758
        %v5170 = vpop.f32.mrf.mxu0
        %v5171 = vadd.f32 %v4713, %v5170
        %v5172 = vpop.f32.mrf.mxu0
        %v5173 = vadd.f32 %v4713, %v5172
        %5174 = vmatmul.bf16.gmra.mxu0 %v4761
        %v5175 = vpop.f32.mrf.mxu0
        %v5176 = vadd.f32 %v4713, %v5175
        %v5177 = vpop.f32.mrf.mxu0
        %v5178 = vadd.f32 %v4713, %v5177
        %5179 = vmatmul.bf16.gmra.mxu0 %v4764
        %v5180 = vpop.f32.mrf.mxu0
        %v5181 = vadd.f32 %v4713, %v5180
        %v5182 = vpop.f32.mrf.mxu0
        %v5183 = vadd.f32 %v4713, %v5182
        %5184 = vmatmul.bf16.gmra.mxu0 %v4767
        %v5185 = vpop.f32.mrf.mxu0
        %v5186 = vadd.f32 %v4713, %v5185
        %v5187 = vpop.f32.mrf.mxu0
        %v5188 = vadd.f32 %v4713, %v5187
        %5189 = vmatmul.bf16.gmra.mxu0 %v4770
        %v5190 = vpop.f32.mrf.mxu0
        %v5191 = vadd.f32 %v4713, %v5190
        %v5192 = vpop.f32.mrf.mxu0
        %v5193 = vadd.f32 %v4713, %v5192
        %5194 = vmatmul.bf16.gmra.mxu0 %v4773
        %v5195 = vpop.f32.mrf.mxu0
        %v5196 = vadd.f32 %v4713, %v5195
        %v5197 = vpop.f32.mrf.mxu0
        %v5198 = vadd.f32 %v4713, %v5197
        %5199 = vmatmul.bf16.gmra.mxu0 %v4776
        %v5200 = vpop.f32.mrf.mxu0
        %v5201 = vadd.f32 %v4713, %v5200
        %v5202 = vpop.f32.mrf.mxu0
        %v5203 = vadd.f32 %v4713, %v5202
        %5204 = vmatmul.bf16.gmra.mxu0 %v4779
        %v5205 = vpop.f32.mrf.mxu0
        %v5206 = vadd.f32 %v4713, %v5205
        %v5207 = vpop.f32.mrf.mxu0
        %v5208 = vadd.f32 %v4713, %v5207
        %5209 = vmatmul.bf16.gmra.mxu0 %v4782
        %v5210 = vpop.f32.mrf.mxu0
        %v5211 = vadd.f32 %v4713, %v5210
        %v5212 = vpop.f32.mrf.mxu0
        %v5213 = vadd.f32 %v4713, %v5212
        %5214 = vmatmul.bf16.gmra.mxu0 %v4785
        %v5215 = vpop.f32.mrf.mxu0
        %v5216 = vadd.f32 %v4713, %v5215
        %v5217 = vpop.f32.mrf.mxu0
        %v5218 = vadd.f32 %v4713, %v5217
        %5219 = vmatmul.bf16.gmra.mxu0 %v4788
        %v5220 = vpop.f32.mrf.mxu0
        %v5221 = vadd.f32 %v4713, %v5220
        %v5222 = vpop.f32.mrf.mxu0
        %v5223 = vadd.f32 %v4713, %v5222
        %5224 = vmatmul.bf16.gmra.mxu0 %v4791
        %v5225 = vpop.f32.mrf.mxu0
        %v5226 = vadd.f32 %v4713, %v5225
        %v5227 = vpop.f32.mrf.mxu0
        %v5228 = vadd.f32 %v4713, %v5227
        %5229 = vmatmul.bf16.gmra.mxu0 %v4794
        %v5230 = vpop.f32.mrf.mxu0
        %v5231 = vadd.f32 %v4713, %v5230
        %v5232 = vpop.f32.mrf.mxu0
        %v5233 = vadd.f32 %v4713, %v5232
        %5234 = vmatmul.bf16.gmra.mxu0 %v4797
        %v5235 = vpop.f32.mrf.mxu0
        %v5236 = vadd.f32 %v4713, %v5235
        %v5237 = vpop.f32.mrf.mxu0
        %v5238 = vadd.f32 %v4713, %v5237
        %5239 = vmatmul.bf16.gmra.mxu0 %v4800
        %v5240 = vpop.f32.mrf.mxu0
        %v5241 = vadd.f32 %v4713, %v5240
        %v5242 = vpop.f32.mrf.mxu0
        %v5243 = vadd.f32 %v4713, %v5242
        %5244 = vmatmul.bf16.gmra.mxu0 %v4803
        %v5245 = vpop.f32.mrf.mxu0
        %v5246 = vadd.f32 %v4713, %v5245
        %v5247 = vpop.f32.mrf.mxu0
        %v5248 = vadd.f32 %v4713, %v5247
        %5249 = vmatmul.bf16.gmra.mxu0 %v4806
        %v5250 = vpop.f32.mrf.mxu0
        %v5251 = vadd.f32 %v4713, %v5250
        %v5252 = vpop.f32.mrf.mxu0
        %v5253 = vadd.f32 %v4713, %v5252
        %5254 = vmatmul.bf16.gmra.mxu0 %v4809
        %v5255 = vpop.f32.mrf.mxu0
        %v5256 = vadd.f32 %v4713, %v5255
        %v5257 = vpop.f32.mrf.mxu0
        %v5258 = vadd.f32 %v4713, %v5257
        %5259 = vmatmul.bf16.gmra.mxu0 %v4812
        %v5260 = vpop.f32.mrf.mxu0
        %v5261 = vadd.f32 %v4713, %v5260
        %v5262 = vpop.f32.mrf.mxu0
        %v5263 = vadd.f32 %v4713, %v5262
        %5264 = vmatmul.bf16.gmra.mxu0 %v4815
        %v5265 = vpop.f32.mrf.mxu0
        %v5266 = vadd.f32 %v4713, %v5265
        %v5267 = vpop.f32.mrf.mxu0
        %v5268 = vadd.f32 %v4713, %v5267
        %5269 = vmatmul.bf16.gmra.mxu0 %v4818
        %v5270 = vpop.f32.mrf.mxu0
        %v5271 = vadd.f32 %v4713, %v5270
        %v5272 = vpop.f32.mrf.mxu0
        %v5273 = vadd.f32 %v4713, %v5272
        %5274 = vmatmul.bf16.gmra.mxu0 %v4821
        %v5275 = vpop.f32.mrf.mxu0
        %v5276 = vadd.f32 %v4713, %v5275
        %v5277 = vpop.f32.mrf.mxu0
        %v5278 = vadd.f32 %v4713, %v5277
        %5279 = vmatmul.bf16.gmra.mxu0 %v4824
        %v5280 = vpop.f32.mrf.mxu0
        %v5281 = vadd.f32 %v4713, %v5280
        %v5282 = vpop.f32.mrf.mxu0
        %v5283 = vadd.f32 %v4713, %v5282
        %5284 = vmatmul.bf16.gmra.mxu0 %v4827
        %v5285 = vpop.f32.mrf.mxu0
        %v5286 = vadd.f32 %v4713, %v5285
        %v5287 = vpop.f32.mrf.mxu0
        %v5288 = vadd.f32 %v4713, %v5287
        %5289 = vmatmul.bf16.gmra.mxu0 %v4830
        %v5290 = vpop.f32.mrf.mxu0
        %v5291 = vadd.f32 %v4713, %v5290
        %v5292 = vpop.f32.mrf.mxu0
        %v5293 = vadd.f32 %v4713, %v5292
        %5294 = vmatmul.bf16.gmra.mxu0 %v4833
        %v5295 = vpop.f32.mrf.mxu0
        %v5296 = vadd.f32 %v4713, %v5295
        %v5297 = vpop.f32.mrf.mxu0
        %v5298 = vadd.f32 %v4713, %v5297
        %5299 = vmatmul.bf16.gmra.mxu0 %v4836
        %v5300 = vpop.f32.mrf.mxu0
        %v5301 = vadd.f32 %v4713, %v5300
        %v5302 = vpop.f32.mrf.mxu0
        %v5303 = vadd.f32 %v4713, %v5302
        %5304 = vmatmul.bf16.gmra.mxu0 %v4839
        %v5305 = vpop.f32.mrf.mxu0
        %v5306 = vadd.f32 %v4713, %v5305
        %v5307 = vpop.f32.mrf.mxu0
        %v5308 = vadd.f32 %v4713, %v5307
        %5309 = vmatmul.bf16.gmra.mxu0 %v4842
        %v5310 = vpop.f32.mrf.mxu0
        %v5311 = vadd.f32 %v4713, %v5310
        %v5312 = vpop.f32.mrf.mxu0
        %v5313 = vadd.f32 %v4713, %v5312
        %5314 = vmatmul.bf16.gmra.mxu0 %v4845
        %v5315 = vpop.f32.mrf.mxu0
        %v5316 = vadd.f32 %v4713, %v5315
        %v5317 = vpop.f32.mrf.mxu0
        %v5318 = vadd.f32 %v4713, %v5317
        %5319 = vmatmul.bf16.gmra.mxu0 %v4848
        %v5320 = vpop.f32.mrf.mxu0
        %v5321 = vadd.f32 %v4713, %v5320
        %v5322 = vpop.f32.mrf.mxu0
        %v5323 = vadd.f32 %v4713, %v5322
        %5324 = vmatmul.bf16.gmra.mxu0 %v4851
        %v5325 = vpop.f32.mrf.mxu0
        %v5326 = vadd.f32 %v4713, %v5325
        %v5327 = vpop.f32.mrf.mxu0
        %v5328 = vadd.f32 %v4713, %v5327
        %5329 = vmatmul.bf16.gmra.mxu0 %v4854
        %v5330 = vpop.f32.mrf.mxu0
        %v5331 = vadd.f32 %v4713, %v5330
        %v5332 = vpop.f32.mrf.mxu0
        %v5333 = vadd.f32 %v4713, %v5332
        %5334 = vmatmul.bf16.gmra.mxu0 %v4857
        %v5335 = vpop.f32.mrf.mxu0
        %v5336 = vadd.f32 %v4713, %v5335
        %v5337 = vpop.f32.mrf.mxu0
        %v5338 = vadd.f32 %v4713, %v5337
        %5339 = vmatmul.bf16.gmra.mxu0 %v4860
        %v5340 = vpop.f32.mrf.mxu0
        %v5341 = vadd.f32 %v4713, %v5340
        %v5342 = vpop.f32.mrf.mxu0
        %v5343 = vadd.f32 %v4713, %v5342
        %5344 = vmatmul.bf16.gmra.mxu0 %v4863
        %v5345 = vpop.f32.mrf.mxu0
        %v5346 = vadd.f32 %v4713, %v5345
        %v5347 = vpop.f32.mrf.mxu0
        %v5348 = vadd.f32 %v4713, %v5347
        %5349 = vmatmul.bf16.gmra.mxu0 %v4866
        %v5350 = vpop.f32.mrf.mxu0
        %v5351 = vadd.f32 %v4713, %v5350
        %v5352 = vpop.f32.mrf.mxu0
        %v5353 = vadd.f32 %v4713, %v5352
        %5354 = vmatmul.bf16.gmra.mxu0 %v4869
        %v5355 = vpop.f32.mrf.mxu0
        %v5356 = vadd.f32 %v4713, %v5355
        %v5357 = vpop.f32.mrf.mxu0
        %v5358 = vadd.f32 %v4713, %v5357
        %5359 = vmatmul.bf16.gmra.mxu0 %v4872
        %v5360 = vpop.f32.mrf.mxu0
        %v5361 = vadd.f32 %v4713, %v5360
        %v5362 = vpop.f32.mrf.mxu0
        %v5363 = vadd.f32 %v4713, %v5362
        %5364 = vmatmul.bf16.gmra.mxu0 %v4875
        %v5365 = vpop.f32.mrf.mxu0
        %v5366 = vadd.f32 %v4713, %v5365
        %v5367 = vpop.f32.mrf.mxu0
        %v5368 = vadd.f32 %v4713, %v5367
        %5369 = vmatmul.bf16.gmra.mxu0 %v4878
        %v5370 = vpop.f32.mrf.mxu0
        %v5371 = vadd.f32 %v4713, %v5370
        %v5372 = vpop.f32.mrf.mxu0
        %v5373 = vadd.f32 %v4713, %v5372
        %5374 = vmatmul.bf16.gmra.mxu0 %v4881
        %v5375 = vpop.f32.mrf.mxu0
        %v5376 = vadd.f32 %v4713, %v5375
        %v5377 = vpop.f32.mrf.mxu0
        %v5378 = vadd.f32 %v4713, %v5377
        %5379 = vmatmul.bf16.gmra.mxu0 %v4884
        %v5380 = vpop.f32.mrf.mxu0
        %v5381 = vadd.f32 %v4713, %v5380
        %v5382 = vpop.f32.mrf.mxu0
        %v5383 = vadd.f32 %v4713, %v5382
        %5384 = vmatmul.bf16.gmra.mxu0 %v4887
        %v5385 = vpop.f32.mrf.mxu0
        %v5386 = vadd.f32 %v4713, %v5385
        %v5387 = vpop.f32.mrf.mxu0
        %v5388 = vadd.f32 %v4713, %v5387
        %5389 = vmatmul.bf16.gmra.mxu0 %v4890
        %v5390 = vpop.f32.mrf.mxu0
        %v5391 = vadd.f32 %v4713, %v5390
        %v5392 = vpop.f32.mrf.mxu0
        %v5393 = vadd.f32 %v4713, %v5392
        %5394 = vmatmul.bf16.gmra.mxu0 %v4893
        %v5395 = vpop.f32.mrf.mxu0
        %v5396 = vadd.f32 %v4713, %v5395
        %v5397 = vpop.f32.mrf.mxu0
        %v5398 = vadd.f32 %v4713, %v5397
        %5399 = vmatmul.bf16.gmra.mxu0 %v4896
        %v5400 = vpop.f32.mrf.mxu0
        %v5401 = vadd.f32 %v4713, %v5400
        %v5402 = vpop.f32.mrf.mxu0
        %v5403 = vadd.f32 %v4713, %v5402
        %5404 = vmatmul.bf16.gmra.mxu0 %v4899
        %v5405 = vpop.f32.mrf.mxu0
        %v5406 = vadd.f32 %v4713, %v5405
        %v5407 = vpop.f32.mrf.mxu0
        %v5408 = vadd.f32 %v4713, %v5407
        %5409 = vmatmul.bf16.gmra.mxu0 %v4902
        %v5410 = vpop.f32.mrf.mxu0
        %v5411 = vadd.f32 %v4713, %v5410
        %v5412 = vpop.f32.mrf.mxu0
        %v5413 = vadd.f32 %v4713, %v5412
        %5414 = vmatmul.bf16.gmra.mxu0 %v4905
        %v5415 = vpop.f32.mrf.mxu0
        %v5416 = vadd.f32 %v4713, %v5415
        %v5417 = vpop.f32.mrf.mxu0
        %v5418 = vadd.f32 %v4713, %v5417
        %5419 = vmatmul.bf16.gmra.mxu0 %v4908
        %v5420 = vpop.f32.mrf.mxu0
        %v5421 = vadd.f32 %v4713, %v5420
        %v5422 = vpop.f32.mrf.mxu0
        %v5423 = vadd.f32 %v4713, %v5422
        %5424 = vmatmul.bf16.gmra.mxu0 %v4911
        %v5425 = vpop.f32.mrf.mxu0
        %v5426 = vadd.f32 %v4713, %v5425
        %v5427 = vpop.f32.mrf.mxu0
        %v5428 = vadd.f32 %v4713, %v5427
        %5429 = vmatmul.bf16.gmra.mxu0 %v4914
        %v5430 = vpop.f32.mrf.mxu0
        %v5431 = vadd.f32 %v4713, %v5430
        %v5432 = vpop.f32.mrf.mxu0
        %v5433 = vadd.f32 %v4713, %v5432
        %5434 = vmatmul.bf16.gmra.mxu0 %v4917
        %v5435 = vpop.f32.mrf.mxu0
        %v5436 = vadd.f32 %v4713, %v5435
        %v5437 = vpop.f32.mrf.mxu0
        %v5438 = vadd.f32 %v4713, %v5437
        %5439 = vmatmul.bf16.gmra.mxu0 %v4920
        %v5440 = vpop.f32.mrf.mxu0
        %v5441 = vadd.f32 %v4713, %v5440
        %v5442 = vpop.f32.mrf.mxu0
        %v5443 = vadd.f32 %v4713, %v5442
        %5444 = vmatmul.bf16.gmra.mxu0 %v4923
        %v5445 = vpop.f32.mrf.mxu0
        %v5446 = vadd.f32 %v4713, %v5445
        %v5447 = vpop.f32.mrf.mxu0
        %v5448 = vadd.f32 %v4713, %v5447
        %5449 = vmatmul.bf16.gmra.mxu0 %v4926
        %v5450 = vpop.f32.mrf.mxu0
        %v5451 = vadd.f32 %v4713, %v5450
        %v5452 = vpop.f32.mrf.mxu0
        %v5453 = vadd.f32 %v4713, %v5452
        %5454 = vmatmul.bf16.gmra.mxu0 %v4929
        %v5455 = vpop.f32.mrf.mxu0
        %v5456 = vadd.f32 %v4713, %v5455
        %v5457 = vpop.f32.mrf.mxu0
        %v5458 = vadd.f32 %v4713, %v5457
        %5459 = vmatmul.bf16.gmra.mxu0 %v4932
        %v5460 = vpop.f32.mrf.mxu0
        %v5461 = vadd.f32 %v4713, %v5460
        %v5462 = vpop.f32.mrf.mxu0
        %v5463 = vadd.f32 %v4713, %v5462
        %5464 = vmatmul.bf16.gmra.mxu0 %v4935
        %v5465 = vpop.f32.mrf.mxu0
        %v5466 = vadd.f32 %v4713, %v5465
        %v5467 = vpop.f32.mrf.mxu0
        %v5468 = vadd.f32 %v4713, %v5467
        %5469 = vmatmul.bf16.gmra.mxu0 %v4938
        %v5470 = vpop.f32.mrf.mxu0
        %v5471 = vadd.f32 %v4713, %v5470
        %v5472 = vpop.f32.mrf.mxu0
        %v5473 = vadd.f32 %v4713, %v5472
        %5474 = vmatmul.bf16.gmra.mxu0 %v4941
        %v5475 = vpop.f32.mrf.mxu0
        %v5476 = vadd.f32 %v4713, %v5475
        %v5477 = vpop.f32.mrf.mxu0
        %v5478 = vadd.f32 %v4713, %v5477
        %5479 = vmatmul.bf16.gmra.mxu0 %v4944
        %v5480 = vpop.f32.mrf.mxu0
        %v5481 = vadd.f32 %v4713, %v5480
        %v5482 = vpop.f32.mrf.mxu0
        %v5483 = vadd.f32 %v4713, %v5482
        %5484 = vmatmul.bf16.gmra.mxu0 %v4947
        %v5485 = vpop.f32.mrf.mxu0
        %v5486 = vadd.f32 %v4713, %v5485
        %v5487 = vpop.f32.mrf.mxu0
        %v5488 = vadd.f32 %v4713, %v5487
        %5489 = vmatmul.bf16.gmra.mxu0 %v4950
        %v5490 = vpop.f32.mrf.mxu0
        %v5491 = vadd.f32 %v4713, %v5490
        %v5492 = vpop.f32.mrf.mxu0
        %v5493 = vadd.f32 %v4713, %v5492
        %5494 = vmatmul.bf16.gmra.mxu0 %v4953
        %v5495 = vpop.f32.mrf.mxu0
        %v5496 = vadd.f32 %v4713, %v5495
        %v5497 = vpop.f32.mrf.mxu0
        %v5498 = vadd.f32 %v4713, %v5497
        %5499 = vmatmul.bf16.gmra.mxu0 %v4956
        %v5500 = vpop.f32.mrf.mxu0
        %v5501 = vadd.f32 %v4713, %v5500
        %v5502 = vpop.f32.mrf.mxu0
        %v5503 = vadd.f32 %v4713, %v5502
        %5504 = vmatmul.bf16.gmra.mxu0 %v4959
        %v5505 = vpop.f32.mrf.mxu0
        %v5506 = vadd.f32 %v4713, %v5505
        %v5507 = vpop.f32.mrf.mxu0
        %v5508 = vadd.f32 %v4713, %v5507
        %5509 = vmatmul.bf16.gmra.mxu0 %v4962
        %v5510 = vpop.f32.mrf.mxu0
        %v5511 = vadd.f32 %v4713, %v5510
        %v5512 = vpop.f32.mrf.mxu0
        %v5513 = vadd.f32 %v4713, %v5512
        %5514 = vmatmul.bf16.gmra.mxu0 %v4965
        %v5515 = vpop.f32.mrf.mxu0
        %v5516 = vadd.f32 %v4713, %v5515
        %v5517 = vpop.f32.mrf.mxu0
        %v5518 = vadd.f32 %v4713, %v5517
        %5519 = vmatmul.bf16.gmra.mxu0 %v4968
        %v5520 = vpop.f32.mrf.mxu0
        %v5521 = vadd.f32 %v4713, %v5520
        %v5522 = vpop.f32.mrf.mxu0
        %v5523 = vadd.f32 %v4713, %v5522
        %5524 = vmatmul.bf16.gmra.mxu0 %v4971
        %v5525 = vpop.f32.mrf.mxu0
        %v5526 = vadd.f32 %v4713, %v5525
        %v5527 = vpop.f32.mrf.mxu0
        %v5528 = vadd.f32 %v4713, %v5527
        %5529 = vmatmul.bf16.gmra.mxu0 %v4974
        %v5530 = vpop.f32.mrf.mxu0
        %v5531 = vadd.f32 %v4713, %v5530
        %v5532 = vpop.f32.mrf.mxu0
        %v5533 = vadd.f32 %v4713, %v5532
        %5534 = vmatmul.bf16.gmra.mxu0 %v4977
        %v5535 = vpop.f32.mrf.mxu0
        %v5536 = vadd.f32 %v4713, %v5535
        %v5537 = vpop.f32.mrf.mxu0
        %v5538 = vadd.f32 %v4713, %v5537
        %5539 = vmatmul.bf16.gmra.mxu0 %v4980
        %v5540 = vpop.f32.mrf.mxu0
        %v5541 = vadd.f32 %v4713, %v5540
        %v5542 = vpop.f32.mrf.mxu0
        %v5543 = vadd.f32 %v4713, %v5542
        %5544 = vmatmul.bf16.gmra.mxu0 %v4983
        %v5545 = vpop.f32.mrf.mxu0
        %v5546 = vadd.f32 %v4713, %v5545
        %v5547 = vpop.f32.mrf.mxu0
        %v5548 = vadd.f32 %v4713, %v5547
        %5549 = vmatmul.bf16.gmra.mxu0 %v4986
        %v5550 = vpop.f32.mrf.mxu0
        %v5551 = vadd.f32 %v4713, %v5550
        %v5552 = vpop.f32.mrf.mxu0
        %v5553 = vadd.f32 %v4713, %v5552
        %5554 = vmatmul.bf16.gmra.mxu0 %v4989
        %v5555 = vpop.f32.mrf.mxu0
        %v5556 = vadd.f32 %v4713, %v5555
        %v5557 = vpop.f32.mrf.mxu0
        %v5558 = vadd.f32 %v4713, %v5557
        %5559 = vmatmul.bf16.gmra.mxu0 %v4992
        %v5560 = vpop.f32.mrf.mxu0
        %v5561 = vadd.f32 %v4713, %v5560
        %v5562 = vpop.f32.mrf.mxu0
        %v5563 = vadd.f32 %v4713, %v5562
        %5564 = vmatmul.bf16.gmra.mxu0 %v4995
        %v5565 = vpop.f32.mrf.mxu0
        %v5566 = vadd.f32 %v4713, %v5565
        %v5567 = vpop.f32.mrf.mxu0
        %v5568 = vadd.f32 %v4713, %v5567
        %5569 = vmatmul.bf16.gmra.mxu0 %v4998
        %v5570 = vpop.f32.mrf.mxu0
        %v5571 = vadd.f32 %v4713, %v5570
        %v5572 = vpop.f32.mrf.mxu0
        %v5573 = vadd.f32 %v4713, %v5572
        %5574 = vmatmul.bf16.gmra.mxu0 %v5001
        %v5575 = vpop.f32.mrf.mxu0
        %v5576 = vadd.f32 %v4713, %v5575
        %v5577 = vpop.f32.mrf.mxu0
        %v5578 = vadd.f32 %v4713, %v5577
        %5579 = vmatmul.bf16.gmra.mxu0 %v5004
        %v5580 = vpop.f32.mrf.mxu0
        %v5581 = vadd.f32 %v4713, %v5580
        %v5582 = vpop.f32.mrf.mxu0
        %v5583 = vadd.f32 %v4713, %v5582
        %5584 = vmatmul.bf16.gmra.mxu0 %v5007
        %v5585 = vpop.f32.mrf.mxu0
        %v5586 = vadd.f32 %v4713, %v5585
        %v5587 = vpop.f32.mrf.mxu0
        %v5588 = vadd.f32 %v4713, %v5587
        %5589 = vmatmul.bf16.gmra.mxu0 %v5010
        %v5590 = vpop.f32.mrf.mxu0
        %v5591 = vadd.f32 %v4713, %v5590
        %v5592 = vpop.f32.mrf.mxu0
        %v5593 = vadd.f32 %v4713, %v5592
        %5594 = vmatmul.bf16.gmra.mxu0 %v5013
        %v5595 = vpop.f32.mrf.mxu0
        %v5596 = vadd.f32 %v4713, %v5595
        %v5597 = vpop.f32.mrf.mxu0
        %v5598 = vadd.f32 %v4713, %v5597
        %5599 = vmatmul.bf16.gmra.mxu0 %v5016
        %v5600 = vpop.f32.mrf.mxu0
        %v5601 = vadd.f32 %v4713, %v5600
        %v5602 = vpop.f32.mrf.mxu0
        %v5603 = vadd.f32 %v4713, %v5602
        %5604 = vmatmul.bf16.gmra.mxu0 %v5019
        %v5605 = vpop.f32.mrf.mxu0
        %v5606 = vadd.f32 %v4713, %v5605
        %v5607 = vpop.f32.mrf.mxu0
        %v5608 = vadd.f32 %v4713, %v5607
        %5609 = vmatmul.bf16.gmra.mxu0 %v5022
        %v5610 = vpop.f32.mrf.mxu0
        %v5611 = vadd.f32 %v4713, %v5610
        %v5612 = vpop.f32.mrf.mxu0
        %v5613 = vadd.f32 %v4713, %v5612
        %5614 = vmatmul.bf16.gmra.mxu0 %v5025
        %v5615 = vpop.f32.mrf.mxu0
        %v5616 = vadd.f32 %v4713, %v5615
        %v5617 = vpop.f32.mrf.mxu0
        %v5618 = vadd.f32 %v4713, %v5617
        %5619 = vmatmul.bf16.gmra.mxu0 %v5028
        %v5620 = vpop.f32.mrf.mxu0
        %v5621 = vadd.f32 %v4713, %v5620
        %v5622 = vpop.f32.mrf.mxu0
        %v5623 = vadd.f32 %v4713, %v5622
        %5624 = vmatmul.bf16.gmra.mxu0 %v5031
        %v5625 = vpop.f32.mrf.mxu0
        %v5626 = vadd.f32 %v4713, %v5625
        %v5627 = vpop.f32.mrf.mxu0
        %v5628 = vadd.f32 %v4713, %v5627
        %5629 = vmatmul.bf16.gmra.mxu0 %v5034
        %v5630 = vpop.f32.mrf.mxu0
        %v5631 = vadd.f32 %v4713, %v5630
        %v5632 = vpop.f32.mrf.mxu0
        %v5633 = vadd.f32 %v4713, %v5632
        %5634 = vmatmul.bf16.gmra.mxu0 %v5037
        %v5635 = vpop.f32.mrf.mxu0
        %v5636 = vadd.f32 %v4713, %v5635
        %v5637 = vpop.f32.mrf.mxu0
        %v5638 = vadd.f32 %v4713, %v5637
        %5639 = vmatmul.bf16.gmra.mxu0 %v5040
        %v5640 = vpop.f32.mrf.mxu0
        %v5641 = vadd.f32 %v4713, %v5640
        %v5642 = vpop.f32.mrf.mxu0
        %v5643 = vadd.f32 %v4713, %v5642
        %5644 = vmatmul.bf16.gmra.mxu0 %v5043
        %v5645 = vpop.f32.mrf.mxu0
        %v5646 = vadd.f32 %v4713, %v5645
        %v5647 = vpop.f32.mrf.mxu0
        %v5648 = vadd.f32 %v4713, %v5647
        %5649 = vmatmul.bf16.gmra.mxu0 %v5046
        %v5650 = vpop.f32.mrf.mxu0
        %v5651 = vadd.f32 %v4713, %v5650
        %v5652 = vpop.f32.mrf.mxu0
        %v5653 = vadd.f32 %v4713, %v5652
        %5654 = vmatmul.bf16.gmra.mxu0 %v5049
        %v5655 = vpop.f32.mrf.mxu0
        %v5656 = vadd.f32 %v4713, %v5655
        %v5657 = vpop.f32.mrf.mxu0
        %v5658 = vadd.f32 %v4713, %v5657
        %5659 = vmatmul.bf16.gmra.mxu0 %v5052
        %v5660 = vpop.f32.mrf.mxu0
        %v5661 = vadd.f32 %v4713, %v5660
        %v5662 = vpop.f32.mrf.mxu0
        %v5663 = vadd.f32 %v4713, %v5662
        %5664 = vmatmul.bf16.gmra.mxu0 %v5055
        %v5665 = vpop.f32.mrf.mxu0
        %v5666 = vadd.f32 %v4713, %v5665
        %v5667 = vpop.f32.mrf.mxu0
        %v5668 = vadd.f32 %v4713, %v5667
        %5669 = vmatmul.bf16.gmra.mxu0 %v5058
        %v5670 = vpop.f32.mrf.mxu0
        %v5671 = vadd.f32 %v4713, %v5670
        %v5672 = vpop.f32.mrf.mxu0
        %v5673 = vadd.f32 %v4713, %v5672
        %5674 = vmatmul.bf16.gmra.mxu0 %v5061
        %v5675 = vpop.f32.mrf.mxu0
        %v5676 = vadd.f32 %v4713, %v5675
        %v5677 = vpop.f32.mrf.mxu0
        %v5678 = vadd.f32 %v4713, %v5677
        %5679 = vmatmul.bf16.gmra.mxu0 %v5064
        %v5680 = vpop.f32.mrf.mxu0
        %v5681 = vadd.f32 %v4713, %v5680
        %v5682 = vpop.f32.mrf.mxu0
        %v5683 = vadd.f32 %v4713, %v5682
        %5684 = vmatmul.bf16.gmra.mxu0 %v5067
        %v5685 = vpop.f32.mrf.mxu0
        %v5686 = vadd.f32 %v4713, %v5685
        %v5687 = vpop.f32.mrf.mxu0
        %v5688 = vadd.f32 %v4713, %v5687
        %5689 = vmatmul.bf16.gmra.mxu0 %v5070
        %v5690 = vpop.f32.mrf.mxu0
        %v5691 = vadd.f32 %v4713, %v5690
        %v5692 = vpop.f32.mrf.mxu0
        %v5693 = vadd.f32 %v4713, %v5692
        %5694 = vmatmul.bf16.gmra.mxu0 %v5073
        %v5695 = vpop.f32.mrf.mxu0
        %v5696 = vadd.f32 %v4713, %v5695
        %v5697 = vpop.f32.mrf.mxu0
        %v5698 = vadd.f32 %v4713, %v5697
        %5699 = vmatmul.bf16.gmra.mxu0 %v5076
        %v5700 = vpop.f32.mrf.mxu0
        %v5701 = vadd.f32 %v4713, %v5700
        %v5702 = vpop.f32.mrf.mxu0
        %v5703 = vadd.f32 %v4713, %v5702
        %5704 = vmatmul.bf16.gmra.mxu0 %v5079
        %v5705 = vpop.f32.mrf.mxu0
        %v5706 = vadd.f32 %v4713, %v5705
        %v5707 = vpop.f32.mrf.mxu0
        %v5708 = vadd.f32 %v4713, %v5707
        %5709 = vmatmul.bf16.gmra.mxu0 %v5082
        %v5710 = vpop.f32.mrf.mxu0
        %v5711 = vadd.f32 %v4713, %v5710
        %v5712 = vpop.f32.mrf.mxu0
        %v5713 = vadd.f32 %v4713, %v5712
        %5714 = vmatmul.bf16.gmra.mxu0 %v5085
        %v5715 = vpop.f32.mrf.mxu0
        %v5716 = vadd.f32 %v4713, %v5715
        %v5717 = vpop.f32.mrf.mxu0
        %v5718 = vadd.f32 %v4713, %v5717
        %5719 = vmatmul.bf16.gmra.mxu0 %v5088
        %v5720 = vpop.f32.mrf.mxu0
        %v5721 = vadd.f32 %v4713, %v5720
        %v5722 = vpop.f32.mrf.mxu0
        %v5723 = vadd.f32 %v4713, %v5722
        %5724 = vmatmul.bf16.gmra.mxu0 %v5091
        %v5725 = vpop.f32.mrf.mxu0
        %v5726 = vadd.f32 %v4713, %v5725
        %v5727 = vpop.f32.mrf.mxu0
        %v5728 = vadd.f32 %v4713, %v5727
        %5729 = vmatmul.bf16.gmra.mxu0 %v5094
        %v5730 = vpop.f32.mrf.mxu0
        %v5731 = vadd.f32 %v4713, %v5730
        %v5732 = vpop.f32.mrf.mxu0
        %v5733 = vadd.f32 %v4713, %v5732
        %5734 = vmatmul.bf16.gmra.mxu0 %v5097
        %v5735 = vpop.f32.mrf.mxu0
        %v5736 = vadd.f32 %v4713, %v5735
        %v5737 = vpop.f32.mrf.mxu0
        %v5738 = vadd.f32 %v4713, %v5737
        %5739 = vmatmul.bf16.gmra.mxu0 %v5100
        %v5740 = vpop.f32.mrf.mxu0
        %v5741 = vadd.f32 %v4713, %v5740
        %v5742 = vpop.f32.mrf.mxu0
        %v5743 = vadd.f32 %v4713, %v5742
        %5744 = vmatmul.bf16.gmra.mxu0 %v5103
        %v5745 = vpop.f32.mrf.mxu0
        %v5746 = vadd.f32 %v4713, %v5745
        %v5747 = vpop.f32.mrf.mxu0
        %v5748 = vadd.f32 %v4713, %v5747
        %5749 = vmatmul.bf16.gmra.mxu0 %v5106
        %v5750 = vpop.f32.mrf.mxu0
        %v5751 = vadd.f32 %v4713, %v5750
        %v5752 = vpop.f32.mrf.mxu0
        %v5753 = vadd.f32 %v4713, %v5752
        %5754 = vmatmul.bf16.gmra.mxu0 %v5109
        %v5755 = vpop.f32.mrf.mxu0
        %v5756 = vadd.f32 %v4713, %v5755
        %v5757 = vpop.f32.mrf.mxu0
        %v5758 = vadd.f32 %v4713, %v5757
        %5759 = vdwg.mxu0
        %5760 = vxpose.xlu0.b32.start [1/16] %v5121, 128
        %5761 = vxpose.xlu0.b32.cont [2/16] %v5123, 128
        %5762 = vxpose.xlu0.b32.cont [3/16] %v5126, 128
        %5763 = vxpose.xlu0.b32.cont [4/16] %v5128, 128
        %5764 = vxpose.xlu0.b32.cont [5/16] %v5131, 128
        %5765 = vxpose.xlu0.b32.cont [6/16] %v5133, 128
        %5766 = vxpose.xlu0.b32.cont [7/16] %v5136, 128
        %5767 = vxpose.xlu0.b32.cont [8/16] %v5138, 128
        %5768 = vxpose.xlu0.b32.cont [9/16] %v5141, 128
        %5769 = vxpose.xlu0.b32.cont [10/16] %v5143, 128
        %5770 = vxpose.xlu0.b32.cont [11/16] %v5146, 128
        %5771 = vxpose.xlu0.b32.cont [12/16] %v5148, 128
        %5772 = vxpose.xlu0.b32.cont [13/16] %v5151, 128
        %5773 = vxpose.xlu0.b32.cont [14/16] %v5153, 128
        %5774 = vxpose.xlu0.b32.cont [15/16] %v5156, 128
        %5775 = vxpose.xlu0.b32.end [16/16] %v5158, 128
        %v5776 = vpop.trf.xlu0
        %v5777 = vpop.trf.xlu0
        %v5778 = vpop.trf.xlu0
        %v5779 = vpop.trf.xlu0
        %v5780 = vpop.trf.xlu0
        %v5781 = vpop.trf.xlu0
        %v5782 = vpop.trf.xlu0
        %v5783 = vpop.trf.xlu0
        %v5784 = vpop.trf.xlu0
        %v5785 = vpop.trf.xlu0
        %v5786 = vpop.trf.xlu0
        %v5787 = vpop.trf.xlu0
        %v5788 = vpop.trf.xlu0
        %v5789 = vpop.trf.xlu0
        %v5790 = vpop.trf.xlu0
        %v5791 = vpop.trf.xlu0
        %5792 = vxpose.xlu0.b32.start [1/16] %v5161, 128
        %5793 = vxpose.xlu0.b32.cont [2/16] %v5163, 128
        %5794 = vxpose.xlu0.b32.cont [3/16] %v5166, 128
        %5795 = vxpose.xlu0.b32.cont [4/16] %v5168, 128
        %5796 = vxpose.xlu0.b32.cont [5/16] %v5171, 128
        %5797 = vxpose.xlu0.b32.cont [6/16] %v5173, 128
        %5798 = vxpose.xlu0.b32.cont [7/16] %v5176, 128
        %5799 = vxpose.xlu0.b32.cont [8/16] %v5178, 128
        %5800 = vxpose.xlu0.b32.cont [9/16] %v5181, 128
        %5801 = vxpose.xlu0.b32.cont [10/16] %v5183, 128
        %5802 = vxpose.xlu0.b32.cont [11/16] %v5186, 128
        %5803 = vxpose.xlu0.b32.cont [12/16] %v5188, 128
        %5804 = vxpose.xlu0.b32.cont [13/16] %v5191, 128
        %5805 = vxpose.xlu0.b32.cont [14/16] %v5193, 128
        %5806 = vxpose.xlu0.b32.cont [15/16] %v5196, 128
        %5807 = vxpose.xlu0.b32.end [16/16] %v5198, 128
        %v5808 = vpop.trf.xlu0
        %v5809 = vpop.trf.xlu0
        %v5810 = vpop.trf.xlu0
        %v5811 = vpop.trf.xlu0
        %v5812 = vpop.trf.xlu0
        %v5813 = vpop.trf.xlu0
        %v5814 = vpop.trf.xlu0
        %v5815 = vpop.trf.xlu0
        %v5816 = vpop.trf.xlu0
        %v5817 = vpop.trf.xlu0
        %v5818 = vpop.trf.xlu0
        %v5819 = vpop.trf.xlu0
        %v5820 = vpop.trf.xlu0
        %v5821 = vpop.trf.xlu0
        %v5822 = vpop.trf.xlu0
        %v5823 = vpop.trf.xlu0
        %5824 = vxpose.xlu0.b32.start [1/16] %v5201, 128
        %5825 = vxpose.xlu0.b32.cont [2/16] %v5203, 128
        %5826 = vxpose.xlu0.b32.cont [3/16] %v5206, 128
        %5827 = vxpose.xlu0.b32.cont [4/16] %v5208, 128
        %5828 = vxpose.xlu0.b32.cont [5/16] %v5211, 128
        %5829 = vxpose.xlu0.b32.cont [6/16] %v5213, 128
        %5830 = vxpose.xlu0.b32.cont [7/16] %v5216, 128
        %5831 = vxpose.xlu0.b32.cont [8/16] %v5218, 128
        %5832 = vxpose.xlu0.b32.cont [9/16] %v5221, 128
        %5833 = vxpose.xlu0.b32.cont [10/16] %v5223, 128
        %5834 = vxpose.xlu0.b32.cont [11/16] %v5226, 128
        %5835 = vxpose.xlu0.b32.cont [12/16] %v5228, 128
        %5836 = vxpose.xlu0.b32.cont [13/16] %v5231, 128
        %5837 = vxpose.xlu0.b32.cont [14/16] %v5233, 128
        %5838 = vxpose.xlu0.b32.cont [15/16] %v5236, 128
        %5839 = vxpose.xlu0.b32.end [16/16] %v5238, 128
        %v5840 = vpop.trf.xlu0
        %v5841 = vpop.trf.xlu0
        %v5842 = vpop.trf.xlu0
        %v5843 = vpop.trf.xlu0
        %v5844 = vpop.trf.xlu0
        %v5845 = vpop.trf.xlu0
        %v5846 = vpop.trf.xlu0
        %v5847 = vpop.trf.xlu0
        %v5848 = vpop.trf.xlu0
        %v5849 = vpop.trf.xlu0
        %v5850 = vpop.trf.xlu0
        %v5851 = vpop.trf.xlu0
        %v5852 = vpop.trf.xlu0
        %v5853 = vpop.trf.xlu0
        %v5854 = vpop.trf.xlu0
        %v5855 = vpop.trf.xlu0
        %5856 = vxpose.xlu0.b32.start [1/16] %v5241, 128
        %5857 = vxpose.xlu0.b32.cont [2/16] %v5243, 128
        %5858 = vxpose.xlu0.b32.cont [3/16] %v5246, 128
        %5859 = vxpose.xlu0.b32.cont [4/16] %v5248, 128
        %5860 = vxpose.xlu0.b32.cont [5/16] %v5251, 128
        %5861 = vxpose.xlu0.b32.cont [6/16] %v5253, 128
        %5862 = vxpose.xlu0.b32.cont [7/16] %v5256, 128
        %5863 = vxpose.xlu0.b32.cont [8/16] %v5258, 128
        %5864 = vxpose.xlu0.b32.cont [9/16] %v5261, 128
        %5865 = vxpose.xlu0.b32.cont [10/16] %v5263, 128
        %5866 = vxpose.xlu0.b32.cont [11/16] %v5266, 128
        %5867 = vxpose.xlu0.b32.cont [12/16] %v5268, 128
        %5868 = vxpose.xlu0.b32.cont [13/16] %v5271, 128
        %5869 = vxpose.xlu0.b32.cont [14/16] %v5273, 128
        %5870 = vxpose.xlu0.b32.cont [15/16] %v5276, 128
        %5871 = vxpose.xlu0.b32.end [16/16] %v5278, 128
        %v5872 = vpop.trf.xlu0
        %v5873 = vpop.trf.xlu0
        %v5874 = vpop.trf.xlu0
        %v5875 = vpop.trf.xlu0
        %v5876 = vpop.trf.xlu0
        %v5877 = vpop.trf.xlu0
        %v5878 = vpop.trf.xlu0
        %v5879 = vpop.trf.xlu0
        %v5880 = vpop.trf.xlu0
        %v5881 = vpop.trf.xlu0
        %v5882 = vpop.trf.xlu0
        %v5883 = vpop.trf.xlu0
        %v5884 = vpop.trf.xlu0
        %v5885 = vpop.trf.xlu0
        %v5886 = vpop.trf.xlu0
        %v5887 = vpop.trf.xlu0
        %5888 = vxpose.xlu0.b32.start [1/16] %v5281, 128
        %5889 = vxpose.xlu0.b32.cont [2/16] %v5283, 128
        %5890 = vxpose.xlu0.b32.cont [3/16] %v5286, 128
        %5891 = vxpose.xlu0.b32.cont [4/16] %v5288, 128
        %5892 = vxpose.xlu0.b32.cont [5/16] %v5291, 128
        %5893 = vxpose.xlu0.b32.cont [6/16] %v5293, 128
        %5894 = vxpose.xlu0.b32.cont [7/16] %v5296, 128
        %5895 = vxpose.xlu0.b32.cont [8/16] %v5298, 128
        %5896 = vxpose.xlu0.b32.cont [9/16] %v5301, 128
        %5897 = vxpose.xlu0.b32.cont [10/16] %v5303, 128
        %5898 = vxpose.xlu0.b32.cont [11/16] %v5306, 128
        %5899 = vxpose.xlu0.b32.cont [12/16] %v5308, 128
        %5900 = vxpose.xlu0.b32.cont [13/16] %v5311, 128
        %5901 = vxpose.xlu0.b32.cont [14/16] %v5313, 128
        %5902 = vxpose.xlu0.b32.cont [15/16] %v5316, 128
        %5903 = vxpose.xlu0.b32.end [16/16] %v5318, 128
        %v5904 = vpop.trf.xlu0
        %v5905 = vpop.trf.xlu0
        %v5906 = vpop.trf.xlu0
        %v5907 = vpop.trf.xlu0
        %v5908 = vpop.trf.xlu0
        %v5909 = vpop.trf.xlu0
        %v5910 = vpop.trf.xlu0
        %v5911 = vpop.trf.xlu0
        %v5912 = vpop.trf.xlu0
        %v5913 = vpop.trf.xlu0
        %v5914 = vpop.trf.xlu0
        %v5915 = vpop.trf.xlu0
        %v5916 = vpop.trf.xlu0
        %v5917 = vpop.trf.xlu0
        %v5918 = vpop.trf.xlu0
        %v5919 = vpop.trf.xlu0
        %5920 = vxpose.xlu0.b32.start [1/16] %v5321, 128
        %5921 = vxpose.xlu0.b32.cont [2/16] %v5323, 128
        %5922 = vxpose.xlu0.b32.cont [3/16] %v5326, 128
        %5923 = vxpose.xlu0.b32.cont [4/16] %v5328, 128
        %5924 = vxpose.xlu0.b32.cont [5/16] %v5331, 128
        %5925 = vxpose.xlu0.b32.cont [6/16] %v5333, 128
        %5926 = vxpose.xlu0.b32.cont [7/16] %v5336, 128
        %5927 = vxpose.xlu0.b32.cont [8/16] %v5338, 128
        %5928 = vxpose.xlu0.b32.cont [9/16] %v5341, 128
        %5929 = vxpose.xlu0.b32.cont [10/16] %v5343, 128
        %5930 = vxpose.xlu0.b32.cont [11/16] %v5346, 128
        %5931 = vxpose.xlu0.b32.cont [12/16] %v5348, 128
        %5932 = vxpose.xlu0.b32.cont [13/16] %v5351, 128
        %5933 = vxpose.xlu0.b32.cont [14/16] %v5353, 128
        %5934 = vxpose.xlu0.b32.cont [15/16] %v5356, 128
        %5935 = vxpose.xlu0.b32.end [16/16] %v5358, 128
        %v5936 = vpop.trf.xlu0
        %v5937 = vpop.trf.xlu0
        %v5938 = vpop.trf.xlu0
        %v5939 = vpop.trf.xlu0
        %v5940 = vpop.trf.xlu0
        %v5941 = vpop.trf.xlu0
        %v5942 = vpop.trf.xlu0
        %v5943 = vpop.trf.xlu0
        %v5944 = vpop.trf.xlu0
        %v5945 = vpop.trf.xlu0
        %v5946 = vpop.trf.xlu0
        %v5947 = vpop.trf.xlu0
        %v5948 = vpop.trf.xlu0
        %v5949 = vpop.trf.xlu0
        %v5950 = vpop.trf.xlu0
        %v5951 = vpop.trf.xlu0
        %5952 = vxpose.xlu0.b32.start [1/16] %v5361, 128
        %5953 = vxpose.xlu0.b32.cont [2/16] %v5363, 128
        %5954 = vxpose.xlu0.b32.cont [3/16] %v5366, 128
        %5955 = vxpose.xlu0.b32.cont [4/16] %v5368, 128
        %5956 = vxpose.xlu0.b32.cont [5/16] %v5371, 128
        %5957 = vxpose.xlu0.b32.cont [6/16] %v5373, 128
        %5958 = vxpose.xlu0.b32.cont [7/16] %v5376, 128
        %5959 = vxpose.xlu0.b32.cont [8/16] %v5378, 128
        %5960 = vxpose.xlu0.b32.cont [9/16] %v5381, 128
        %5961 = vxpose.xlu0.b32.cont [10/16] %v5383, 128
        %5962 = vxpose.xlu0.b32.cont [11/16] %v5386, 128
        %5963 = vxpose.xlu0.b32.cont [12/16] %v5388, 128
        %5964 = vxpose.xlu0.b32.cont [13/16] %v5391, 128
        %5965 = vxpose.xlu0.b32.cont [14/16] %v5393, 128
        %5966 = vxpose.xlu0.b32.cont [15/16] %v5396, 128
        %5967 = vxpose.xlu0.b32.end [16/16] %v5398, 128
        %v5968 = vpop.trf.xlu0
        %v5969 = vpop.trf.xlu0
        %v5970 = vpop.trf.xlu0
        %v5971 = vpop.trf.xlu0
        %v5972 = vpop.trf.xlu0
        %v5973 = vpop.trf.xlu0
        %v5974 = vpop.trf.xlu0
        %v5975 = vpop.trf.xlu0
        %v5976 = vpop.trf.xlu0
        %v5977 = vpop.trf.xlu0
        %v5978 = vpop.trf.xlu0
        %v5979 = vpop.trf.xlu0
        %v5980 = vpop.trf.xlu0
        %v5981 = vpop.trf.xlu0
        %v5982 = vpop.trf.xlu0
        %v5983 = vpop.trf.xlu0
        %5984 = vxpose.xlu0.b32.start [1/16] %v5401, 128
        %5985 = vxpose.xlu0.b32.cont [2/16] %v5403, 128
        %5986 = vxpose.xlu0.b32.cont [3/16] %v5406, 128
        %5987 = vxpose.xlu0.b32.cont [4/16] %v5408, 128
        %5988 = vxpose.xlu0.b32.cont [5/16] %v5411, 128
        %5989 = vxpose.xlu0.b32.cont [6/16] %v5413, 128
        %5990 = vxpose.xlu0.b32.cont [7/16] %v5416, 128
        %5991 = vxpose.xlu0.b32.cont [8/16] %v5418, 128
        %5992 = vxpose.xlu0.b32.cont [9/16] %v5421, 128
        %5993 = vxpose.xlu0.b32.cont [10/16] %v5423, 128
        %5994 = vxpose.xlu0.b32.cont [11/16] %v5426, 128
        %5995 = vxpose.xlu0.b32.cont [12/16] %v5428, 128
        %5996 = vxpose.xlu0.b32.cont [13/16] %v5431, 128
        %5997 = vxpose.xlu0.b32.cont [14/16] %v5433, 128
        %5998 = vxpose.xlu0.b32.cont [15/16] %v5436, 128
        %5999 = vxpose.xlu0.b32.end [16/16] %v5438, 128
        %v6000 = vpop.trf.xlu0
        %v6001 = vpop.trf.xlu0
        %v6002 = vpop.trf.xlu0
        %v6003 = vpop.trf.xlu0
        %v6004 = vpop.trf.xlu0
        %v6005 = vpop.trf.xlu0
        %v6006 = vpop.trf.xlu0
        %v6007 = vpop.trf.xlu0
        %v6008 = vpop.trf.xlu0
        %v6009 = vpop.trf.xlu0
        %v6010 = vpop.trf.xlu0
        %v6011 = vpop.trf.xlu0
        %v6012 = vpop.trf.xlu0
        %v6013 = vpop.trf.xlu0
        %v6014 = vpop.trf.xlu0
        %v6015 = vpop.trf.xlu0
        %6016 = vxpose.xlu0.b32.start [1/16] %v5441, 128
        %6017 = vxpose.xlu0.b32.cont [2/16] %v5443, 128
        %6018 = vxpose.xlu0.b32.cont [3/16] %v5446, 128
        %6019 = vxpose.xlu0.b32.cont [4/16] %v5448, 128
        %6020 = vxpose.xlu0.b32.cont [5/16] %v5451, 128
        %6021 = vxpose.xlu0.b32.cont [6/16] %v5453, 128
        %6022 = vxpose.xlu0.b32.cont [7/16] %v5456, 128
        %6023 = vxpose.xlu0.b32.cont [8/16] %v5458, 128
        %6024 = vxpose.xlu0.b32.cont [9/16] %v5461, 128
        %6025 = vxpose.xlu0.b32.cont [10/16] %v5463, 128
        %6026 = vxpose.xlu0.b32.cont [11/16] %v5466, 128
        %6027 = vxpose.xlu0.b32.cont [12/16] %v5468, 128
        %6028 = vxpose.xlu0.b32.cont [13/16] %v5471, 128
        %6029 = vxpose.xlu0.b32.cont [14/16] %v5473, 128
        %6030 = vxpose.xlu0.b32.cont [15/16] %v5476, 128
        %6031 = vxpose.xlu0.b32.end [16/16] %v5478, 128
        %v6032 = vpop.trf.xlu0
        %v6033 = vpop.trf.xlu0
        %v6034 = vpop.trf.xlu0
        %v6035 = vpop.trf.xlu0
        %v6036 = vpop.trf.xlu0
        %v6037 = vpop.trf.xlu0
        %v6038 = vpop.trf.xlu0
        %v6039 = vpop.trf.xlu0
        %v6040 = vpop.trf.xlu0
        %v6041 = vpop.trf.xlu0
        %v6042 = vpop.trf.xlu0
        %v6043 = vpop.trf.xlu0
        %v6044 = vpop.trf.xlu0
        %v6045 = vpop.trf.xlu0
        %v6046 = vpop.trf.xlu0
        %v6047 = vpop.trf.xlu0
        %6048 = vxpose.xlu0.b32.start [1/16] %v5481, 128
        %6049 = vxpose.xlu0.b32.cont [2/16] %v5483, 128
        %6050 = vxpose.xlu0.b32.cont [3/16] %v5486, 128
        %6051 = vxpose.xlu0.b32.cont [4/16] %v5488, 128
        %6052 = vxpose.xlu0.b32.cont [5/16] %v5491, 128
        %6053 = vxpose.xlu0.b32.cont [6/16] %v5493, 128
        %6054 = vxpose.xlu0.b32.cont [7/16] %v5496, 128
        %6055 = vxpose.xlu0.b32.cont [8/16] %v5498, 128
        %6056 = vxpose.xlu0.b32.cont [9/16] %v5501, 128
        %6057 = vxpose.xlu0.b32.cont [10/16] %v5503, 128
        %6058 = vxpose.xlu0.b32.cont [11/16] %v5506, 128
        %6059 = vxpose.xlu0.b32.cont [12/16] %v5508, 128
        %6060 = vxpose.xlu0.b32.cont [13/16] %v5511, 128
        %6061 = vxpose.xlu0.b32.cont [14/16] %v5513, 128
        %6062 = vxpose.xlu0.b32.cont [15/16] %v5516, 128
        %6063 = vxpose.xlu0.b32.end [16/16] %v5518, 128
        %v6064 = vpop.trf.xlu0
        %v6065 = vpop.trf.xlu0
        %v6066 = vpop.trf.xlu0
        %v6067 = vpop.trf.xlu0
        %v6068 = vpop.trf.xlu0
        %v6069 = vpop.trf.xlu0
        %v6070 = vpop.trf.xlu0
        %v6071 = vpop.trf.xlu0
        %v6072 = vpop.trf.xlu0
        %v6073 = vpop.trf.xlu0
        %v6074 = vpop.trf.xlu0
        %v6075 = vpop.trf.xlu0
        %v6076 = vpop.trf.xlu0
        %v6077 = vpop.trf.xlu0
        %v6078 = vpop.trf.xlu0
        %v6079 = vpop.trf.xlu0
        %6080 = vxpose.xlu0.b32.start [1/16] %v5521, 128
        %6081 = vxpose.xlu0.b32.cont [2/16] %v5523, 128
        %6082 = vxpose.xlu0.b32.cont [3/16] %v5526, 128
        %6083 = vxpose.xlu0.b32.cont [4/16] %v5528, 128
        %6084 = vxpose.xlu0.b32.cont [5/16] %v5531, 128
        %6085 = vxpose.xlu0.b32.cont [6/16] %v5533, 128
        %6086 = vxpose.xlu0.b32.cont [7/16] %v5536, 128
        %6087 = vxpose.xlu0.b32.cont [8/16] %v5538, 128
        %6088 = vxpose.xlu0.b32.cont [9/16] %v5541, 128
        %6089 = vxpose.xlu0.b32.cont [10/16] %v5543, 128
        %6090 = vxpose.xlu0.b32.cont [11/16] %v5546, 128
        %6091 = vxpose.xlu0.b32.cont [12/16] %v5548, 128
        %6092 = vxpose.xlu0.b32.cont [13/16] %v5551, 128
        %6093 = vxpose.xlu0.b32.cont [14/16] %v5553, 128
        %6094 = vxpose.xlu0.b32.cont [15/16] %v5556, 128
        %6095 = vxpose.xlu0.b32.end [16/16] %v5558, 128
        %v6096 = vpop.trf.xlu0
        %v6097 = vpop.trf.xlu0
        %v6098 = vpop.trf.xlu0
        %v6099 = vpop.trf.xlu0
        %v6100 = vpop.trf.xlu0
        %v6101 = vpop.trf.xlu0
        %v6102 = vpop.trf.xlu0
        %v6103 = vpop.trf.xlu0
        %v6104 = vpop.trf.xlu0
        %v6105 = vpop.trf.xlu0
        %v6106 = vpop.trf.xlu0
        %v6107 = vpop.trf.xlu0
        %v6108 = vpop.trf.xlu0
        %v6109 = vpop.trf.xlu0
        %v6110 = vpop.trf.xlu0
        %v6111 = vpop.trf.xlu0
        %6112 = vxpose.xlu0.b32.start [1/16] %v5561, 128
        %6113 = vxpose.xlu0.b32.cont [2/16] %v5563, 128
        %6114 = vxpose.xlu0.b32.cont [3/16] %v5566, 128
        %6115 = vxpose.xlu0.b32.cont [4/16] %v5568, 128
        %6116 = vxpose.xlu0.b32.cont [5/16] %v5571, 128
        %6117 = vxpose.xlu0.b32.cont [6/16] %v5573, 128
        %6118 = vxpose.xlu0.b32.cont [7/16] %v5576, 128
        %6119 = vxpose.xlu0.b32.cont [8/16] %v5578, 128
        %6120 = vxpose.xlu0.b32.cont [9/16] %v5581, 128
        %6121 = vxpose.xlu0.b32.cont [10/16] %v5583, 128
        %6122 = vxpose.xlu0.b32.cont [11/16] %v5586, 128
        %6123 = vxpose.xlu0.b32.cont [12/16] %v5588, 128
        %6124 = vxpose.xlu0.b32.cont [13/16] %v5591, 128
        %6125 = vxpose.xlu0.b32.cont [14/16] %v5593, 128
        %6126 = vxpose.xlu0.b32.cont [15/16] %v5596, 128
        %6127 = vxpose.xlu0.b32.end [16/16] %v5598, 128
        %v6128 = vpop.trf.xlu0
        %v6129 = vpop.trf.xlu0
        %v6130 = vpop.trf.xlu0
        %v6131 = vpop.trf.xlu0
        %v6132 = vpop.trf.xlu0
        %v6133 = vpop.trf.xlu0
        %v6134 = vpop.trf.xlu0
        %v6135 = vpop.trf.xlu0
        %v6136 = vpop.trf.xlu0
        %v6137 = vpop.trf.xlu0
        %v6138 = vpop.trf.xlu0
        %v6139 = vpop.trf.xlu0
        %v6140 = vpop.trf.xlu0
        %v6141 = vpop.trf.xlu0
        %v6142 = vpop.trf.xlu0
        %v6143 = vpop.trf.xlu0
        %6144 = vxpose.xlu0.b32.start [1/16] %v5601, 128
        %6145 = vxpose.xlu0.b32.cont [2/16] %v5603, 128
        %6146 = vxpose.xlu0.b32.cont [3/16] %v5606, 128
        %6147 = vxpose.xlu0.b32.cont [4/16] %v5608, 128
        %6148 = vxpose.xlu0.b32.cont [5/16] %v5611, 128
        %6149 = vxpose.xlu0.b32.cont [6/16] %v5613, 128
        %6150 = vxpose.xlu0.b32.cont [7/16] %v5616, 128
        %6151 = vxpose.xlu0.b32.cont [8/16] %v5618, 128
        %6152 = vxpose.xlu0.b32.cont [9/16] %v5621, 128
        %6153 = vxpose.xlu0.b32.cont [10/16] %v5623, 128
        %6154 = vxpose.xlu0.b32.cont [11/16] %v5626, 128
        %6155 = vxpose.xlu0.b32.cont [12/16] %v5628, 128
        %6156 = vxpose.xlu0.b32.cont [13/16] %v5631, 128
        %6157 = vxpose.xlu0.b32.cont [14/16] %v5633, 128
        %6158 = vxpose.xlu0.b32.cont [15/16] %v5636, 128
        %6159 = vxpose.xlu0.b32.end [16/16] %v5638, 128
        %v6160 = vpop.trf.xlu0
        %v6161 = vpop.trf.xlu0
        %v6162 = vpop.trf.xlu0
        %v6163 = vpop.trf.xlu0
        %v6164 = vpop.trf.xlu0
        %v6165 = vpop.trf.xlu0
        %v6166 = vpop.trf.xlu0
        %v6167 = vpop.trf.xlu0
        %v6168 = vpop.trf.xlu0
        %v6169 = vpop.trf.xlu0
        %v6170 = vpop.trf.xlu0
        %v6171 = vpop.trf.xlu0
        %v6172 = vpop.trf.xlu0
        %v6173 = vpop.trf.xlu0
        %v6174 = vpop.trf.xlu0
        %v6175 = vpop.trf.xlu0
        %6176 = vxpose.xlu0.b32.start [1/16] %v5641, 128
        %6177 = vxpose.xlu0.b32.cont [2/16] %v5643, 128
        %6178 = vxpose.xlu0.b32.cont [3/16] %v5646, 128
        %6179 = vxpose.xlu0.b32.cont [4/16] %v5648, 128
        %6180 = vxpose.xlu0.b32.cont [5/16] %v5651, 128
        %6181 = vxpose.xlu0.b32.cont [6/16] %v5653, 128
        %6182 = vxpose.xlu0.b32.cont [7/16] %v5656, 128
        %6183 = vxpose.xlu0.b32.cont [8/16] %v5658, 128
        %6184 = vxpose.xlu0.b32.cont [9/16] %v5661, 128
        %6185 = vxpose.xlu0.b32.cont [10/16] %v5663, 128
        %6186 = vxpose.xlu0.b32.cont [11/16] %v5666, 128
        %6187 = vxpose.xlu0.b32.cont [12/16] %v5668, 128
        %6188 = vxpose.xlu0.b32.cont [13/16] %v5671, 128
        %6189 = vxpose.xlu0.b32.cont [14/16] %v5673, 128
        %6190 = vxpose.xlu0.b32.cont [15/16] %v5676, 128
        %6191 = vxpose.xlu0.b32.end [16/16] %v5678, 128
        %v6192 = vpop.trf.xlu0
        %v6193 = vpop.trf.xlu0
        %v6194 = vpop.trf.xlu0
        %v6195 = vpop.trf.xlu0
        %v6196 = vpop.trf.xlu0
        %v6197 = vpop.trf.xlu0
        %v6198 = vpop.trf.xlu0
        %v6199 = vpop.trf.xlu0
        %v6200 = vpop.trf.xlu0
        %v6201 = vpop.trf.xlu0
        %v6202 = vpop.trf.xlu0
        %v6203 = vpop.trf.xlu0
        %v6204 = vpop.trf.xlu0
        %v6205 = vpop.trf.xlu0
        %v6206 = vpop.trf.xlu0
        %v6207 = vpop.trf.xlu0
        %6208 = vxpose.xlu0.b32.start [1/16] %v5681, 128
        %6209 = vxpose.xlu0.b32.cont [2/16] %v5683, 128
        %6210 = vxpose.xlu0.b32.cont [3/16] %v5686, 128
        %6211 = vxpose.xlu0.b32.cont [4/16] %v5688, 128
        %6212 = vxpose.xlu0.b32.cont [5/16] %v5691, 128
        %6213 = vxpose.xlu0.b32.cont [6/16] %v5693, 128
        %6214 = vxpose.xlu0.b32.cont [7/16] %v5696, 128
        %6215 = vxpose.xlu0.b32.cont [8/16] %v5698, 128
        %6216 = vxpose.xlu0.b32.cont [9/16] %v5701, 128
        %6217 = vxpose.xlu0.b32.cont [10/16] %v5703, 128
        %6218 = vxpose.xlu0.b32.cont [11/16] %v5706, 128
        %6219 = vxpose.xlu0.b32.cont [12/16] %v5708, 128
        %6220 = vxpose.xlu0.b32.cont [13/16] %v5711, 128
        %6221 = vxpose.xlu0.b32.cont [14/16] %v5713, 128
        %6222 = vxpose.xlu0.b32.cont [15/16] %v5716, 128
        %6223 = vxpose.xlu0.b32.end [16/16] %v5718, 128
        %v6224 = vpop.trf.xlu0
        %v6225 = vpop.trf.xlu0
        %v6226 = vpop.trf.xlu0
        %v6227 = vpop.trf.xlu0
        %v6228 = vpop.trf.xlu0
        %v6229 = vpop.trf.xlu0
        %v6230 = vpop.trf.xlu0
        %v6231 = vpop.trf.xlu0
        %v6232 = vpop.trf.xlu0
        %v6233 = vpop.trf.xlu0
        %v6234 = vpop.trf.xlu0
        %v6235 = vpop.trf.xlu0
        %v6236 = vpop.trf.xlu0
        %v6237 = vpop.trf.xlu0
        %v6238 = vpop.trf.xlu0
        %v6239 = vpop.trf.xlu0
        %6240 = vxpose.xlu0.b32.start [1/16] %v5721, 128
        %6241 = vxpose.xlu0.b32.cont [2/16] %v5723, 128
        %6242 = vxpose.xlu0.b32.cont [3/16] %v5726, 128
        %6243 = vxpose.xlu0.b32.cont [4/16] %v5728, 128
        %6244 = vxpose.xlu0.b32.cont [5/16] %v5731, 128
        %6245 = vxpose.xlu0.b32.cont [6/16] %v5733, 128
        %6246 = vxpose.xlu0.b32.cont [7/16] %v5736, 128
        %6247 = vxpose.xlu0.b32.cont [8/16] %v5738, 128
        %6248 = vxpose.xlu0.b32.cont [9/16] %v5741, 128
        %6249 = vxpose.xlu0.b32.cont [10/16] %v5743, 128
        %6250 = vxpose.xlu0.b32.cont [11/16] %v5746, 128
        %6251 = vxpose.xlu0.b32.cont [12/16] %v5748, 128
        %6252 = vxpose.xlu0.b32.cont [13/16] %v5751, 128
        %6253 = vxpose.xlu0.b32.cont [14/16] %v5753, 128
        %6254 = vxpose.xlu0.b32.cont [15/16] %v5756, 128
        %6255 = vxpose.xlu0.b32.end [16/16] %v5758, 128
        %v6256 = vpop.trf.xlu0
        %v6257 = vpop.trf.xlu0
        %v6258 = vpop.trf.xlu0
        %v6259 = vpop.trf.xlu0
        %v6260 = vpop.trf.xlu0
        %v6261 = vpop.trf.xlu0
        %v6262 = vpop.trf.xlu0
        %v6263 = vpop.trf.xlu0
        %v6264 = vpop.trf.xlu0
        %v6265 = vpop.trf.xlu0
        %v6266 = vpop.trf.xlu0
        %v6267 = vpop.trf.xlu0
        %v6268 = vpop.trf.xlu0
        %v6269 = vpop.trf.xlu0
        %v6270 = vpop.trf.xlu0
        %v6271 = vpop.trf.xlu0
        %v6274 = vrot.slane %v5840, 7
        %v6275 = vrot.slane %v5872, 7
        %v6280 = vrot.slane %v5904, 6
        %v6281 = vrot.slane %v5936, 6
        %v6286 = vrot.slane %v5968, 5
        %v6287 = vrot.slane %v6000, 5
        %v6292 = vrot.slane %v6032, 4
        %v6293 = vrot.slane %v6064, 4
        %v6298 = vrot.slane %v6096, 3
        %v6299 = vrot.slane %v6128, 3
        %v6304 = vrot.slane %v6160, 2
        %v6305 = vrot.slane %v6192, 2
        %v6310 = vrot.slane %v6224, 1
        %v6311 = vrot.slane %v6256, 1
        %vm6314 = vcmask 1040384
        %v6315 = vsel %vm6314, %v5776, %v6274
        %v6316 = vsel %vm6314, %v5808, %v6275
        %vm6317 = vcmask 1041408
        %v6318 = vsel %vm6317, %v6315, %v6280
        %v6319 = vsel %vm6317, %v6316, %v6281
        %vm6320 = vcmask 1042432
        %v6321 = vsel %vm6320, %v6318, %v6286
        %v6322 = vsel %vm6320, %v6319, %v6287
        %vm6323 = vcmask 1043456
        %v6324 = vsel %vm6323, %v6321, %v6292
        %v6325 = vsel %vm6323, %v6322, %v6293
        %vm6326 = vcmask 1044480
        %v6327 = vsel %vm6326, %v6324, %v6298
        %v6328 = vsel %vm6326, %v6325, %v6299
        %v6329 = vsel %vm471, %v6327, %v6304
        %v6330 = vsel %vm471, %v6328, %v6305
        %vm6331 = vcmask 1046528
        %v6332 = vsel %vm6331, %v6329, %v6310
        %v6333 = vsel %vm6331, %v6330, %v6311
        %v6334 = vsub.f32 %v6332, 1.0
        %v6335 = vsub.f32 %v6333, 1.0
        %v6336 = vmax.f32 %v6334, 0.0
        %v6337 = vmax.f32 %v6335, 0.0
        %v6338 = vand.u32 2147483647, %v6334
        %v6339 = vand.u32 2147483647, %v6335
        %v6340 = vsub.f32 0.0, %v6338
        %v6341 = vsub.f32 0.0, %v6339
        %v6342 = vmul.f32 %v6340, 1.442695
        %v6343 = vpow.pop %v6342
        %v6344 = vmul.f32 %v6341, 1.442695
        %v6345 = vpow.pop %v6344
        %v6346 = vadd.f32 %v6343, 1.0
        %v6347 = vadd.f32 %v6345, 1.0
        %v6348 = vlog2.pop %v6346
        %v6349 = vmul.f32 %v6348, 0.6931472
        %v6350 = vlog2.pop %v6347
        %v6351 = vmul.f32 %v6350, 0.6931472
        %v6352 = vadd.f32 %v6336, %v6349
        %v6353 = vadd.f32 %v6337, %v6351
        %v6354 = vsub.f32 0.0, %v5776
        %v6355 = vsub.f32 0.0, %v5808
        %v6356 = vsub.f32 0.0, %v5840
        %v6357 = vsub.f32 0.0, %v5872
        %v6358 = vsub.f32 0.0, %v5904
        %v6359 = vsub.f32 0.0, %v5936
        %v6360 = vsub.f32 0.0, %v5968
        %v6361 = vsub.f32 0.0, %v6000
        %v6362 = vsub.f32 0.0, %v6032
        %v6363 = vsub.f32 0.0, %v6064
        %v6364 = vsub.f32 0.0, %v6096
        %v6365 = vsub.f32 0.0, %v6128
        %v6366 = vsub.f32 0.0, %v6160
        %v6367 = vsub.f32 0.0, %v6192
        %v6368 = vsub.f32 0.0, %v6224
        %v6369 = vsub.f32 0.0, %v6256
        %v6370 = vmul.f32 %v6354, 1.442695
        %v6371 = vpow.pop %v6370
        %v6372 = vmul.f32 %v6355, 1.442695
        %v6373 = vpow.pop %v6372
        %v6374 = vmul.f32 %v6356, 1.442695
        %v6375 = vpow.pop %v6374
        %v6376 = vmul.f32 %v6357, 1.442695
        %v6377 = vpow.pop %v6376
        %v6378 = vmul.f32 %v6358, 1.442695
        %v6379 = vpow.pop %v6378
        %v6380 = vmul.f32 %v6359, 1.442695
        %v6381 = vpow.pop %v6380
        %v6382 = vmul.f32 %v6360, 1.442695
        %v6383 = vpow.pop %v6382
        %v6384 = vmul.f32 %v6361, 1.442695
        %v6385 = vpow.pop %v6384
        %v6386 = vmul.f32 %v6362, 1.442695
        %v6387 = vpow.pop %v6386
        %v6388 = vmul.f32 %v6363, 1.442695
        %v6389 = vpow.pop %v6388
        %v6390 = vmul.f32 %v6364, 1.442695
        %v6391 = vpow.pop %v6390
        %v6392 = vmul.f32 %v6365, 1.442695
        %v6393 = vpow.pop %v6392
        %v6394 = vmul.f32 %v6366, 1.442695
        %v6395 = vpow.pop %v6394
        %v6396 = vmul.f32 %v6367, 1.442695
        %v6397 = vpow.pop %v6396
        %v6398 = vmul.f32 %v6368, 1.442695
        %v6399 = vpow.pop %v6398
        %v6400 = vmul.f32 %v6369, 1.442695
        %v6401 = vpow.pop %v6400
        %v6402 = vadd.f32 %v6371, 1.0
        %v6403 = vadd.f32 %v6373, 1.0
        %v6404 = vadd.f32 %v6375, 1.0
        %v6405 = vadd.f32 %v6377, 1.0
        %v6406 = vadd.f32 %v6379, 1.0
        %v6407 = vadd.f32 %v6381, 1.0
        %v6408 = vadd.f32 %v6383, 1.0
        %v6409 = vadd.f32 %v6385, 1.0
        %v6410 = vadd.f32 %v6387, 1.0
        %v6411 = vadd.f32 %v6389, 1.0
        %v6412 = vadd.f32 %v6391, 1.0
        %v6413 = vadd.f32 %v6393, 1.0
        %v6414 = vadd.f32 %v6395, 1.0
        %v6415 = vadd.f32 %v6397, 1.0
        %v6416 = vadd.f32 %v6399, 1.0
        %v6417 = vadd.f32 %v6401, 1.0
        %v6418 = vrcp.pop %v6402
        %v6419 = vmul.f32 %v6402, %v6418
        %v6420 = vsub.f32 1.0, %v6419
        %v6421 = vmul.f32 %v6418, %v6420
        %v6422 = vadd.f32 %v6418, %v6421
        %vm6423 = vweird.f32 %v6402
        %vm6424 = vweird.f32 %v6418
        %vm6425 = vmor %vm6423, %vm6424
        %v6426 = vsel %vm6425, %v6418, %v6422
        %v6427 = vand.u32 2147483647, %v6402
        %vm6428 = vcmp.eq.f32.partialorder %v6427, 8.507059e+37
        %v6429 = vand.u32 %v6402, 2147483648
        %v6430 = vor.u32 1.1754944e-38, %v6429
        %v6431 = vsel %vm6428, %v6430, %v6426
        %v6432 = vmul.f32 1.0, %v6431
        %v6433 = vrcp.pop %v6403
        %v6434 = vmul.f32 %v6403, %v6433
        %v6435 = vsub.f32 1.0, %v6434
        %v6436 = vmul.f32 %v6433, %v6435
        %v6437 = vadd.f32 %v6433, %v6436
        %vm6438 = vweird.f32 %v6403
        %vm6439 = vweird.f32 %v6433
        %vm6440 = vmor %vm6438, %vm6439
        %v6441 = vsel %vm6440, %v6433, %v6437
        %v6442 = vand.u32 2147483647, %v6403
        %vm6443 = vcmp.eq.f32.partialorder %v6442, 8.507059e+37
        %v6444 = vand.u32 %v6403, 2147483648
        %v6445 = vor.u32 1.1754944e-38, %v6444
        %v6446 = vsel %vm6443, %v6445, %v6441
        %v6447 = vmul.f32 1.0, %v6446
        %v6448 = vrcp.pop %v6404
        %v6449 = vmul.f32 %v6404, %v6448
        %v6450 = vsub.f32 1.0, %v6449
        %v6451 = vmul.f32 %v6448, %v6450
        %v6452 = vadd.f32 %v6448, %v6451
        %vm6453 = vweird.f32 %v6404
        %vm6454 = vweird.f32 %v6448
        %vm6455 = vmor %vm6453, %vm6454
        %v6456 = vsel %vm6455, %v6448, %v6452
        %v6457 = vand.u32 2147483647, %v6404
        %vm6458 = vcmp.eq.f32.partialorder %v6457, 8.507059e+37
        %v6459 = vand.u32 %v6404, 2147483648
        %v6460 = vor.u32 1.1754944e-38, %v6459
        %v6461 = vsel %vm6458, %v6460, %v6456
        %v6462 = vmul.f32 1.0, %v6461
        %v6463 = vrcp.pop %v6405
        %v6464 = vmul.f32 %v6405, %v6463
        %v6465 = vsub.f32 1.0, %v6464
        %v6466 = vmul.f32 %v6463, %v6465
        %v6467 = vadd.f32 %v6463, %v6466
        %vm6468 = vweird.f32 %v6405
        %vm6469 = vweird.f32 %v6463
        %vm6470 = vmor %vm6468, %vm6469
        %v6471 = vsel %vm6470, %v6463, %v6467
        %v6472 = vand.u32 2147483647, %v6405
        %vm6473 = vcmp.eq.f32.partialorder %v6472, 8.507059e+37
        %v6474 = vand.u32 %v6405, 2147483648
        %v6475 = vor.u32 1.1754944e-38, %v6474
        %v6476 = vsel %vm6473, %v6475, %v6471
        %v6477 = vmul.f32 1.0, %v6476
        %v6478 = vrcp.pop %v6406
        %v6479 = vmul.f32 %v6406, %v6478
        %v6480 = vsub.f32 1.0, %v6479
        %v6481 = vmul.f32 %v6478, %v6480
        %v6482 = vadd.f32 %v6478, %v6481
        %vm6483 = vweird.f32 %v6406
        %vm6484 = vweird.f32 %v6478
        %vm6485 = vmor %vm6483, %vm6484
        %v6486 = vsel %vm6485, %v6478, %v6482
        %v6487 = vand.u32 2147483647, %v6406
        %vm6488 = vcmp.eq.f32.partialorder %v6487, 8.507059e+37
        %v6489 = vand.u32 %v6406, 2147483648
        %v6490 = vor.u32 1.1754944e-38, %v6489
        %v6491 = vsel %vm6488, %v6490, %v6486
        %v6492 = vmul.f32 1.0, %v6491
        %v6493 = vrcp.pop %v6407
        %v6494 = vmul.f32 %v6407, %v6493
        %v6495 = vsub.f32 1.0, %v6494
        %v6496 = vmul.f32 %v6493, %v6495
        %v6497 = vadd.f32 %v6493, %v6496
        %vm6498 = vweird.f32 %v6407
        %vm6499 = vweird.f32 %v6493
        %vm6500 = vmor %vm6498, %vm6499
        %v6501 = vsel %vm6500, %v6493, %v6497
        %v6502 = vand.u32 2147483647, %v6407
        %vm6503 = vcmp.eq.f32.partialorder %v6502, 8.507059e+37
        %v6504 = vand.u32 %v6407, 2147483648
        %v6505 = vor.u32 1.1754944e-38, %v6504
        %v6506 = vsel %vm6503, %v6505, %v6501
        %v6507 = vmul.f32 1.0, %v6506
        %v6508 = vrcp.pop %v6408
        %v6509 = vmul.f32 %v6408, %v6508
        %v6510 = vsub.f32 1.0, %v6509
        %v6511 = vmul.f32 %v6508, %v6510
        %v6512 = vadd.f32 %v6508, %v6511
        %vm6513 = vweird.f32 %v6408
        %vm6514 = vweird.f32 %v6508
        %vm6515 = vmor %vm6513, %vm6514
        %v6516 = vsel %vm6515, %v6508, %v6512
        %v6517 = vand.u32 2147483647, %v6408
        %vm6518 = vcmp.eq.f32.partialorder %v6517, 8.507059e+37
        %v6519 = vand.u32 %v6408, 2147483648
        %v6520 = vor.u32 1.1754944e-38, %v6519
        %v6521 = vsel %vm6518, %v6520, %v6516
        %v6522 = vmul.f32 1.0, %v6521
        %v6523 = vrcp.pop %v6409
        %v6524 = vmul.f32 %v6409, %v6523
        %v6525 = vsub.f32 1.0, %v6524
        %v6526 = vmul.f32 %v6523, %v6525
        %v6527 = vadd.f32 %v6523, %v6526
        %vm6528 = vweird.f32 %v6409
        %vm6529 = vweird.f32 %v6523
        %vm6530 = vmor %vm6528, %vm6529
        %v6531 = vsel %vm6530, %v6523, %v6527
        %v6532 = vand.u32 2147483647, %v6409
        %vm6533 = vcmp.eq.f32.partialorder %v6532, 8.507059e+37
        %v6534 = vand.u32 %v6409, 2147483648
        %v6535 = vor.u32 1.1754944e-38, %v6534
        %v6536 = vsel %vm6533, %v6535, %v6531
        %v6537 = vmul.f32 1.0, %v6536
        %v6538 = vrcp.pop %v6410
        %v6539 = vmul.f32 %v6410, %v6538
        %v6540 = vsub.f32 1.0, %v6539
        %v6541 = vmul.f32 %v6538, %v6540
        %v6542 = vadd.f32 %v6538, %v6541
        %vm6543 = vweird.f32 %v6410
        %vm6544 = vweird.f32 %v6538
        %vm6545 = vmor %vm6543, %vm6544
        %v6546 = vsel %vm6545, %v6538, %v6542
        %v6547 = vand.u32 2147483647, %v6410
        %vm6548 = vcmp.eq.f32.partialorder %v6547, 8.507059e+37
        %v6549 = vand.u32 %v6410, 2147483648
        %v6550 = vor.u32 1.1754944e-38, %v6549
        %v6551 = vsel %vm6548, %v6550, %v6546
        %v6552 = vmul.f32 1.0, %v6551
        %v6553 = vrcp.pop %v6411
        %v6554 = vmul.f32 %v6411, %v6553
        %v6555 = vsub.f32 1.0, %v6554
        %v6556 = vmul.f32 %v6553, %v6555
        %v6557 = vadd.f32 %v6553, %v6556
        %vm6558 = vweird.f32 %v6411
        %vm6559 = vweird.f32 %v6553
        %vm6560 = vmor %vm6558, %vm6559
        %v6561 = vsel %vm6560, %v6553, %v6557
        %v6562 = vand.u32 2147483647, %v6411
        %vm6563 = vcmp.eq.f32.partialorder %v6562, 8.507059e+37
        %v6564 = vand.u32 %v6411, 2147483648
        %v6565 = vor.u32 1.1754944e-38, %v6564
        %v6566 = vsel %vm6563, %v6565, %v6561
        %v6567 = vmul.f32 1.0, %v6566
        %v6568 = vrcp.pop %v6412
        %v6569 = vmul.f32 %v6412, %v6568
        %v6570 = vsub.f32 1.0, %v6569
        %v6571 = vmul.f32 %v6568, %v6570
        %v6572 = vadd.f32 %v6568, %v6571
        %vm6573 = vweird.f32 %v6412
        %vm6574 = vweird.f32 %v6568
        %vm6575 = vmor %vm6573, %vm6574
        %v6576 = vsel %vm6575, %v6568, %v6572
        %v6577 = vand.u32 2147483647, %v6412
        %vm6578 = vcmp.eq.f32.partialorder %v6577, 8.507059e+37
        %v6579 = vand.u32 %v6412, 2147483648
        %v6580 = vor.u32 1.1754944e-38, %v6579
        %v6581 = vsel %vm6578, %v6580, %v6576
        %v6582 = vmul.f32 1.0, %v6581
        %v6583 = vrcp.pop %v6413
        %v6584 = vmul.f32 %v6413, %v6583
        %v6585 = vsub.f32 1.0, %v6584
        %v6586 = vmul.f32 %v6583, %v6585
        %v6587 = vadd.f32 %v6583, %v6586
        %vm6588 = vweird.f32 %v6413
        %vm6589 = vweird.f32 %v6583
        %vm6590 = vmor %vm6588, %vm6589
        %v6591 = vsel %vm6590, %v6583, %v6587
        %v6592 = vand.u32 2147483647, %v6413
        %vm6593 = vcmp.eq.f32.partialorder %v6592, 8.507059e+37
        %v6594 = vand.u32 %v6413, 2147483648
        %v6595 = vor.u32 1.1754944e-38, %v6594
        %v6596 = vsel %vm6593, %v6595, %v6591
        %v6597 = vmul.f32 1.0, %v6596
        %v6598 = vrcp.pop %v6414
        %v6599 = vmul.f32 %v6414, %v6598
        %v6600 = vsub.f32 1.0, %v6599
        %v6601 = vmul.f32 %v6598, %v6600
        %v6602 = vadd.f32 %v6598, %v6601
        %vm6603 = vweird.f32 %v6414
        %vm6604 = vweird.f32 %v6598
        %vm6605 = vmor %vm6603, %vm6604
        %v6606 = vsel %vm6605, %v6598, %v6602
        %v6607 = vand.u32 2147483647, %v6414
        %vm6608 = vcmp.eq.f32.partialorder %v6607, 8.507059e+37
        %v6609 = vand.u32 %v6414, 2147483648
        %v6610 = vor.u32 1.1754944e-38, %v6609
        %v6611 = vsel %vm6608, %v6610, %v6606
        %v6612 = vmul.f32 1.0, %v6611
        %v6613 = vrcp.pop %v6415
        %v6614 = vmul.f32 %v6415, %v6613
        %v6615 = vsub.f32 1.0, %v6614
        %v6616 = vmul.f32 %v6613, %v6615
        %v6617 = vadd.f32 %v6613, %v6616
        %vm6618 = vweird.f32 %v6415
        %vm6619 = vweird.f32 %v6613
        %vm6620 = vmor %vm6618, %vm6619
        %v6621 = vsel %vm6620, %v6613, %v6617
        %v6622 = vand.u32 2147483647, %v6415
        %vm6623 = vcmp.eq.f32.partialorder %v6622, 8.507059e+37
        %v6624 = vand.u32 %v6415, 2147483648
        %v6625 = vor.u32 1.1754944e-38, %v6624
        %v6626 = vsel %vm6623, %v6625, %v6621
        %v6627 = vmul.f32 1.0, %v6626
        %v6628 = vrcp.pop %v6416
        %v6629 = vmul.f32 %v6416, %v6628
        %v6630 = vsub.f32 1.0, %v6629
        %v6631 = vmul.f32 %v6628, %v6630
        %v6632 = vadd.f32 %v6628, %v6631
        %vm6633 = vweird.f32 %v6416
        %vm6634 = vweird.f32 %v6628
        %vm6635 = vmor %vm6633, %vm6634
        %v6636 = vsel %vm6635, %v6628, %v6632
        %v6637 = vand.u32 2147483647, %v6416
        %vm6638 = vcmp.eq.f32.partialorder %v6637, 8.507059e+37
        %v6639 = vand.u32 %v6416, 2147483648
        %v6640 = vor.u32 1.1754944e-38, %v6639
        %v6641 = vsel %vm6638, %v6640, %v6636
        %v6642 = vmul.f32 1.0, %v6641
        %v6643 = vrcp.pop %v6417
        %v6644 = vmul.f32 %v6417, %v6643
        %v6645 = vsub.f32 1.0, %v6644
        %v6646 = vmul.f32 %v6643, %v6645
        %v6647 = vadd.f32 %v6643, %v6646
        %vm6648 = vweird.f32 %v6417
        %vm6649 = vweird.f32 %v6643
        %vm6650 = vmor %vm6648, %vm6649
        %v6651 = vsel %vm6650, %v6643, %v6647
        %v6652 = vand.u32 2147483647, %v6417
        %vm6653 = vcmp.eq.f32.partialorder %v6652, 8.507059e+37
        %v6654 = vand.u32 %v6417, 2147483648
        %v6655 = vor.u32 1.1754944e-38, %v6654
        %v6656 = vsel %vm6653, %v6655, %v6651
        %v6657 = vmul.f32 1.0, %v6656
        %v6658 = vmul.f32 %v6432, 1.002
        %v6659 = vmul.f32 %v6447, 1.002
        %v6660 = vmul.f32 %v6462, 1.002
        %v6661 = vmul.f32 %v6477, 1.002
        %v6662 = vmul.f32 %v6492, 1.002
        %v6663 = vmul.f32 %v6507, 1.002
        %v6664 = vmul.f32 %v6522, 1.002
        %v6665 = vmul.f32 %v6537, 1.002
        %v6666 = vmul.f32 %v6552, 1.002
        %v6667 = vmul.f32 %v6567, 1.002
        %v6668 = vmul.f32 %v6582, 1.002
        %v6669 = vmul.f32 %v6597, 1.002
        %v6670 = vmul.f32 %v6612, 1.002
        %v6671 = vmul.f32 %v6627, 1.002
        %v6672 = vmul.f32 %v6642, 1.002
        %v6673 = vmul.f32 %v6657, 1.002
        %v6674 = vsub.f32 %v6658, 0.001
        %v6675 = vsub.f32 %v6659, 0.001
        %v6676 = vsub.f32 %v6660, 0.001
        %v6677 = vsub.f32 %v6661, 0.001
        %v6678 = vsub.f32 %v6662, 0.001
        %v6679 = vsub.f32 %v6663, 0.001
        %v6680 = vsub.f32 %v6664, 0.001
        %v6681 = vsub.f32 %v6665, 0.001
        %v6682 = vsub.f32 %v6666, 0.001
        %v6683 = vsub.f32 %v6667, 0.001
        %v6684 = vsub.f32 %v6668, 0.001
        %v6685 = vsub.f32 %v6669, 0.001
        %v6686 = vsub.f32 %v6670, 0.001
        %v6687 = vsub.f32 %v6671, 0.001
        %v6688 = vsub.f32 %v6672, 0.001
        %v6689 = vsub.f32 %v6673, 0.001
        %v6690 = vlaneseq
        %v6691 = vshrl.u32 %v6690, 7
        %vm6692 = vcmp.eq.s32.totalorder %v6691, 7
        %v6693 = vsel %vm6692, 1e+10, 0.14285715
        %v6694 = vmul.f32 %v6352, %v6693
        %v6695 = vmul.f32 %v6353, %v6693
        %v6697 = vperm.slane %v373, 0
        %v6698 = vperm.slane %v373, 1
        %v6701 = vmul.f32 %v6694, %v6697
        %v6702 = vmul.f32 %v6695, %v6698
        %v6703 = vsub.f32 0.0, %v6701
        %v6704 = vsub.f32 0.0, %v6702
        %v6705 = vmul.f32 %v6703, 1.442695
        %v6706 = vpow.pop %v6705
        %v6707 = vmul.f32 %v6704, 1.442695
        %v6708 = vpow.pop %v6707
        %v6709 = vsub.f32 1.0, %v6706
        %v6710 = vsub.f32 1.0, %v6708
        %v6711 = vlaneseq
        %v6712 = vand.u32 %v6711, 127
        %vm6713 = vcmp.lt.s32.totalorder %v6712, %v6691
        %v6714 = vsel %vm6713, 1, 0
        %v6715 = vcvt.s32.f32 %v6714
        %vm6716 = vcmask 64512
        %v6718 = vsel %vm6716, %v6715, 0
        %6720 = vmatpush.msra.mxu0 0.0
        %6721 = vmatpush.msra.mxu0 0.0
        %6722 = vmatpush.msra.mxu0 0.0
        %6723 = vmatpush.msra.mxu0 0.0
        %6724 = vmatpush.msra.mxu0 0.0
        %6725 = vmatpush.msra.mxu0 0.0
        %6726 = vmatpush.msra.mxu0 0.0
        %6727 = vmatpush.msra.mxu0 0.0
        %6728 = vmatpush.msra.mxu0 0.0
        %6729 = vmatpush.msra.mxu0 0.0
        %6730 = vmatpush.msra.mxu0 0.0
        %6731 = vmatpush.msra.mxu0 0.0
        %6732 = vmatpush.msra.mxu0 0.0
        %6733 = vmatpush.msra.mxu0 0.0
        %6734 = vmatpush.msra.mxu0 0.0
        %6735 = vmatpush.msra.mxu0 %v6701
        %6736 = vmatmul.f32.gmra.mxu0 %v6718
        %v6737 = vpop.f32.mrf.mxu0
        %v6738 = vadd.f32 0.0, %v6737
        %6739 = vdwg.mxu0
        %6740 = vmatpush.msra.mxu0 0.0
        %6741 = vmatpush.msra.mxu0 0.0
        %6742 = vmatpush.msra.mxu0 0.0
        %6743 = vmatpush.msra.mxu0 0.0
        %6744 = vmatpush.msra.mxu0 0.0
        %6745 = vmatpush.msra.mxu0 0.0
        %6746 = vmatpush.msra.mxu0 0.0
        %6747 = vmatpush.msra.mxu0 0.0
        %6748 = vmatpush.msra.mxu0 0.0
        %6749 = vmatpush.msra.mxu0 0.0
        %6750 = vmatpush.msra.mxu0 0.0
        %6751 = vmatpush.msra.mxu0 0.0
        %6752 = vmatpush.msra.mxu0 0.0
        %6753 = vmatpush.msra.mxu0 0.0
        %6754 = vmatpush.msra.mxu0 0.0
        %6755 = vmatpush.msra.mxu0 %v6702
        %6756 = vmatmul.f32.gmra.mxu0 %v6718
        %v6757 = vpop.f32.mrf.mxu0
        %v6758 = vadd.f32 0.0, %v6757
        %6759 = vdwg.mxu0
        %v6760 = vsub.f32 0.0, %v6738
        %v6761 = vsub.f32 0.0, %v6758
        %v6762 = vmul.f32 %v6760, 1.442695
        %v6763 = vpow.pop %v6762
        %v6764 = vmul.f32 %v6761, 1.442695
        %v6765 = vpow.pop %v6764
        %v6766 = vmul.f32 %v6709, %v6763
        %v6767 = vmul.f32 %v6710, %v6765
        %v6770 = vrot.slane %v6767, 7
        %v6771 = vsel %vm6314, %v6766, %v6770
        %vm6772 = vcmask 1041409
        %v6773 = vsel %vm6772, %v6766, %v6770
        %v6774 = vrot.slane %v6773, 1
        %vm6775 = vcmask 1042434
        %v6776 = vsel %vm6775, %v6766, %v6770
        %v6777 = vrot.slane %v6776, 2
        %vm6778 = vcmask 1043459
        %v6779 = vsel %vm6778, %v6766, %v6770
        %v6780 = vrot.slane %v6779, 3
        %vm6781 = vcmask 1044484
        %v6782 = vsel %vm6781, %v6766, %v6770
        %v6783 = vrot.slane %v6782, 4
        %vm6784 = vcmask 1045509
        %v6785 = vsel %vm6784, %v6766, %v6770
        %v6786 = vrot.slane %v6785, 5
        %vm6787 = vcmask 1046534
        %v6788 = vsel %vm6787, %v6766, %v6770
        %v6789 = vrot.slane %v6788, 6
        %v6790 = vsel %vm6331, %v6770, %v6766
        %v6791 = vrot.slane %v6790, 7
        %v6792 = vperm.slane %v6771, 0
        %v6793 = vperm.slane %v6771, 1
        %v6794 = vperm.slane %v6774, 0
        %v6795 = vperm.slane %v6774, 1
        %v6796 = vperm.slane %v6777, 0
        %v6797 = vperm.slane %v6777, 1
        %v6798 = vperm.slane %v6780, 0
        %v6799 = vperm.slane %v6780, 1
        %v6800 = vperm.slane %v6783, 0
        %v6801 = vperm.slane %v6783, 1
        %v6802 = vperm.slane %v6786, 0
        %v6803 = vperm.slane %v6786, 1
        %v6804 = vperm.slane %v6789, 0
        %v6805 = vperm.slane %v6789, 1
        %v6806 = vperm.slane %v6791, 0
        %v6807 = vperm.slane %v6791, 1
        %v6824 = vmul.f32 %v6792, %v6674
        %v6825 = vmul.f32 %v6793, %v6675
        %v6826 = vmul.f32 %v6794, %v6676
        %v6827 = vmul.f32 %v6795, %v6677
        %v6828 = vmul.f32 %v6796, %v6678
        %v6829 = vmul.f32 %v6797, %v6679
        %v6830 = vmul.f32 %v6798, %v6680
        %v6831 = vmul.f32 %v6799, %v6681
        %v6832 = vmul.f32 %v6800, %v6682
        %v6833 = vmul.f32 %v6801, %v6683
        %v6834 = vmul.f32 %v6802, %v6684
        %v6835 = vmul.f32 %v6803, %v6685
        %v6836 = vmul.f32 %v6804, %v6686
        %v6837 = vmul.f32 %v6805, %v6687
        %v6838 = vmul.f32 %v6806, %v6688
        %v6839 = vmul.f32 %v6807, %v6689
        %vm6840 = vcmask 1043457
        %v6841 = vsel %vm6840, %v6824, 0.0
        %v6842 = vsel %vm6840, %v6826, 0.0
        %v6843 = vadd.f32 %v6841, %v6842
        %v6844 = vsel %vm6840, %v6828, 0.0
        %v6845 = vadd.f32 %v6843, %v6844
        %v6846 = vsel %vm6840, %v6830, 0.0
        %v6847 = vadd.f32 %v6845, %v6846
        %v6848 = vsel %vm6840, %v6832, 0.0
        %v6849 = vadd.f32 %v6847, %v6848
        %v6850 = vsel %vm6840, %v6834, 0.0
        %v6851 = vadd.f32 %v6849, %v6850
        %v6852 = vsel %vm6840, %v6836, 0.0
        %v6853 = vadd.f32 %v6851, %v6852
        %v6854 = vsel %vm6840, %v6838, 0.0
        %v6855 = vadd.f32 %v6853, %v6854
        %v6856 = vsel %vm6840, %v6825, 0.0
        %v6857 = vsel %vm6840, %v6827, 0.0
        %v6858 = vadd.f32 %v6856, %v6857
        %v6859 = vsel %vm6840, %v6829, 0.0
        %v6860 = vadd.f32 %v6858, %v6859
        %v6861 = vsel %vm6840, %v6831, 0.0
        %v6862 = vadd.f32 %v6860, %v6861
        %v6863 = vsel %vm6840, %v6833, 0.0
        %v6864 = vadd.f32 %v6862, %v6863
        %v6865 = vsel %vm6840, %v6835, 0.0
        %v6866 = vadd.f32 %v6864, %v6865
        %v6867 = vsel %vm6840, %v6837, 0.0
        %v6868 = vadd.f32 %v6866, %v6867
        %v6869 = vsel %vm6840, %v6839, 0.0
        %v6870 = vadd.f32 %v6868, %v6869
        %v6873 = vrot.slane %v6870, 4
        %v6874 = vsel %vm6323, %v6855, %v6873
        %v6875 = vrot.slane %v6874, 5
        %v6876 = vrot.slane %v6875, 4
        %6878 = vst [vmem:[%s313] sm:$0x77] %v6876
        %s6879 = sand.u32 %s208, 1
        %s6880 = scalar_lea.sflag [#allocation3], %s6879
        %s6881 = sand.u32 %s208, 1
        %s6882 = smul.addr %s6881, 8
        %s6883 = scalar_lea.vmem [#allocation2], %s6882
        // Predicated region
        $region53: #{tpu_custom_call.1} parent=51 // pred_check
          %p6884 = pneg %p218
        $region54: #{tpu_custom_call.1} parent=51 // pred_check_branch
          %6886 = sbr.rel (%p6884) target = $region56
        $region55: #{tpu_custom_call.1} parent=51 // pred_region
          %s6887 = smul.u32 2, %s22
          %6889 = vsyncadd %s6880, 0
          %s6890 = smul.addr %s6887, 4
          %s6891 = scalar_lea.hbm %s8, %s6890
          %s6893 = sshll.u32 %s6883, 4
          %s6894 = int_to_ptr.vmem [resolvable:$true] %s6893
          %s6895 = sshll.u32 %s6891, 4
          %s6896 = int_to_ptr.hbm [resolvable:$true] %s6895
          %6898 = dma.vmem_to_hbm [thread:$0]  %s6894, 128, %s6896, %s6880
        $region56: #{tpu_custom_call.1} parent=51 // pred_fallthru
          _
      $region52: #{tpu_custom_call.1} parent=5 // pred_fallthru
        _
      %p6899 = scmp.le.s32.totalorder 2, %s17
      // Predicated region
      $region57: #{tpu_custom_call.1} parent=5 // pred_check
        %p6900 = pneg %p6899
      $region58: #{tpu_custom_call.1} parent=5 // pred_check_branch
        %6902 = sbr.rel (%p6900) target = $region60
      $region59: #{tpu_custom_call.1} parent=5 // pred_region
        %s6903 = ssub.s32 %s17, 2
        // Predicated region
        $region61: #{tpu_custom_call.1} parent=59 // pred_check
          %p6904 = pneg %p224
        $region62: #{tpu_custom_call.1} parent=59 // pred_check_branch
          %6906 = sbr.rel (%p6904) target = $region64
        $region63: #{tpu_custom_call.1} parent=59 // pred_region
          %s6907 = sand.u32 %s209, 1
          %s6908 = scalar_lea.sflag [#allocation3], %s6907
          %s6909 = sand.u32 %s209, 1
          %s6910 = smul.addr %s6909, 8
          %s6911 = scalar_lea.vmem [#allocation2], %s6910
          %6913 = dma.done %s6908, 128
        $region64: #{tpu_custom_call.1} parent=59 // pred_fallthru
          _
      $region60: #{tpu_custom_call.1} parent=5 // pred_fallthru
        _
    $region6: #{tpu_custom_call.1} parent=1 // loop_footer
      %s21 = sadd.s32 1, %s17
    $region7: #{tpu_custom_call.1} parent=1 // loop_footer_branch
      %16 = sbr.rel target = $region3
    $region8: #{tpu_custom_call.1} parent=1 // loop_exit
      _
    %6914 = vsyncpa [#allocation3], 1
    %s6915 = scalar_lea.sflag [#allocation3], 1
    %6916 = vsyncpa %s6915, 1

</llo_original>
